<compile_context>
chip_gen: v7x
topology: tpu7x:2x2x1
jax: 0.10.0
libtpu: 0.0.40
codegen_flags: <defaults>
</compile_context>

<pallas_src>
import functools
import math

import jax
import jax.numpy as jnp
from jax.experimental import pallas as pl
from jax.experimental.pallas import tpu as pltpu


# ---------------------------------------------------------------------------
# Small helpers
# ---------------------------------------------------------------------------

def _act(v, act):
    if act == "relu":
        return jnp.maximum(v, 0.0)
    if act == "sigmoid":
        return jax.nn.sigmoid(v)
    return v


def _ksize(wref, cin):
    """Kernel size K from a (Cout, K*K*Cin) weight ref (static)."""
    kk = wref.shape[1] // cin
    k = int(round(math.sqrt(kk)))
    assert k * k * cin == wref.shape[1], (wref.shape, cin)
    return k


def _rep_spec(arr):
    nd = arr.ndim
    return pl.BlockSpec(arr.shape, lambda n: (0,) * nd)


# ---------------------------------------------------------------------------
# Fused whole-network kernel (one image per grid step)
# ---------------------------------------------------------------------------

def _rdn_kernel(*refs, num_blocks, L, F, G, W, HW, LPAD):
    nin = len(refs) - 2
    o_ref = refs[nin]
    pad_ref = refs[nin + 1]

    # ---- unpack the flat weight-ref list (order matches rdn_forward_pallas) -
    it = iter(refs[:nin])
    x_ref = next(it)
    sf1w, sf1b = next(it), next(it)
    sf2w, sf2b = next(it), next(it)
    rdbs = []
    for _ in range((num_blocks + 1) // 2):
        dense = [(next(it), next(it)) for _ in range(L)]
        rdbs.append((dense, (next(it), next(it))))
    csar = tuple(next(it) for _ in range(15)) if num_blocks >= 2 else None
    g1w, g1b = next(it), next(it)
    g2w, g2b = next(it), next(it)
    assert next(it, None) is None

    # ---- hoisted column masks: built once per grid step, shared by all convs
    col = jax.lax.broadcasted_iota(jnp.int32, (1, HW), 1) % W
    mask_cache = {}

    def edge_mask(K, dx):
        p = (K - 1) // 2
        if (K, dx) not in mask_cache:
            mask_cache[(K, dx)] = (col >= (p - dx)) & (col < (W + p - dx))
        return mask_cache[(K, dx)]

    # ---- persistent zero-halo padded slab (only halos re-zeroed each step) --
    C_pad, W_pad = pad_ref.shape
    pad_ref[:, 0:LPAD] = jnp.zeros((C_pad, LPAD), jnp.float32)
    pad_ref[:, LPAD + HW:] = jnp.zeros((C_pad, W_pad - LPAD - HW), jnp.float32)

    def write_center(val, row0=0):
        # 128-lane-aligned center write (unmasked stores).
        pad_ref[row0:row0 + val.shape[0], LPAD:LPAD + HW] = val

    def conv_pad(cin, wref, bref, act="none"):
        """KxK 'same' conv of pad_ref[:cin] -> (Cout, HW); one deep MXU matmul."""
        K = _ksize(wref, cin)
        p = (K - 1) // 2
        bf16_slabs = (cin % 2 == 0)          # keep bf16 sublane packing aligned
        slabs = []
        for dy in range(K):
            for dx in range(K):
                start = LPAD + (dy - p) * W + (dx - p)   # static lane offset
                xs = pad_ref[0:cin, start:start + HW]
                if dx != p:                   # kill the horizontal wrap-around
                    xs = jnp.where(edge_mask(K, dx), xs, 0.0)
                slabs.append(xs.astype(jnp.bfloat16) if bf16_slabs else xs)
        op = jnp.concatenate(slabs, axis=0)   # (K*K*cin, HW), stays in VMEM
        if not bf16_slabs:
            op = op.astype(jnp.bfloat16)
        acc = jnp.dot(wref[...], op, preferred_element_type=jnp.float32) + bref[...]
        return _act(acc, act)

    def conv1x1(x, wref, bref, act="none"):
        acc = jnp.dot(wref[...], x.astype(jnp.bfloat16),
                      preferred_element_type=jnp.float32) + bref[...]
        return _act(acc, act)

    # ---- shallow features ---------------------------------------------------
    x = x_ref[0]                              # (Cin0, HW) f32
    write_center(x)
    sfe1 = conv_pad(x.shape[0], sf1w, sf1b)   # 7x7
    write_center(sfe1)
    sfe2 = conv_pad(F, sf2w, sf2b)            # 3x3

    # ---- RDB / CSAR chain with the GFF 1x1 fused in as it goes --------------
    h = sfe2
    gff_acc = jnp.zeros((F, HW), jnp.float32)
    for i in range(num_blocks):
        if i % 2 == 0:
            dense, (lffw, lffb) = rdbs[i // 2]
            write_center(h, 0)
            for l, (dw, db) in enumerate(dense):        # dense growth, in place
                d = conv_pad(F + G * l, dw, db, act="relu")
                write_center(d, F + G * l)              # write only the new G rows
            grown = pad_ref[0:F + G * L, LPAD:LPAD + HW]
            y = jnp.dot(lffw[...], grown.astype(jnp.bfloat16),
                        preferred_element_type=jnp.float32) + lffb[...]
            h = h + y                                   # alpha pre-folded in lff
        else:
            (ci1w, ci1b, ci2w, ci2b, caw1, cab1, caw2t, cab2,
             sa1w, sa1b, sa2w, sa2b, cowa, cowb, cob) = csar
            write_center(h)
            t = conv_pad(F, ci1w, ci1b, act="relu")
            write_center(t)
            x_in = conv_pad(F, ci2w, ci2b)
            # Channel attention: pure VPU/XLU, all f32.
            pooled = jnp.mean(x_in, axis=1, keepdims=True)                     # (F,1)
            hrow = jnp.sum(caw1[...] * pooled, axis=0, keepdims=True) + cab1[...]
            hrow = jnp.maximum(hrow, 0.0)
            att = jax.nn.sigmoid(
                jnp.sum(caw2t[...] * hrow, axis=1, keepdims=True) + cab2[...])  # (F,1)
            # ChannelAttention returns x_in*att; CSAR then multiplies by x_in
            # again (x_in * x_ca == x_in^2 * att) -- matches the PyTorch module.
            x_ca = x_in * att
            # Spatial attention: two 1x1 convs.
            s = conv1x1(x_in, sa1w, sa1b, act="relu")
            x_sa = conv1x1(s, sa2w, sa2b, act="sigmoid")
            # conv_out over cat([x_in*x_ca, x_in*x_sa]) with the weight split in
            # two -> two matmuls, no channel concat needed.
            out = (jnp.dot(cowa[...], (x_in * x_ca).astype(jnp.bfloat16),
                           preferred_element_type=jnp.float32)
                   + jnp.dot(cowb[...], (x_in * x_sa).astype(jnp.bfloat16),
                             preferred_element_type=jnp.float32)
                   + cob[...])
            h = h + out                                 # residual fused
        # GFF 1x1 over the block concat: accumulate this block's slice now so
        # the `local_features` list never has to be materialized.
        gff_acc = gff_acc + jnp.dot(g1w[:, i * F:(i + 1) * F],
                                    h.astype(jnp.bfloat16),
                                    preferred_element_type=jnp.float32)

    # ---- GFF 3x3 + final residual -------------------------------------------
    gff_acc = gff_acc + g1b[...]
    write_center(gff_acc)
    g2 = conv_pad(F, g2w, g2b)
    o_ref[0] = g2 + sfe1


# ---------------------------------------------------------------------------
# Weight preparation (pure glue: HWIO weights -> kernel layouts)
# ---------------------------------------------------------------------------

def _prep_conv(w, b, alpha=None):
    """(K,K,Cin,Cout) HWIO weight -> ((Cout, K*K*Cin) bf16, (Cout, 1) f32)."""
    K, _, Cin, Cout = w.shape
    w2d = jnp.transpose(w, (3, 0, 1, 2)).reshape(Cout, K * K * Cin)
    b2 = b.reshape(Cout, 1).astype(jnp.float32)
    if alpha is not None:                     # fold RDB alpha into the 1x1 LFF
        w2d = alpha * w2d
        b2 = alpha * b2
    return w2d.astype(jnp.bfloat16), b2.astype(jnp.float32)


# ---------------------------------------------------------------------------
# Pallas forward pass
# ---------------------------------------------------------------------------

def rdn_forward_pallas(params, x, num_blocks):
    N, Cin0, H, W = x.shape
    HW = H * W
    F = int(params["sf1"]["w"].shape[3])
    G = int(params["rdbs"][0]["dense"][0]["w"].shape[3])
    L = len(params["rdbs"][0]["dense"])

    # Padded-slab geometry: big enough for the largest (7x7) halo and for the
    # RDB dense growth; left halo rounded to 128 lanes for aligned center writes.
    Kmax = max(int(params["sf1"]["w"].shape[0]), int(params["sf2"]["w"].shape[0]),
               int(params["gff2"]["w"].shape[0]),
               int(params["csar"]["conv_in1"]["w"].shape[0]),
               max(int(dl["w"].shape[0]) for dl in params["rdbs"][0]["dense"]))
    p_max = (Kmax - 1) // 2
    Smax = p_max * W + p_max
    LPAD = max(128, ((Smax + 127) // 128) * 128)
    C_pad = max(Cin0, F + G * L)

    xf = x.reshape(N, Cin0, HW).astype(jnp.float32)   # channels-first, flat spatial

    args, specs = [xf], [pl.BlockSpec((1, Cin0, HW), lambda n: (n, 0, 0))]

    def add(*arrs):
        for a in arrs:
            args.append(a)
            specs.append(_rep_spec(a))

    add(*_prep_conv(params["sf1"]["w"], params["sf1"]["b"]))
    add(*_prep_conv(params["sf2"]["w"], params["sf2"]["b"]))
    # PyTorch forward() iterates rdbs[0..num_blocks-1] = [RDB_0, csar, RDB_1,
    # csar, ...]: even entries are distinct RDBs, odd entries the shared CSAR.
    for r in range((num_blocks + 1) // 2):
        rp = params["rdbs"][r]
        for dl in rp["dense"]:
            add(*_prep_conv(dl["w"], dl["b"]))
        # x + alpha*lff(h) == x + lff'(h) with alpha folded into the 1x1.
        add(*_prep_conv(rp["lff"]["w"], rp["lff"]["b"],
                        alpha=rp["alpha"].astype(jnp.float32)))
    if num_blocks >= 2:
        cp = params["csar"]
        cow, cob = _prep_conv(cp["conv_out"]["w"], cp["conv_out"]["b"])   # (F, 2F)
        add(*_prep_conv(cp["conv_in1"]["w"], cp["conv_in1"]["b"]))
        add(*_prep_conv(cp["conv_in2"]["w"], cp["conv_in2"]["b"]))
        add(cp["ca_fc1"]["w"].astype(jnp.float32),                    # (F, F//4)
            cp["ca_fc1"]["b"].reshape(1, -1).astype(jnp.float32),     # (1, F//4)
            jnp.transpose(cp["ca_fc2"]["w"]).astype(jnp.float32),     # (F, F//4)
            cp["ca_fc2"]["b"].reshape(-1, 1).astype(jnp.float32))     # (F, 1)
        add(*_prep_conv(cp["sa_conv1"]["w"], cp["sa_conv1"]["b"]))
        add(*_prep_conv(cp["sa_conv2"]["w"], cp["sa_conv2"]["b"]))
        add(cow[:, :F], cow[:, F:], cob)
    add(*_prep_conv(params["gff1"]["w"], params["gff1"]["b"]))
    add(*_prep_conv(params["gff2"]["w"], params["gff2"]["b"]))

    kernel = functools.partial(_rdn_kernel, num_blocks=num_blocks, L=L, F=F, G=G,
                               W=W, HW=HW, LPAD=LPAD)
    out = pl.pallas_call(
        kernel,
        out_shape=jax.ShapeDtypeStruct((N, F, HW), jnp.float32),
        grid=(N,),
        in_specs=specs,
        out_specs=pl.BlockSpec((1, F, HW), lambda n: (n, 0, 0)),
        scratch_shapes=[pltpu.VMEM((C_pad, LPAD + HW + LPAD), jnp.float32)],
        compiler_params=pltpu.CompilerParams(dimension_semantics=("parallel",)),
    )(*args)
    return out.reshape(N, F, H, W)


# ---------------------------------------------------------------------------
# Parameter init (synthetic, deterministic)
# ---------------------------------------------------------------------------

def _init_conv(key, k, cin, cout):
    kw, kb = jax.random.split(key)
    w = jax.random.normal(kw, (k, k, cin, cout), jnp.float32) / math.sqrt(k * k * cin)
    b = 0.01 * jax.random.normal(kb, (cout,), jnp.float32)
    return {"w": w, "b": b}


def _init_linear(key, cin, cout):
    kw, kb = jax.random.split(key)
    w = jax.random.normal(kw, (cin, cout), jnp.float32) / math.sqrt(cin)
    b = 0.01 * jax.random.normal(kb, (cout,), jnp.float32)
    return {"w": w, "b": b}


def init_rdn_params(key, num_channels, num_features, growth_rate, num_blocks, num_layers):
    F, G, L = num_features, growth_rate, num_layers
    keys = iter(jax.random.split(key, 256))
    params = {
        "sf1": _init_conv(next(keys), 7, num_channels, F),
        "sf2": _init_conv(next(keys), 3, F, F),
        "csar": {             # single CSAR instance shared across blocks (as in PyTorch)
            "conv_in1": _init_conv(next(keys), 3, F, F),
            "conv_in2": _init_conv(next(keys), 3, F, F),
            "ca_fc1": _init_linear(next(keys), F, F // 4),
            "ca_fc2": _init_linear(next(keys), F // 4, F),
            "sa_conv1": _init_conv(next(keys), 1, F, 2 * F),
            "sa_conv2": _init_conv(next(keys), 1, 2 * F, F),
            "conv_out": _init_conv(next(keys), 1, 2 * F, F),
        },
        "rdbs": [],
        "gff1": _init_conv(next(keys), 1, F * num_blocks, F),
        "gff2": _init_conv(next(keys), 3, F, F),
    }
    for _ in range(num_blocks):   # num_blocks RDBs exist; forward only hits the first half
        params["rdbs"].append({
            "dense": [_init_conv(next(keys), 3, F + G * i, G) for i in range(L)],
            "lff": _init_conv(next(keys), 1, F + G * L, F),
            "alpha": jnp.float32(1.0),
        })
    return params


# ---------------------------------------------------------------------------
# Pure-XLA f32 reference (for the correctness check only)
# ---------------------------------------------------------------------------

def rdn_forward_reference(params, x, num_blocks):
    def conv(x, w, b, act="none"):
        y = jax.lax.conv_general_dilated(
            x, w, window_strides=(1, 1), padding="SAME",
            dimension_numbers=("NCHW", "HWIO", "NCHW"),
            precision=jax.lax.Precision.HIGHEST) + b[None, :, None, None]
        if act == "relu":
            y = jnp.maximum(y, 0.0)
        elif act == "sigmoid":
            y = jax.nn.sigmoid(y)
        return y

    def channel_attention(x, w1, b1, w2, b2):
        pooled = jnp.mean(x, axis=(2, 3))
        hh = jnp.maximum(pooled @ w1 + b1, 0.0)
        att = jax.nn.sigmoid(hh @ w2 + b2)
        return x * att[:, :, None, None]

    def csar(p, x):
        h = conv(x, p["conv_in1"]["w"], p["conv_in1"]["b"], "relu")
        x_in = conv(h, p["conv_in2"]["w"], p["conv_in2"]["b"])
        x_ca = channel_attention(x_in, p["ca_fc1"]["w"], p["ca_fc1"]["b"],
                                 p["ca_fc2"]["w"], p["ca_fc2"]["b"])
        s = conv(x_in, p["sa_conv1"]["w"], p["sa_conv1"]["b"], "relu")
        x_sa = conv(s, p["sa_conv2"]["w"], p["sa_conv2"]["b"], "sigmoid")
        cat = jnp.concatenate([x_in * x_ca, x_in * x_sa], axis=1)
        return x + conv(cat, p["conv_out"]["w"], p["conv_out"]["b"])

    def rdb(p, x):
        h = x
        for dl in p["dense"]:
            h = jnp.concatenate([h, conv(h, dl["w"], dl["b"], "relu")], axis=1)
        return x + p["alpha"] * conv(h, p["lff"]["w"], p["lff"]["b"])

    sfe1 = conv(x, params["sf1"]["w"], params["sf1"]["b"])
    sfe2 = conv(sfe1, params["sf2"]["w"], params["sf2"]["b"])
    h = sfe2
    feats = []
    for i in range(num_blocks):
        if i % 2 == 0:
            h = rdb(params["rdbs"][i // 2], h)
        else:
            h = csar(params["csar"], h)
        feats.append(h)
    g = conv(jnp.concatenate(feats, axis=1), params["gff1"]["w"], params["gff1"]["b"])
    g = conv(g, params["gff2"]["w"], params["gff2"]["b"])
    return g + sfe1


# ---------------------------------------------------------------------------
# Main
# ---------------------------------------------------------------------------

if __name__ == "__main__":
    # RDN(num_channels, num_features, growth_rate, num_blocks, num_layers)
    num_channels, num_features, growth_rate = 3, 8, 4
    num_blocks, num_layers = 2, 3
    N, H, W = 2, 16, 16

    key = jax.random.PRNGKey(0)
    kp, kx = jax.random.split(key)
    params = init_rdn_params(kp, num_channels, num_features, growth_rate,
                             num_blocks, num_layers)
    x = jax.random.normal(kx, (N, num_channels, H, W), jnp.float32)

    run_pallas = jax.jit(functools.partial(rdn_forward_pallas, num_blocks=num_blocks))
    run_ref = jax.jit(functools.partial(rdn_forward_reference, num_blocks=num_blocks))

    y = run_pallas(params, x)
    jax.block_until_ready(y)

    y_ref = run_ref(params, x)
    jax.block_until_ready(y_ref)

    assert y.shape == (N, num_features, H, W), y.shape
    err = float(jnp.max(jnp.abs(y - y_ref)))
    # Kernel uses bf16 MXU operands with f32 accumulation; the f32 XLA
    # reference therefore differs by ~bf16-level rounding compounded over the
    # conv chain.  A broken kernel produces O(1) errors, far above this bound.
    tol = 5e-2 * max(1.0, float(jnp.max(jnp.abs(y_ref))))
    assert err < tol, f"mismatch vs reference: {err} (tol {tol})"
    print("KERNEL_OK")
</pallas_src>

<mosaic_0001>
module attributes {stable_mosaic.version = 11 : i64} {
  func.func @_rdn_kernel(%arg0: i32, %arg1: memref<1x3x256xf32, #tpu.memory_space<vmem>>, %arg2: memref<8x147xbf16, #tpu.memory_space<vmem>>, %arg3: memref<8x1xf32, #tpu.memory_space<vmem>>, %arg4: memref<8x72xbf16, #tpu.memory_space<vmem>>, %arg5: memref<8x1xf32, #tpu.memory_space<vmem>>, %arg6: memref<4x72xbf16, #tpu.memory_space<vmem>>, %arg7: memref<4x1xf32, #tpu.memory_space<vmem>>, %arg8: memref<4x108xbf16, #tpu.memory_space<vmem>>, %arg9: memref<4x1xf32, #tpu.memory_space<vmem>>, %arg10: memref<4x144xbf16, #tpu.memory_space<vmem>>, %arg11: memref<4x1xf32, #tpu.memory_space<vmem>>, %arg12: memref<8x20xbf16, #tpu.memory_space<vmem>>, %arg13: memref<8x1xf32, #tpu.memory_space<vmem>>, %arg14: memref<8x72xbf16, #tpu.memory_space<vmem>>, %arg15: memref<8x1xf32, #tpu.memory_space<vmem>>, %arg16: memref<8x72xbf16, #tpu.memory_space<vmem>>, %arg17: memref<8x1xf32, #tpu.memory_space<vmem>>, %arg18: memref<8x2xf32, #tpu.memory_space<vmem>>, %arg19: memref<1x2xf32, #tpu.memory_space<vmem>>, %arg20: memref<8x2xf32, #tpu.memory_space<vmem>>, %arg21: memref<8x1xf32, #tpu.memory_space<vmem>>, %arg22: memref<16x8xbf16, #tpu.memory_space<vmem>>, %arg23: memref<16x1xf32, #tpu.memory_space<vmem>>, %arg24: memref<8x16xbf16, #tpu.memory_space<vmem>>, %arg25: memref<8x1xf32, #tpu.memory_space<vmem>>, %arg26: memref<8x8xbf16, #tpu.memory_space<vmem>>, %arg27: memref<8x8xbf16, #tpu.memory_space<vmem>>, %arg28: memref<8x1xf32, #tpu.memory_space<vmem>>, %arg29: memref<8x16xbf16, #tpu.memory_space<vmem>>, %arg30: memref<8x1xf32, #tpu.memory_space<vmem>>, %arg31: memref<8x72xbf16, #tpu.memory_space<vmem>>, %arg32: memref<8x1xf32, #tpu.memory_space<vmem>>, %arg33: memref<1x8x256xf32, #tpu.memory_space<vmem>>, %arg34: memref<20x512xf32, #tpu.memory_space<vmem>>) attributes {dimension_semantics = [#tpu.dimension_semantics<parallel>], iteration_bounds = array<i64: 2>, scalar_prefetch = 0 : i64, scratch_operands = 1 : i64, tpu.core_type = #tpu.core_type<tc>, window_params = [{transform_indices = @transform_0, window_bounds = array<i64: 1, 3, 256>}, {pipeline_mode = #tpu.pipeline_mode<synchronous>, transform_indices = @transform_1, window_bounds = array<i64: 8, 147>}, {pipeline_mode = #tpu.pipeline_mode<synchronous>, transform_indices = @transform_2, window_bounds = array<i64: 8, 1>}, {pipeline_mode = #tpu.pipeline_mode<synchronous>, transform_indices = @transform_3, window_bounds = array<i64: 8, 72>}, {pipeline_mode = #tpu.pipeline_mode<synchronous>, transform_indices = @transform_4, window_bounds = array<i64: 8, 1>}, {pipeline_mode = #tpu.pipeline_mode<synchronous>, transform_indices = @transform_5, window_bounds = array<i64: 4, 72>}, {pipeline_mode = #tpu.pipeline_mode<synchronous>, transform_indices = @transform_6, window_bounds = array<i64: 4, 1>}, {pipeline_mode = #tpu.pipeline_mode<synchronous>, transform_indices = @transform_7, window_bounds = array<i64: 4, 108>}, {pipeline_mode = #tpu.pipeline_mode<synchronous>, transform_indices = @transform_8, window_bounds = array<i64: 4, 1>}, {pipeline_mode = #tpu.pipeline_mode<synchronous>, transform_indices = @transform_9, window_bounds = array<i64: 4, 144>}, {pipeline_mode = #tpu.pipeline_mode<synchronous>, transform_indices = @transform_10, window_bounds = array<i64: 4, 1>}, {pipeline_mode = #tpu.pipeline_mode<synchronous>, transform_indices = @transform_11, window_bounds = array<i64: 8, 20>}, {pipeline_mode = #tpu.pipeline_mode<synchronous>, transform_indices = @transform_12, window_bounds = array<i64: 8, 1>}, {pipeline_mode = #tpu.pipeline_mode<synchronous>, transform_indices = @transform_13, window_bounds = array<i64: 8, 72>}, {pipeline_mode = #tpu.pipeline_mode<synchronous>, transform_indices = @transform_14, window_bounds = array<i64: 8, 1>}, {pipeline_mode = #tpu.pipeline_mode<synchronous>, transform_indices = @transform_15, window_bounds = array<i64: 8, 72>}, {pipeline_mode = #tpu.pipeline_mode<synchronous>, transform_indices = @transform_16, window_bounds = array<i64: 8, 1>}, {pipeline_mode = #tpu.pipeline_mode<synchronous>, transform_indices = @transform_17, window_bounds = array<i64: 8, 2>}, {pipeline_mode = #tpu.pipeline_mode<synchronous>, transform_indices = @transform_18, window_bounds = array<i64: 1, 2>}, {pipeline_mode = #tpu.pipeline_mode<synchronous>, transform_indices = @transform_19, window_bounds = array<i64: 8, 2>}, {pipeline_mode = #tpu.pipeline_mode<synchronous>, transform_indices = @transform_20, window_bounds = array<i64: 8, 1>}, {pipeline_mode = #tpu.pipeline_mode<synchronous>, transform_indices = @transform_21, window_bounds = array<i64: 16, 8>}, {pipeline_mode = #tpu.pipeline_mode<synchronous>, transform_indices = @transform_22, window_bounds = array<i64: 16, 1>}, {pipeline_mode = #tpu.pipeline_mode<synchronous>, transform_indices = @transform_23, window_bounds = array<i64: 8, 16>}, {pipeline_mode = #tpu.pipeline_mode<synchronous>, transform_indices = @transform_24, window_bounds = array<i64: 8, 1>}, {pipeline_mode = #tpu.pipeline_mode<synchronous>, transform_indices = @transform_25, window_bounds = array<i64: 8, 8>}, {pipeline_mode = #tpu.pipeline_mode<synchronous>, transform_indices = @transform_26, window_bounds = array<i64: 8, 8>}, {pipeline_mode = #tpu.pipeline_mode<synchronous>, transform_indices = @transform_27, window_bounds = array<i64: 8, 1>}, {pipeline_mode = #tpu.pipeline_mode<synchronous>, transform_indices = @transform_28, window_bounds = array<i64: 8, 16>}, {pipeline_mode = #tpu.pipeline_mode<synchronous>, transform_indices = @transform_29, window_bounds = array<i64: 8, 1>}, {pipeline_mode = #tpu.pipeline_mode<synchronous>, transform_indices = @transform_30, window_bounds = array<i64: 8, 72>}, {pipeline_mode = #tpu.pipeline_mode<synchronous>, transform_indices = @transform_31, window_bounds = array<i64: 8, 1>}, {transform_indices = @transform_32, window_bounds = array<i64: 1, 8, 256>}]} {
    %0 = tpu.iota {dimensions = array<i32: 1>} : vector<1x256xi32>
    %c16_i32 = arith.constant 16 : i32
    %c0_i32 = arith.constant 0 : i32
    %1 = arith.cmpi eq, %c16_i32, %c0_i32 : i32
    %c1_i32 = arith.constant 1 : i32
    %2 = arith.select %1, %c1_i32, %c16_i32 : i32
    %3 = vector.broadcast %2 : i32 to vector<1x256xi32>
    %4 = arith.remsi %0, %3 : vector<1x256xi32>
    %c0_i32_0 = arith.constant 0 : i32
    %5 = vector.broadcast %c0_i32_0 : i32 to vector<1x256xi32>
    %6 = arith.cmpi ne, %4, %5 : vector<1x256xi32>
    %c0_i32_1 = arith.constant 0 : i32
    %7 = vector.broadcast %c0_i32_1 : i32 to vector<1x256xi32>
    %8 = arith.cmpi slt, %4, %7 : vector<1x256xi32>
    %c0_i32_2 = arith.constant 0 : i32
    %9 = arith.cmpi slt, %2, %c0_i32_2 : i32
    %10 = vector.broadcast %9 : i1 to vector<1x256xi1>
    %11 = vector.broadcast %10 : vector<1x256xi1> to vector<1x256xi1>
    %12 = arith.xori %8, %11 : vector<1x256xi1>
    %13 = arith.andi %12, %6 : vector<1x256xi1>
    %14 = vector.broadcast %2 : i32 to vector<1x256xi32>
    %15 = arith.addi %4, %14 : vector<1x256xi32>
    %16 = arith.select %13, %15, %4 : vector<1x256xi1>, vector<1x256xi32>
    %cst = arith.constant 0.000000e+00 : f32
    %17 = vector.broadcast %cst : f32 to vector<20x128xf32>
    %c0 = arith.constant 0 : index
    %c0_3 = arith.constant 0 : index
    %18 = vector.load %arg34[%c0, %c0_3] : memref<20x512xf32, #tpu.memory_space<vmem>>, vector<20x128xf32>
    tpu.vector_store %arg34[%c0, %c0_3], %17 {strides = array<i32>} : memref<20x512xf32, #tpu.memory_space<vmem>>, vector<20x128xf32>,
    %cst_4 = arith.constant 0.000000e+00 : f32
    %19 = vector.broadcast %cst_4 : f32 to vector<20x128xf32>
    %c0_5 = arith.constant 0 : index
    %c384 = arith.constant 384 : index
    %20 = vector.load %arg34[%c0_5, %c384] : memref<20x512xf32, #tpu.memory_space<vmem>>, vector<20x128xf32>
    tpu.vector_store %arg34[%c0_5, %c384], %19 {strides = array<i32>} : memref<20x512xf32, #tpu.memory_space<vmem>>, vector<20x128xf32>,
    %c0_6 = arith.constant 0 : index
    %c0_7 = arith.constant 0 : index
    %c0_8 = arith.constant 0 : index
    %21 = vector.load %arg1[%c0_6, %c0_7, %c0_8] : memref<1x3x256xf32, #tpu.memory_space<vmem>>, vector<1x3x256xf32>
    %22 = vector.shape_cast %21 : vector<1x3x256xf32> to vector<3x256xf32>
    %c0_9 = arith.constant 0 : index
    %c128 = arith.constant 128 : index
    %23 = vector.load %arg34[%c0_9, %c128] : memref<20x512xf32, #tpu.memory_space<vmem>>, vector<3x256xf32>
    tpu.vector_store %arg34[%c0_9, %c128], %22 {strides = array<i32>} : memref<20x512xf32, #tpu.memory_space<vmem>>, vector<3x256xf32>,
    %c0_10 = arith.constant 0 : index
    %c77 = arith.constant 77 : index
    %24 = vector.load %arg34[%c0_10, %c77] : memref<20x512xf32, #tpu.memory_space<vmem>>, vector<3x256xf32>
    %c3_i32 = arith.constant 3 : i32
    %25 = vector.broadcast %c3_i32 : i32 to vector<1x256xi32>
    %26 = arith.cmpi sge, %16, %25 : vector<1x256xi32>
    %c19_i32 = arith.constant 19 : i32
    %27 = vector.broadcast %c19_i32 : i32 to vector<1x256xi32>
    %28 = arith.cmpi slt, %16, %27 : vector<1x256xi32>
    %29 = arith.andi %26, %28 : vector<1x256xi1>
    %cst_11 = arith.constant 0.000000e+00 : f32
    %30 = vector.shape_cast %29 : vector<1x256xi1> to vector<1x256xi1>
    %31 = vector.broadcast %30 : vector<1x256xi1> to vector<3x256xi1>
    %32 = vector.broadcast %cst_11 : f32 to vector<3x256xf32>
    %33 = arith.select %31, %24, %32 : vector<3x256xi1>, vector<3x256xf32>
    %c0_12 = arith.constant 0 : index
    %c78 = arith.constant 78 : index
    %34 = vector.load %arg34[%c0_12, %c78] : memref<20x512xf32, #tpu.memory_space<vmem>>, vector<3x256xf32>
    %c2_i32 = arith.constant 2 : i32
    %35 = vector.broadcast %c2_i32 : i32 to vector<1x256xi32>
    %36 = arith.cmpi sge, %16, %35 : vector<1x256xi32>
    %c18_i32 = arith.constant 18 : i32
    %37 = vector.broadcast %c18_i32 : i32 to vector<1x256xi32>
    %38 = arith.cmpi slt, %16, %37 : vector<1x256xi32>
    %39 = arith.andi %36, %38 : vector<1x256xi1>
    %cst_13 = arith.constant 0.000000e+00 : f32
    %40 = vector.shape_cast %39 : vector<1x256xi1> to vector<1x256xi1>
    %41 = vector.broadcast %40 : vector<1x256xi1> to vector<3x256xi1>
    %42 = vector.broadcast %cst_13 : f32 to vector<3x256xf32>
    %43 = arith.select %41, %34, %42 : vector<3x256xi1>, vector<3x256xf32>
    %c0_14 = arith.constant 0 : index
    %c79 = arith.constant 79 : index
    %44 = vector.load %arg34[%c0_14, %c79] : memref<20x512xf32, #tpu.memory_space<vmem>>, vector<3x256xf32>
    %c1_i32_15 = arith.constant 1 : i32
    %45 = vector.broadcast %c1_i32_15 : i32 to vector<1x256xi32>
    %46 = arith.cmpi sge, %16, %45 : vector<1x256xi32>
    %c17_i32 = arith.constant 17 : i32
    %47 = vector.broadcast %c17_i32 : i32 to vector<1x256xi32>
    %48 = arith.cmpi slt, %16, %47 : vector<1x256xi32>
    %49 = arith.andi %46, %48 : vector<1x256xi1>
    %cst_16 = arith.constant 0.000000e+00 : f32
    %50 = vector.shape_cast %49 : vector<1x256xi1> to vector<1x256xi1>
    %51 = vector.broadcast %50 : vector<1x256xi1> to vector<3x256xi1>
    %52 = vector.broadcast %cst_16 : f32 to vector<3x256xf32>
    %53 = arith.select %51, %44, %52 : vector<3x256xi1>, vector<3x256xf32>
    %c0_17 = arith.constant 0 : index
    %c80 = arith.constant 80 : index
    %54 = vector.load %arg34[%c0_17, %c80] : memref<20x512xf32, #tpu.memory_space<vmem>>, vector<3x256xf32>
    %c0_18 = arith.constant 0 : index
    %c81 = arith.constant 81 : index
    %55 = vector.load %arg34[%c0_18, %c81] : memref<20x512xf32, #tpu.memory_space<vmem>>, vector<3x256xf32>
    %c-1_i32 = arith.constant -1 : i32
    %56 = vector.broadcast %c-1_i32 : i32 to vector<1x256xi32>
    %57 = arith.cmpi sge, %16, %56 : vector<1x256xi32>
    %c15_i32 = arith.constant 15 : i32
    %58 = vector.broadcast %c15_i32 : i32 to vector<1x256xi32>
    %59 = arith.cmpi slt, %16, %58 : vector<1x256xi32>
    %60 = arith.andi %57, %59 : vector<1x256xi1>
    %cst_19 = arith.constant 0.000000e+00 : f32
    %61 = vector.shape_cast %60 : vector<1x256xi1> to vector<1x256xi1>
    %62 = vector.broadcast %61 : vector<1x256xi1> to vector<3x256xi1>
    %63 = vector.broadcast %cst_19 : f32 to vector<3x256xf32>
    %64 = arith.select %62, %55, %63 : vector<3x256xi1>, vector<3x256xf32>
    %c0_20 = arith.constant 0 : index
    %c82 = arith.constant 82 : index
    %65 = vector.load %arg34[%c0_20, %c82] : memref<20x512xf32, #tpu.memory_space<vmem>>, vector<3x256xf32>
    %c-2_i32 = arith.constant -2 : i32
    %66 = vector.broadcast %c-2_i32 : i32 to vector<1x256xi32>
    %67 = arith.cmpi sge, %16, %66 : vector<1x256xi32>
    %c14_i32 = arith.constant 14 : i32
    %68 = vector.broadcast %c14_i32 : i32 to vector<1x256xi32>
    %69 = arith.cmpi slt, %16, %68 : vector<1x256xi32>
    %70 = arith.andi %67, %69 : vector<1x256xi1>
    %cst_21 = arith.constant 0.000000e+00 : f32
    %71 = vector.shape_cast %70 : vector<1x256xi1> to vector<1x256xi1>
    %72 = vector.broadcast %71 : vector<1x256xi1> to vector<3x256xi1>
    %73 = vector.broadcast %cst_21 : f32 to vector<3x256xf32>
    %74 = arith.select %72, %65, %73 : vector<3x256xi1>, vector<3x256xf32>
    %c0_22 = arith.constant 0 : index
    %c83 = arith.constant 83 : index
    %75 = vector.load %arg34[%c0_22, %c83] : memref<20x512xf32, #tpu.memory_space<vmem>>, vector<3x256xf32>
    %c-3_i32 = arith.constant -3 : i32
    %76 = vector.broadcast %c-3_i32 : i32 to vector<1x256xi32>
    %77 = arith.cmpi sge, %16, %76 : vector<1x256xi32>
    %c13_i32 = arith.constant 13 : i32
    %78 = vector.broadcast %c13_i32 : i32 to vector<1x256xi32>
    %79 = arith.cmpi slt, %16, %78 : vector<1x256xi32>
    %80 = arith.andi %77, %79 : vector<1x256xi1>
    %cst_23 = arith.constant 0.000000e+00 : f32
    %81 = vector.shape_cast %80 : vector<1x256xi1> to vector<1x256xi1>
    %82 = vector.broadcast %81 : vector<1x256xi1> to vector<3x256xi1>
    %83 = vector.broadcast %cst_23 : f32 to vector<3x256xf32>
    %84 = arith.select %82, %75, %83 : vector<3x256xi1>, vector<3x256xf32>
    %c0_24 = arith.constant 0 : index
    %c93 = arith.constant 93 : index
    %85 = vector.load %arg34[%c0_24, %c93] : memref<20x512xf32, #tpu.memory_space<vmem>>, vector<3x256xf32>
    %cst_25 = arith.constant 0.000000e+00 : f32
    %86 = vector.shape_cast %29 : vector<1x256xi1> to vector<1x256xi1>
    %87 = vector.broadcast %86 : vector<1x256xi1> to vector<3x256xi1>
    %88 = vector.broadcast %cst_25 : f32 to vector<3x256xf32>
    %89 = arith.select %87, %85, %88 : vector<3x256xi1>, vector<3x256xf32>
    %c0_26 = arith.constant 0 : index
    %c94 = arith.constant 94 : index
    %90 = vector.load %arg34[%c0_26, %c94] : memref<20x512xf32, #tpu.memory_space<vmem>>, vector<3x256xf32>
    %cst_27 = arith.constant 0.000000e+00 : f32
    %91 = vector.shape_cast %39 : vector<1x256xi1> to vector<1x256xi1>
    %92 = vector.broadcast %91 : vector<1x256xi1> to vector<3x256xi1>
    %93 = vector.broadcast %cst_27 : f32 to vector<3x256xf32>
    %94 = arith.select %92, %90, %93 : vector<3x256xi1>, vector<3x256xf32>
    %c0_28 = arith.constant 0 : index
    %c95 = arith.constant 95 : index
    %95 = vector.load %arg34[%c0_28, %c95] : memref<20x512xf32, #tpu.memory_space<vmem>>, vector<3x256xf32>
    %cst_29 = arith.constant 0.000000e+00 : f32
    %96 = vector.shape_cast %49 : vector<1x256xi1> to vector<1x256xi1>
    %97 = vector.broadcast %96 : vector<1x256xi1> to vector<3x256xi1>
    %98 = vector.broadcast %cst_29 : f32 to vector<3x256xf32>
    %99 = arith.select %97, %95, %98 : vector<3x256xi1>, vector<3x256xf32>
    %c0_30 = arith.constant 0 : index
    %c96 = arith.constant 96 : index
    %100 = vector.load %arg34[%c0_30, %c96] : memref<20x512xf32, #tpu.memory_space<vmem>>, vector<3x256xf32>
    %c0_31 = arith.constant 0 : index
    %c97 = arith.constant 97 : index
    %101 = vector.load %arg34[%c0_31, %c97] : memref<20x512xf32, #tpu.memory_space<vmem>>, vector<3x256xf32>
    %cst_32 = arith.constant 0.000000e+00 : f32
    %102 = vector.shape_cast %60 : vector<1x256xi1> to vector<1x256xi1>
    %103 = vector.broadcast %102 : vector<1x256xi1> to vector<3x256xi1>
    %104 = vector.broadcast %cst_32 : f32 to vector<3x256xf32>
    %105 = arith.select %103, %101, %104 : vector<3x256xi1>, vector<3x256xf32>
    %c0_33 = arith.constant 0 : index
    %c98 = arith.constant 98 : index
    %106 = vector.load %arg34[%c0_33, %c98] : memref<20x512xf32, #tpu.memory_space<vmem>>, vector<3x256xf32>
    %cst_34 = arith.constant 0.000000e+00 : f32
    %107 = vector.shape_cast %70 : vector<1x256xi1> to vector<1x256xi1>
    %108 = vector.broadcast %107 : vector<1x256xi1> to vector<3x256xi1>
    %109 = vector.broadcast %cst_34 : f32 to vector<3x256xf32>
    %110 = arith.select %108, %106, %109 : vector<3x256xi1>, vector<3x256xf32>
    %c0_35 = arith.constant 0 : index
    %c99 = arith.constant 99 : index
    %111 = vector.load %arg34[%c0_35, %c99] : memref<20x512xf32, #tpu.memory_space<vmem>>, vector<3x256xf32>
    %cst_36 = arith.constant 0.000000e+00 : f32
    %112 = vector.shape_cast %80 : vector<1x256xi1> to vector<1x256xi1>
    %113 = vector.broadcast %112 : vector<1x256xi1> to vector<3x256xi1>
    %114 = vector.broadcast %cst_36 : f32 to vector<3x256xf32>
    %115 = arith.select %113, %111, %114 : vector<3x256xi1>, vector<3x256xf32>
    %c0_37 = arith.constant 0 : index
    %c109 = arith.constant 109 : index
    %116 = vector.load %arg34[%c0_37, %c109] : memref<20x512xf32, #tpu.memory_space<vmem>>, vector<3x256xf32>
    %cst_38 = arith.constant 0.000000e+00 : f32
    %117 = vector.shape_cast %29 : vector<1x256xi1> to vector<1x256xi1>
    %118 = vector.broadcast %117 : vector<1x256xi1> to vector<3x256xi1>
    %119 = vector.broadcast %cst_38 : f32 to vector<3x256xf32>
    %120 = arith.select %118, %116, %119 : vector<3x256xi1>, vector<3x256xf32>
    %c0_39 = arith.constant 0 : index
    %c110 = arith.constant 110 : index
    %121 = vector.load %arg34[%c0_39, %c110] : memref<20x512xf32, #tpu.memory_space<vmem>>, vector<3x256xf32>
    %cst_40 = arith.constant 0.000000e+00 : f32
    %122 = vector.shape_cast %39 : vector<1x256xi1> to vector<1x256xi1>
    %123 = vector.broadcast %122 : vector<1x256xi1> to vector<3x256xi1>
    %124 = vector.broadcast %cst_40 : f32 to vector<3x256xf32>
    %125 = arith.select %123, %121, %124 : vector<3x256xi1>, vector<3x256xf32>
    %c0_41 = arith.constant 0 : index
    %c111 = arith.constant 111 : index
    %126 = vector.load %arg34[%c0_41, %c111] : memref<20x512xf32, #tpu.memory_space<vmem>>, vector<3x256xf32>
    %cst_42 = arith.constant 0.000000e+00 : f32
    %127 = vector.shape_cast %49 : vector<1x256xi1> to vector<1x256xi1>
    %128 = vector.broadcast %127 : vector<1x256xi1> to vector<3x256xi1>
    %129 = vector.broadcast %cst_42 : f32 to vector<3x256xf32>
    %130 = arith.select %128, %126, %129 : vector<3x256xi1>, vector<3x256xf32>
    %c0_43 = arith.constant 0 : index
    %c112 = arith.constant 112 : index
    %131 = vector.load %arg34[%c0_43, %c112] : memref<20x512xf32, #tpu.memory_space<vmem>>, vector<3x256xf32>
    %c0_44 = arith.constant 0 : index
    %c113 = arith.constant 113 : index
    %132 = vector.load %arg34[%c0_44, %c113] : memref<20x512xf32, #tpu.memory_space<vmem>>, vector<3x256xf32>
    %cst_45 = arith.constant 0.000000e+00 : f32
    %133 = vector.shape_cast %60 : vector<1x256xi1> to vector<1x256xi1>
    %134 = vector.broadcast %133 : vector<1x256xi1> to vector<3x256xi1>
    %135 = vector.broadcast %cst_45 : f32 to vector<3x256xf32>
    %136 = arith.select %134, %132, %135 : vector<3x256xi1>, vector<3x256xf32>
    %c0_46 = arith.constant 0 : index
    %c114 = arith.constant 114 : index
    %137 = vector.load %arg34[%c0_46, %c114] : memref<20x512xf32, #tpu.memory_space<vmem>>, vector<3x256xf32>
    %cst_47 = arith.constant 0.000000e+00 : f32
    %138 = vector.shape_cast %70 : vector<1x256xi1> to vector<1x256xi1>
    %139 = vector.broadcast %138 : vector<1x256xi1> to vector<3x256xi1>
    %140 = vector.broadcast %cst_47 : f32 to vector<3x256xf32>
    %141 = arith.select %139, %137, %140 : vector<3x256xi1>, vector<3x256xf32>
    %c0_48 = arith.constant 0 : index
    %c115 = arith.constant 115 : index
    %142 = vector.load %arg34[%c0_48, %c115] : memref<20x512xf32, #tpu.memory_space<vmem>>, vector<3x256xf32>
    %cst_49 = arith.constant 0.000000e+00 : f32
    %143 = vector.shape_cast %80 : vector<1x256xi1> to vector<1x256xi1>
    %144 = vector.broadcast %143 : vector<1x256xi1> to vector<3x256xi1>
    %145 = vector.broadcast %cst_49 : f32 to vector<3x256xf32>
    %146 = arith.select %144, %142, %145 : vector<3x256xi1>, vector<3x256xf32>
    %c0_50 = arith.constant 0 : index
    %c125 = arith.constant 125 : index
    %147 = vector.load %arg34[%c0_50, %c125] : memref<20x512xf32, #tpu.memory_space<vmem>>, vector<3x256xf32>
    %cst_51 = arith.constant 0.000000e+00 : f32
    %148 = vector.shape_cast %29 : vector<1x256xi1> to vector<1x256xi1>
    %149 = vector.broadcast %148 : vector<1x256xi1> to vector<3x256xi1>
    %150 = vector.broadcast %cst_51 : f32 to vector<3x256xf32>
    %151 = arith.select %149, %147, %150 : vector<3x256xi1>, vector<3x256xf32>
    %c0_52 = arith.constant 0 : index
    %c126 = arith.constant 126 : index
    %152 = vector.load %arg34[%c0_52, %c126] : memref<20x512xf32, #tpu.memory_space<vmem>>, vector<3x256xf32>
    %cst_53 = arith.constant 0.000000e+00 : f32
    %153 = vector.shape_cast %39 : vector<1x256xi1> to vector<1x256xi1>
    %154 = vector.broadcast %153 : vector<1x256xi1> to vector<3x256xi1>
    %155 = vector.broadcast %cst_53 : f32 to vector<3x256xf32>
    %156 = arith.select %154, %152, %155 : vector<3x256xi1>, vector<3x256xf32>
    %c0_54 = arith.constant 0 : index
    %c127 = arith.constant 127 : index
    %157 = vector.load %arg34[%c0_54, %c127] : memref<20x512xf32, #tpu.memory_space<vmem>>, vector<3x256xf32>
    %cst_55 = arith.constant 0.000000e+00 : f32
    %158 = vector.shape_cast %49 : vector<1x256xi1> to vector<1x256xi1>
    %159 = vector.broadcast %158 : vector<1x256xi1> to vector<3x256xi1>
    %160 = vector.broadcast %cst_55 : f32 to vector<3x256xf32>
    %161 = arith.select %159, %157, %160 : vector<3x256xi1>, vector<3x256xf32>
    %c0_56 = arith.constant 0 : index
    %c128_57 = arith.constant 128 : index
    %162 = vector.load %arg34[%c0_56, %c128_57] : memref<20x512xf32, #tpu.memory_space<vmem>>, vector<3x256xf32>
    %c0_58 = arith.constant 0 : index
    %c129 = arith.constant 129 : index
    %163 = vector.load %arg34[%c0_58, %c129] : memref<20x512xf32, #tpu.memory_space<vmem>>, vector<3x256xf32>
    %cst_59 = arith.constant 0.000000e+00 : f32
    %164 = vector.shape_cast %60 : vector<1x256xi1> to vector<1x256xi1>
    %165 = vector.broadcast %164 : vector<1x256xi1> to vector<3x256xi1>
    %166 = vector.broadcast %cst_59 : f32 to vector<3x256xf32>
    %167 = arith.select %165, %163, %166 : vector<3x256xi1>, vector<3x256xf32>
    %c0_60 = arith.constant 0 : index
    %c130 = arith.constant 130 : index
    %168 = vector.load %arg34[%c0_60, %c130] : memref<20x512xf32, #tpu.memory_space<vmem>>, vector<3x256xf32>
    %cst_61 = arith.constant 0.000000e+00 : f32
    %169 = vector.shape_cast %70 : vector<1x256xi1> to vector<1x256xi1>
    %170 = vector.broadcast %169 : vector<1x256xi1> to vector<3x256xi1>
    %171 = vector.broadcast %cst_61 : f32 to vector<3x256xf32>
    %172 = arith.select %170, %168, %171 : vector<3x256xi1>, vector<3x256xf32>
    %c0_62 = arith.constant 0 : index
    %c131 = arith.constant 131 : index
    %173 = vector.load %arg34[%c0_62, %c131] : memref<20x512xf32, #tpu.memory_space<vmem>>, vector<3x256xf32>
    %cst_63 = arith.constant 0.000000e+00 : f32
    %174 = vector.shape_cast %80 : vector<1x256xi1> to vector<1x256xi1>
    %175 = vector.broadcast %174 : vector<1x256xi1> to vector<3x256xi1>
    %176 = vector.broadcast %cst_63 : f32 to vector<3x256xf32>
    %177 = arith.select %175, %173, %176 : vector<3x256xi1>, vector<3x256xf32>
    %c0_64 = arith.constant 0 : index
    %c141 = arith.constant 141 : index
    %178 = vector.load %arg34[%c0_64, %c141] : memref<20x512xf32, #tpu.memory_space<vmem>>, vector<3x256xf32>
    %cst_65 = arith.constant 0.000000e+00 : f32
    %179 = vector.shape_cast %29 : vector<1x256xi1> to vector<1x256xi1>
    %180 = vector.broadcast %179 : vector<1x256xi1> to vector<3x256xi1>
    %181 = vector.broadcast %cst_65 : f32 to vector<3x256xf32>
    %182 = arith.select %180, %178, %181 : vector<3x256xi1>, vector<3x256xf32>
    %c0_66 = arith.constant 0 : index
    %c142 = arith.constant 142 : index
    %183 = vector.load %arg34[%c0_66, %c142] : memref<20x512xf32, #tpu.memory_space<vmem>>, vector<3x256xf32>
    %cst_67 = arith.constant 0.000000e+00 : f32
    %184 = vector.shape_cast %39 : vector<1x256xi1> to vector<1x256xi1>
    %185 = vector.broadcast %184 : vector<1x256xi1> to vector<3x256xi1>
    %186 = vector.broadcast %cst_67 : f32 to vector<3x256xf32>
    %187 = arith.select %185, %183, %186 : vector<3x256xi1>, vector<3x256xf32>
    %c0_68 = arith.constant 0 : index
    %c143 = arith.constant 143 : index
    %188 = vector.load %arg34[%c0_68, %c143] : memref<20x512xf32, #tpu.memory_space<vmem>>, vector<3x256xf32>
    %cst_69 = arith.constant 0.000000e+00 : f32
    %189 = vector.shape_cast %49 : vector<1x256xi1> to vector<1x256xi1>
    %190 = vector.broadcast %189 : vector<1x256xi1> to vector<3x256xi1>
    %191 = vector.broadcast %cst_69 : f32 to vector<3x256xf32>
    %192 = arith.select %190, %188, %191 : vector<3x256xi1>, vector<3x256xf32>
    %c0_70 = arith.constant 0 : index
    %c144 = arith.constant 144 : index
    %193 = vector.load %arg34[%c0_70, %c144] : memref<20x512xf32, #tpu.memory_space<vmem>>, vector<3x256xf32>
    %c0_71 = arith.constant 0 : index
    %c145 = arith.constant 145 : index
    %194 = vector.load %arg34[%c0_71, %c145] : memref<20x512xf32, #tpu.memory_space<vmem>>, vector<3x256xf32>
    %cst_72 = arith.constant 0.000000e+00 : f32
    %195 = vector.shape_cast %60 : vector<1x256xi1> to vector<1x256xi1>
    %196 = vector.broadcast %195 : vector<1x256xi1> to vector<3x256xi1>
    %197 = vector.broadcast %cst_72 : f32 to vector<3x256xf32>
    %198 = arith.select %196, %194, %197 : vector<3x256xi1>, vector<3x256xf32>
    %c0_73 = arith.constant 0 : index
    %c146 = arith.constant 146 : index
    %199 = vector.load %arg34[%c0_73, %c146] : memref<20x512xf32, #tpu.memory_space<vmem>>, vector<3x256xf32>
    %cst_74 = arith.constant 0.000000e+00 : f32
    %200 = vector.shape_cast %70 : vector<1x256xi1> to vector<1x256xi1>
    %201 = vector.broadcast %200 : vector<1x256xi1> to vector<3x256xi1>
    %202 = vector.broadcast %cst_74 : f32 to vector<3x256xf32>
    %203 = arith.select %201, %199, %202 : vector<3x256xi1>, vector<3x256xf32>
    %c0_75 = arith.constant 0 : index
    %c147 = arith.constant 147 : index
    %204 = vector.load %arg34[%c0_75, %c147] : memref<20x512xf32, #tpu.memory_space<vmem>>, vector<3x256xf32>
    %cst_76 = arith.constant 0.000000e+00 : f32
    %205 = vector.shape_cast %80 : vector<1x256xi1> to vector<1x256xi1>
    %206 = vector.broadcast %205 : vector<1x256xi1> to vector<3x256xi1>
    %207 = vector.broadcast %cst_76 : f32 to vector<3x256xf32>
    %208 = arith.select %206, %204, %207 : vector<3x256xi1>, vector<3x256xf32>
    %c0_77 = arith.constant 0 : index
    %c157 = arith.constant 157 : index
    %209 = vector.load %arg34[%c0_77, %c157] : memref<20x512xf32, #tpu.memory_space<vmem>>, vector<3x256xf32>
    %cst_78 = arith.constant 0.000000e+00 : f32
    %210 = vector.shape_cast %29 : vector<1x256xi1> to vector<1x256xi1>
    %211 = vector.broadcast %210 : vector<1x256xi1> to vector<3x256xi1>
    %212 = vector.broadcast %cst_78 : f32 to vector<3x256xf32>
    %213 = arith.select %211, %209, %212 : vector<3x256xi1>, vector<3x256xf32>
    %c0_79 = arith.constant 0 : index
    %c158 = arith.constant 158 : index
    %214 = vector.load %arg34[%c0_79, %c158] : memref<20x512xf32, #tpu.memory_space<vmem>>, vector<3x256xf32>
    %cst_80 = arith.constant 0.000000e+00 : f32
    %215 = vector.shape_cast %39 : vector<1x256xi1> to vector<1x256xi1>
    %216 = vector.broadcast %215 : vector<1x256xi1> to vector<3x256xi1>
    %217 = vector.broadcast %cst_80 : f32 to vector<3x256xf32>
    %218 = arith.select %216, %214, %217 : vector<3x256xi1>, vector<3x256xf32>
    %c0_81 = arith.constant 0 : index
    %c159 = arith.constant 159 : index
    %219 = vector.load %arg34[%c0_81, %c159] : memref<20x512xf32, #tpu.memory_space<vmem>>, vector<3x256xf32>
    %cst_82 = arith.constant 0.000000e+00 : f32
    %220 = vector.shape_cast %49 : vector<1x256xi1> to vector<1x256xi1>
    %221 = vector.broadcast %220 : vector<1x256xi1> to vector<3x256xi1>
    %222 = vector.broadcast %cst_82 : f32 to vector<3x256xf32>
    %223 = arith.select %221, %219, %222 : vector<3x256xi1>, vector<3x256xf32>
    %c0_83 = arith.constant 0 : index
    %c160 = arith.constant 160 : index
    %224 = vector.load %arg34[%c0_83, %c160] : memref<20x512xf32, #tpu.memory_space<vmem>>, vector<3x256xf32>
    %c0_84 = arith.constant 0 : index
    %c161 = arith.constant 161 : index
    %225 = vector.load %arg34[%c0_84, %c161] : memref<20x512xf32, #tpu.memory_space<vmem>>, vector<3x256xf32>
    %cst_85 = arith.constant 0.000000e+00 : f32
    %226 = vector.shape_cast %60 : vector<1x256xi1> to vector<1x256xi1>
    %227 = vector.broadcast %226 : vector<1x256xi1> to vector<3x256xi1>
    %228 = vector.broadcast %cst_85 : f32 to vector<3x256xf32>
    %229 = arith.select %227, %225, %228 : vector<3x256xi1>, vector<3x256xf32>
    %c0_86 = arith.constant 0 : index
    %c162 = arith.constant 162 : index
    %230 = vector.load %arg34[%c0_86, %c162] : memref<20x512xf32, #tpu.memory_space<vmem>>, vector<3x256xf32>
    %cst_87 = arith.constant 0.000000e+00 : f32
    %231 = vector.shape_cast %70 : vector<1x256xi1> to vector<1x256xi1>
    %232 = vector.broadcast %231 : vector<1x256xi1> to vector<3x256xi1>
    %233 = vector.broadcast %cst_87 : f32 to vector<3x256xf32>
    %234 = arith.select %232, %230, %233 : vector<3x256xi1>, vector<3x256xf32>
    %c0_88 = arith.constant 0 : index
    %c163 = arith.constant 163 : index
    %235 = vector.load %arg34[%c0_88, %c163] : memref<20x512xf32, #tpu.memory_space<vmem>>, vector<3x256xf32>
    %cst_89 = arith.constant 0.000000e+00 : f32
    %236 = vector.shape_cast %80 : vector<1x256xi1> to vector<1x256xi1>
    %237 = vector.broadcast %236 : vector<1x256xi1> to vector<3x256xi1>
    %238 = vector.broadcast %cst_89 : f32 to vector<3x256xf32>
    %239 = arith.select %237, %235, %238 : vector<3x256xi1>, vector<3x256xf32>
    %c0_90 = arith.constant 0 : index
    %c173 = arith.constant 173 : index
    %240 = vector.load %arg34[%c0_90, %c173] : memref<20x512xf32, #tpu.memory_space<vmem>>, vector<3x256xf32>
    %cst_91 = arith.constant 0.000000e+00 : f32
    %241 = vector.shape_cast %29 : vector<1x256xi1> to vector<1x256xi1>
    %242 = vector.broadcast %241 : vector<1x256xi1> to vector<3x256xi1>
    %243 = vector.broadcast %cst_91 : f32 to vector<3x256xf32>
    %244 = arith.select %242, %240, %243 : vector<3x256xi1>, vector<3x256xf32>
    %c0_92 = arith.constant 0 : index
    %c174 = arith.constant 174 : index
    %245 = vector.load %arg34[%c0_92, %c174] : memref<20x512xf32, #tpu.memory_space<vmem>>, vector<3x256xf32>
    %cst_93 = arith.constant 0.000000e+00 : f32
    %246 = vector.shape_cast %39 : vector<1x256xi1> to vector<1x256xi1>
    %247 = vector.broadcast %246 : vector<1x256xi1> to vector<3x256xi1>
    %248 = vector.broadcast %cst_93 : f32 to vector<3x256xf32>
    %249 = arith.select %247, %245, %248 : vector<3x256xi1>, vector<3x256xf32>
    %c0_94 = arith.constant 0 : index
    %c175 = arith.constant 175 : index
    %250 = vector.load %arg34[%c0_94, %c175] : memref<20x512xf32, #tpu.memory_space<vmem>>, vector<3x256xf32>
    %cst_95 = arith.constant 0.000000e+00 : f32
    %251 = vector.shape_cast %49 : vector<1x256xi1> to vector<1x256xi1>
    %252 = vector.broadcast %251 : vector<1x256xi1> to vector<3x256xi1>
    %253 = vector.broadcast %cst_95 : f32 to vector<3x256xf32>
    %254 = arith.select %252, %250, %253 : vector<3x256xi1>, vector<3x256xf32>
    %c0_96 = arith.constant 0 : index
    %c176 = arith.constant 176 : index
    %255 = vector.load %arg34[%c0_96, %c176] : memref<20x512xf32, #tpu.memory_space<vmem>>, vector<3x256xf32>
    %c0_97 = arith.constant 0 : index
    %c177 = arith.constant 177 : index
    %256 = vector.load %arg34[%c0_97, %c177] : memref<20x512xf32, #tpu.memory_space<vmem>>, vector<3x256xf32>
    %cst_98 = arith.constant 0.000000e+00 : f32
    %257 = vector.shape_cast %60 : vector<1x256xi1> to vector<1x256xi1>
    %258 = vector.broadcast %257 : vector<1x256xi1> to vector<3x256xi1>
    %259 = vector.broadcast %cst_98 : f32 to vector<3x256xf32>
    %260 = arith.select %258, %256, %259 : vector<3x256xi1>, vector<3x256xf32>
    %c0_99 = arith.constant 0 : index
    %c178 = arith.constant 178 : index
    %261 = vector.load %arg34[%c0_99, %c178] : memref<20x512xf32, #tpu.memory_space<vmem>>, vector<3x256xf32>
    %cst_100 = arith.constant 0.000000e+00 : f32
    %262 = vector.shape_cast %70 : vector<1x256xi1> to vector<1x256xi1>
    %263 = vector.broadcast %262 : vector<1x256xi1> to vector<3x256xi1>
    %264 = vector.broadcast %cst_100 : f32 to vector<3x256xf32>
    %265 = arith.select %263, %261, %264 : vector<3x256xi1>, vector<3x256xf32>
    %c0_101 = arith.constant 0 : index
    %c179 = arith.constant 179 : index
    %266 = vector.load %arg34[%c0_101, %c179] : memref<20x512xf32, #tpu.memory_space<vmem>>, vector<3x256xf32>
    %cst_102 = arith.constant 0.000000e+00 : f32
    %267 = vector.shape_cast %80 : vector<1x256xi1> to vector<1x256xi1>
    %268 = vector.broadcast %267 : vector<1x256xi1> to vector<3x256xi1>
    %269 = vector.broadcast %cst_102 : f32 to vector<3x256xf32>
    %270 = arith.select %268, %266, %269 : vector<3x256xi1>, vector<3x256xf32>
    %271 = tpu.concatenate %33, %43, %53, %54, %64, %74, %84, %89, %94, %99, %100, %105, %110, %115, %120, %125 in 0 : vector<3x256xf32>, vector<3x256xf32>, vector<3x256xf32>, vector<3x256xf32>, vector<3x256xf32>, vector<3x256xf32>, vector<3x256xf32>, vector<3x256xf32>, vector<3x256xf32>, vector<3x256xf32>, vector<3x256xf32>, vector<3x256xf32>, vector<3x256xf32>, vector<3x256xf32>, vector<3x256xf32>, vector<3x256xf32> -> vector<48x256xf32>
    %272 = tpu.concatenate %130, %131, %136, %141, %146, %151, %156, %161, %162, %167, %172, %177, %182, %187, %192, %193 in 0 : vector<3x256xf32>, vector<3x256xf32>, vector<3x256xf32>, vector<3x256xf32>, vector<3x256xf32>, vector<3x256xf32>, vector<3x256xf32>, vector<3x256xf32>, vector<3x256xf32>, vector<3x256xf32>, vector<3x256xf32>, vector<3x256xf32>, vector<3x256xf32>, vector<3x256xf32>, vector<3x256xf32>, vector<3x256xf32> -> vector<48x256xf32>
    %273 = tpu.concatenate %198, %203, %208, %213, %218, %223, %224, %229, %234, %239, %244, %249, %254, %255, %260, %265 in 0 : vector<3x256xf32>, vector<3x256xf32>, vector<3x256xf32>, vector<3x256xf32>, vector<3x256xf32>, vector<3x256xf32>, vector<3x256xf32>, vector<3x256xf32>, vector<3x256xf32>, vector<3x256xf32>, vector<3x256xf32>, vector<3x256xf32>, vector<3x256xf32>, vector<3x256xf32>, vector<3x256xf32>, vector<3x256xf32> -> vector<48x256xf32>
    %274 = tpu.concatenate %271, %272, %273, %270 in 0 : vector<48x256xf32>, vector<48x256xf32>, vector<48x256xf32>, vector<3x256xf32> -> vector<147x256xf32>
    %275 = arith.truncf %274 : vector<147x256xf32> to vector<147x256xbf16>
    %c0_103 = arith.constant 0 : index
    %c0_104 = arith.constant 0 : index
    %276 = vector.load %arg2[%c0_103, %c0_104] : memref<8x147xbf16, #tpu.memory_space<vmem>>, vector<8x147xbf16>
    %cst_105 = arith.constant dense<0.000000e+00> : vector<8x256xf32>
    %277 = tpu.matmul %276, %275, %cst_105 {dimension_numbers = #tpu.dot_dimension_numbers<[1], [0], [0], [1], [0, 0, 1, 1], [], []>} : vector<8x147xbf16>, vector<147x256xbf16>, vector<8x256xf32> -> vector<8x256xf32>
    %c0_106 = arith.constant 0 : index
    %c0_107 = arith.constant 0 : index
    %278 = vector.load %arg3[%c0_106, %c0_107] : memref<8x1xf32, #tpu.memory_space<vmem>>, vector<8x1xf32>
    %279 = vector.broadcast %278 : vector<8x1xf32> to vector<8x256xf32>
    %280 = arith.addf %277, %279 : vector<8x256xf32>
    %c0_108 = arith.constant 0 : index
    %c128_109 = arith.constant 128 : index
    %281 = vector.load %arg34[%c0_108, %c128_109] : memref<20x512xf32, #tpu.memory_space<vmem>>, vector<8x256xf32>
    tpu.vector_store %arg34[%c0_108, %c128_109], %280 {strides = array<i32>} : memref<20x512xf32, #tpu.memory_space<vmem>>, vector<8x256xf32>,
    %c0_110 = arith.constant 0 : index
    %c111_111 = arith.constant 111 : index
    %282 = vector.load %arg34[%c0_110, %c111_111] : memref<20x512xf32, #tpu.memory_space<vmem>>, vector<8x256xf32>
    %c1_i32_112 = arith.constant 1 : i32
    %283 = vector.broadcast %c1_i32_112 : i32 to vector<1x256xi32>
    %284 = arith.cmpi sge, %16, %283 : vector<1x256xi32>
    %c17_i32_113 = arith.constant 17 : i32
    %285 = vector.broadcast %c17_i32_113 : i32 to vector<1x256xi32>
    %286 = arith.cmpi slt, %16, %285 : vector<1x256xi32>
    %287 = arith.andi %284, %286 : vector<1x256xi1>
    %cst_114 = arith.constant 0.000000e+00 : f32
    %288 = vector.shape_cast %287 : vector<1x256xi1> to vector<1x256xi1>
    %289 = vector.broadcast %288 : vector<1x256xi1> to vector<8x256xi1>
    %290 = vector.broadcast %cst_114 : f32 to vector<8x256xf32>
    %291 = arith.select %289, %282, %290 : vector<8x256xi1>, vector<8x256xf32>
    %292 = arith.truncf %291 : vector<8x256xf32> to vector<8x256xbf16>
    %c0_115 = arith.constant 0 : index
    %c112_116 = arith.constant 112 : index
    %293 = vector.load %arg34[%c0_115, %c112_116] : memref<20x512xf32, #tpu.memory_space<vmem>>, vector<8x256xf32>
    %294 = arith.truncf %293 : vector<8x256xf32> to vector<8x256xbf16>
    %c0_117 = arith.constant 0 : index
    %c113_118 = arith.constant 113 : index
    %295 = vector.load %arg34[%c0_117, %c113_118] : memref<20x512xf32, #tpu.memory_space<vmem>>, vector<8x256xf32>
    %c-1_i32_119 = arith.constant -1 : i32
    %296 = vector.broadcast %c-1_i32_119 : i32 to vector<1x256xi32>
    %297 = arith.cmpi sge, %16, %296 : vector<1x256xi32>
    %c15_i32_120 = arith.constant 15 : i32
    %298 = vector.broadcast %c15_i32_120 : i32 to vector<1x256xi32>
    %299 = arith.cmpi slt, %16, %298 : vector<1x256xi32>
    %300 = arith.andi %297, %299 : vector<1x256xi1>
    %cst_121 = arith.constant 0.000000e+00 : f32
    %301 = vector.shape_cast %300 : vector<1x256xi1> to vector<1x256xi1>
    %302 = vector.broadcast %301 : vector<1x256xi1> to vector<8x256xi1>
    %303 = vector.broadcast %cst_121 : f32 to vector<8x256xf32>
    %304 = arith.select %302, %295, %303 : vector<8x256xi1>, vector<8x256xf32>
    %305 = arith.truncf %304 : vector<8x256xf32> to vector<8x256xbf16>
    %c0_122 = arith.constant 0 : index
    %c127_123 = arith.constant 127 : index
    %306 = vector.load %arg34[%c0_122, %c127_123] : memref<20x512xf32, #tpu.memory_space<vmem>>, vector<8x256xf32>
    %cst_124 = arith.constant 0.000000e+00 : f32
    %307 = vector.shape_cast %287 : vector<1x256xi1> to vector<1x256xi1>
    %308 = vector.broadcast %307 : vector<1x256xi1> to vector<8x256xi1>
    %309 = vector.broadcast %cst_124 : f32 to vector<8x256xf32>
    %310 = arith.select %308, %306, %309 : vector<8x256xi1>, vector<8x256xf32>
    %311 = arith.truncf %310 : vector<8x256xf32> to vector<8x256xbf16>
    %c0_125 = arith.constant 0 : index
    %c128_126 = arith.constant 128 : index
    %312 = vector.load %arg34[%c0_125, %c128_126] : memref<20x512xf32, #tpu.memory_space<vmem>>, vector<8x256xf32>
    %313 = arith.truncf %312 : vector<8x256xf32> to vector<8x256xbf16>
    %c0_127 = arith.constant 0 : index
    %c129_128 = arith.constant 129 : index
    %314 = vector.load %arg34[%c0_127, %c129_128] : memref<20x512xf32, #tpu.memory_space<vmem>>, vector<8x256xf32>
    %cst_129 = arith.constant 0.000000e+00 : f32
    %315 = vector.shape_cast %300 : vector<1x256xi1> to vector<1x256xi1>
    %316 = vector.broadcast %315 : vector<1x256xi1> to vector<8x256xi1>
    %317 = vector.broadcast %cst_129 : f32 to vector<8x256xf32>
    %318 = arith.select %316, %314, %317 : vector<8x256xi1>, vector<8x256xf32>
    %319 = arith.truncf %318 : vector<8x256xf32> to vector<8x256xbf16>
    %c0_130 = arith.constant 0 : index
    %c143_131 = arith.constant 143 : index
    %320 = vector.load %arg34[%c0_130, %c143_131] : memref<20x512xf32, #tpu.memory_space<vmem>>, vector<8x256xf32>
    %cst_132 = arith.constant 0.000000e+00 : f32
    %321 = vector.shape_cast %287 : vector<1x256xi1> to vector<1x256xi1>
    %322 = vector.broadcast %321 : vector<1x256xi1> to vector<8x256xi1>
    %323 = vector.broadcast %cst_132 : f32 to vector<8x256xf32>
    %324 = arith.select %322, %320, %323 : vector<8x256xi1>, vector<8x256xf32>
    %325 = arith.truncf %324 : vector<8x256xf32> to vector<8x256xbf16>
    %c0_133 = arith.constant 0 : index
    %c144_134 = arith.constant 144 : index
    %326 = vector.load %arg34[%c0_133, %c144_134] : memref<20x512xf32, #tpu.memory_space<vmem>>, vector<8x256xf32>
    %327 = arith.truncf %326 : vector<8x256xf32> to vector<8x256xbf16>
    %c0_135 = arith.constant 0 : index
    %c145_136 = arith.constant 145 : index
    %328 = vector.load %arg34[%c0_135, %c145_136] : memref<20x512xf32, #tpu.memory_space<vmem>>, vector<8x256xf32>
    %cst_137 = arith.constant 0.000000e+00 : f32
    %329 = vector.shape_cast %300 : vector<1x256xi1> to vector<1x256xi1>
    %330 = vector.broadcast %329 : vector<1x256xi1> to vector<8x256xi1>
    %331 = vector.broadcast %cst_137 : f32 to vector<8x256xf32>
    %332 = arith.select %330, %328, %331 : vector<8x256xi1>, vector<8x256xf32>
    %333 = arith.truncf %332 : vector<8x256xf32> to vector<8x256xbf16>
    %334 = tpu.concatenate %292, %294, %305, %311, %313, %319, %325, %327, %333 in 0 : vector<8x256xbf16>, vector<8x256xbf16>, vector<8x256xbf16>, vector<8x256xbf16>, vector<8x256xbf16>, vector<8x256xbf16>, vector<8x256xbf16>, vector<8x256xbf16>, vector<8x256xbf16> -> vector<72x256xbf16>
    %c0_138 = arith.constant 0 : index
    %c0_139 = arith.constant 0 : index
    %335 = vector.load %arg4[%c0_138, %c0_139] : memref<8x72xbf16, #tpu.memory_space<vmem>>, vector<8x72xbf16>
    %cst_140 = arith.constant dense<0.000000e+00> : vector<8x256xf32>
    %336 = tpu.matmul %335, %334, %cst_140 {dimension_numbers = #tpu.dot_dimension_numbers<[1], [0], [0], [1], [0, 0, 1, 1], [], []>} : vector<8x72xbf16>, vector<72x256xbf16>, vector<8x256xf32> -> vector<8x256xf32>
    %c0_141 = arith.constant 0 : index
    %c0_142 = arith.constant 0 : index
    %337 = vector.load %arg5[%c0_141, %c0_142] : memref<8x1xf32, #tpu.memory_space<vmem>>, vector<8x1xf32>
    %338 = vector.broadcast %337 : vector<8x1xf32> to vector<8x256xf32>
    %339 = arith.addf %336, %338 : vector<8x256xf32>
    %cst_143 = arith.constant 0.000000e+00 : f32
    %340 = vector.broadcast %cst_143 : f32 to vector<8x256xf32>
    %c0_144 = arith.constant 0 : index
    %c128_145 = arith.constant 128 : index
    %341 = vector.load %arg34[%c0_144, %c128_145] : memref<20x512xf32, #tpu.memory_space<vmem>>, vector<8x256xf32>
    tpu.vector_store %arg34[%c0_144, %c128_145], %339 {strides = array<i32>} : memref<20x512xf32, #tpu.memory_space<vmem>>, vector<8x256xf32>,
    %c0_146 = arith.constant 0 : index
    %c111_147 = arith.constant 111 : index
    %342 = vector.load %arg34[%c0_146, %c111_147] : memref<20x512xf32, #tpu.memory_space<vmem>>, vector<8x256xf32>
    %cst_148 = arith.constant 0.000000e+00 : f32
    %343 = vector.shape_cast %287 : vector<1x256xi1> to vector<1x256xi1>
    %344 = vector.broadcast %343 : vector<1x256xi1> to vector<8x256xi1>
    %345 = vector.broadcast %cst_148 : f32 to vector<8x256xf32>
    %346 = arith.select %344, %342, %345 : vector<8x256xi1>, vector<8x256xf32>
    %347 = arith.truncf %346 : vector<8x256xf32> to vector<8x256xbf16>
    %c0_149 = arith.constant 0 : index
    %c112_150 = arith.constant 112 : index
    %348 = vector.load %arg34[%c0_149, %c112_150] : memref<20x512xf32, #tpu.memory_space<vmem>>, vector<8x256xf32>
    %349 = arith.truncf %348 : vector<8x256xf32> to vector<8x256xbf16>
    %c0_151 = arith.constant 0 : index
    %c113_152 = arith.constant 113 : index
    %350 = vector.load %arg34[%c0_151, %c113_152] : memref<20x512xf32, #tpu.memory_space<vmem>>, vector<8x256xf32>
    %cst_153 = arith.constant 0.000000e+00 : f32
    %351 = vector.shape_cast %300 : vector<1x256xi1> to vector<1x256xi1>
    %352 = vector.broadcast %351 : vector<1x256xi1> to vector<8x256xi1>
    %353 = vector.broadcast %cst_153 : f32 to vector<8x256xf32>
    %354 = arith.select %352, %350, %353 : vector<8x256xi1>, vector<8x256xf32>
    %355 = arith.truncf %354 : vector<8x256xf32> to vector<8x256xbf16>
    %c0_154 = arith.constant 0 : index
    %c127_155 = arith.constant 127 : index
    %356 = vector.load %arg34[%c0_154, %c127_155] : memref<20x512xf32, #tpu.memory_space<vmem>>, vector<8x256xf32>
    %cst_156 = arith.constant 0.000000e+00 : f32
    %357 = vector.shape_cast %287 : vector<1x256xi1> to vector<1x256xi1>
    %358 = vector.broadcast %357 : vector<1x256xi1> to vector<8x256xi1>
    %359 = vector.broadcast %cst_156 : f32 to vector<8x256xf32>
    %360 = arith.select %358, %356, %359 : vector<8x256xi1>, vector<8x256xf32>
    %361 = arith.truncf %360 : vector<8x256xf32> to vector<8x256xbf16>
    %c0_157 = arith.constant 0 : index
    %c128_158 = arith.constant 128 : index
    %362 = vector.load %arg34[%c0_157, %c128_158] : memref<20x512xf32, #tpu.memory_space<vmem>>, vector<8x256xf32>
    %363 = arith.truncf %362 : vector<8x256xf32> to vector<8x256xbf16>
    %c0_159 = arith.constant 0 : index
    %c129_160 = arith.constant 129 : index
    %364 = vector.load %arg34[%c0_159, %c129_160] : memref<20x512xf32, #tpu.memory_space<vmem>>, vector<8x256xf32>
    %cst_161 = arith.constant 0.000000e+00 : f32
    %365 = vector.shape_cast %300 : vector<1x256xi1> to vector<1x256xi1>
    %366 = vector.broadcast %365 : vector<1x256xi1> to vector<8x256xi1>
    %367 = vector.broadcast %cst_161 : f32 to vector<8x256xf32>
    %368 = arith.select %366, %364, %367 : vector<8x256xi1>, vector<8x256xf32>
    %369 = arith.truncf %368 : vector<8x256xf32> to vector<8x256xbf16>
    %c0_162 = arith.constant 0 : index
    %c143_163 = arith.constant 143 : index
    %370 = vector.load %arg34[%c0_162, %c143_163] : memref<20x512xf32, #tpu.memory_space<vmem>>, vector<8x256xf32>
    %cst_164 = arith.constant 0.000000e+00 : f32
    %371 = vector.shape_cast %287 : vector<1x256xi1> to vector<1x256xi1>
    %372 = vector.broadcast %371 : vector<1x256xi1> to vector<8x256xi1>
    %373 = vector.broadcast %cst_164 : f32 to vector<8x256xf32>
    %374 = arith.select %372, %370, %373 : vector<8x256xi1>, vector<8x256xf32>
    %375 = arith.truncf %374 : vector<8x256xf32> to vector<8x256xbf16>
    %c0_165 = arith.constant 0 : index
    %c144_166 = arith.constant 144 : index
    %376 = vector.load %arg34[%c0_165, %c144_166] : memref<20x512xf32, #tpu.memory_space<vmem>>, vector<8x256xf32>
    %377 = arith.truncf %376 : vector<8x256xf32> to vector<8x256xbf16>
    %c0_167 = arith.constant 0 : index
    %c145_168 = arith.constant 145 : index
    %378 = vector.load %arg34[%c0_167, %c145_168] : memref<20x512xf32, #tpu.memory_space<vmem>>, vector<8x256xf32>
    %cst_169 = arith.constant 0.000000e+00 : f32
    %379 = vector.shape_cast %300 : vector<1x256xi1> to vector<1x256xi1>
    %380 = vector.broadcast %379 : vector<1x256xi1> to vector<8x256xi1>
    %381 = vector.broadcast %cst_169 : f32 to vector<8x256xf32>
    %382 = arith.select %380, %378, %381 : vector<8x256xi1>, vector<8x256xf32>
    %383 = arith.truncf %382 : vector<8x256xf32> to vector<8x256xbf16>
    %384 = tpu.concatenate %347, %349, %355, %361, %363, %369, %375, %377, %383 in 0 : vector<8x256xbf16>, vector<8x256xbf16>, vector<8x256xbf16>, vector<8x256xbf16>, vector<8x256xbf16>, vector<8x256xbf16>, vector<8x256xbf16>, vector<8x256xbf16>, vector<8x256xbf16> -> vector<72x256xbf16>
    %c0_170 = arith.constant 0 : index
    %c0_171 = arith.constant 0 : index
    %385 = vector.load %arg6[%c0_170, %c0_171] : memref<4x72xbf16, #tpu.memory_space<vmem>>, vector<4x72xbf16>
    %cst_172 = arith.constant dense<0.000000e+00> : vector<4x256xf32>
    %386 = tpu.matmul %385, %384, %cst_172 {dimension_numbers = #tpu.dot_dimension_numbers<[1], [0], [0], [1], [0, 0, 1, 1], [], []>} : vector<4x72xbf16>, vector<72x256xbf16>, vector<4x256xf32> -> vector<4x256xf32>
    %c0_173 = arith.constant 0 : index
    %c0_174 = arith.constant 0 : index
    %387 = vector.load %arg7[%c0_173, %c0_174] : memref<4x1xf32, #tpu.memory_space<vmem>>, vector<4x1xf32>
    %388 = vector.broadcast %387 : vector<4x1xf32> to vector<4x256xf32>
    %389 = arith.addf %386, %388 : vector<4x256xf32>
    %cst_175 = arith.constant 0.000000e+00 : f32
    %390 = vector.broadcast %cst_175 : f32 to vector<4x256xf32>
    %391 = arith.maximumf %389, %390 : vector<4x256xf32>
    %c8 = arith.constant 8 : index
    %c128_176 = arith.constant 128 : index
    %392 = vector.load %arg34[%c8, %c128_176] : memref<20x512xf32, #tpu.memory_space<vmem>>, vector<4x256xf32>
    tpu.vector_store %arg34[%c8, %c128_176], %391 {strides = array<i32>} : memref<20x512xf32, #tpu.memory_space<vmem>>, vector<4x256xf32>,
    %c0_177 = arith.constant 0 : index
    %c111_178 = arith.constant 111 : index
    %393 = vector.load %arg34[%c0_177, %c111_178] : memref<20x512xf32, #tpu.memory_space<vmem>>, vector<12x256xf32>
    %cst_179 = arith.constant 0.000000e+00 : f32
    %394 = vector.shape_cast %287 : vector<1x256xi1> to vector<1x256xi1>
    %395 = vector.broadcast %394 : vector<1x256xi1> to vector<12x256xi1>
    %396 = vector.broadcast %cst_179 : f32 to vector<12x256xf32>
    %397 = arith.select %395, %393, %396 : vector<12x256xi1>, vector<12x256xf32>
    %398 = arith.truncf %397 : vector<12x256xf32> to vector<12x256xbf16>
    %c0_180 = arith.constant 0 : index
    %c112_181 = arith.constant 112 : index
    %399 = vector.load %arg34[%c0_180, %c112_181] : memref<20x512xf32, #tpu.memory_space<vmem>>, vector<12x256xf32>
    %400 = arith.truncf %399 : vector<12x256xf32> to vector<12x256xbf16>
    %c0_182 = arith.constant 0 : index
    %c113_183 = arith.constant 113 : index
    %401 = vector.load %arg34[%c0_182, %c113_183] : memref<20x512xf32, #tpu.memory_space<vmem>>, vector<12x256xf32>
    %cst_184 = arith.constant 0.000000e+00 : f32
    %402 = vector.shape_cast %300 : vector<1x256xi1> to vector<1x256xi1>
    %403 = vector.broadcast %402 : vector<1x256xi1> to vector<12x256xi1>
    %404 = vector.broadcast %cst_184 : f32 to vector<12x256xf32>
    %405 = arith.select %403, %401, %404 : vector<12x256xi1>, vector<12x256xf32>
    %406 = arith.truncf %405 : vector<12x256xf32> to vector<12x256xbf16>
    %c0_185 = arith.constant 0 : index
    %c127_186 = arith.constant 127 : index
    %407 = vector.load %arg34[%c0_185, %c127_186] : memref<20x512xf32, #tpu.memory_space<vmem>>, vector<12x256xf32>
    %cst_187 = arith.constant 0.000000e+00 : f32
    %408 = vector.shape_cast %287 : vector<1x256xi1> to vector<1x256xi1>
    %409 = vector.broadcast %408 : vector<1x256xi1> to vector<12x256xi1>
    %410 = vector.broadcast %cst_187 : f32 to vector<12x256xf32>
    %411 = arith.select %409, %407, %410 : vector<12x256xi1>, vector<12x256xf32>
    %412 = arith.truncf %411 : vector<12x256xf32> to vector<12x256xbf16>
    %c0_188 = arith.constant 0 : index
    %c128_189 = arith.constant 128 : index
    %413 = vector.load %arg34[%c0_188, %c128_189] : memref<20x512xf32, #tpu.memory_space<vmem>>, vector<12x256xf32>
    %414 = arith.truncf %413 : vector<12x256xf32> to vector<12x256xbf16>
    %c0_190 = arith.constant 0 : index
    %c129_191 = arith.constant 129 : index
    %415 = vector.load %arg34[%c0_190, %c129_191] : memref<20x512xf32, #tpu.memory_space<vmem>>, vector<12x256xf32>
    %cst_192 = arith.constant 0.000000e+00 : f32
    %416 = vector.shape_cast %300 : vector<1x256xi1> to vector<1x256xi1>
    %417 = vector.broadcast %416 : vector<1x256xi1> to vector<12x256xi1>
    %418 = vector.broadcast %cst_192 : f32 to vector<12x256xf32>
    %419 = arith.select %417, %415, %418 : vector<12x256xi1>, vector<12x256xf32>
    %420 = arith.truncf %419 : vector<12x256xf32> to vector<12x256xbf16>
    %c0_193 = arith.constant 0 : index
    %c143_194 = arith.constant 143 : index
    %421 = vector.load %arg34[%c0_193, %c143_194] : memref<20x512xf32, #tpu.memory_space<vmem>>, vector<12x256xf32>
    %cst_195 = arith.constant 0.000000e+00 : f32
    %422 = vector.shape_cast %287 : vector<1x256xi1> to vector<1x256xi1>
    %423 = vector.broadcast %422 : vector<1x256xi1> to vector<12x256xi1>
    %424 = vector.broadcast %cst_195 : f32 to vector<12x256xf32>
    %425 = arith.select %423, %421, %424 : vector<12x256xi1>, vector<12x256xf32>
    %426 = arith.truncf %425 : vector<12x256xf32> to vector<12x256xbf16>
    %c0_196 = arith.constant 0 : index
    %c144_197 = arith.constant 144 : index
    %427 = vector.load %arg34[%c0_196, %c144_197] : memref<20x512xf32, #tpu.memory_space<vmem>>, vector<12x256xf32>
    %428 = arith.truncf %427 : vector<12x256xf32> to vector<12x256xbf16>
    %c0_198 = arith.constant 0 : index
    %c145_199 = arith.constant 145 : index
    %429 = vector.load %arg34[%c0_198, %c145_199] : memref<20x512xf32, #tpu.memory_space<vmem>>, vector<12x256xf32>
    %cst_200 = arith.constant 0.000000e+00 : f32
    %430 = vector.shape_cast %300 : vector<1x256xi1> to vector<1x256xi1>
    %431 = vector.broadcast %430 : vector<1x256xi1> to vector<12x256xi1>
    %432 = vector.broadcast %cst_200 : f32 to vector<12x256xf32>
    %433 = arith.select %431, %429, %432 : vector<12x256xi1>, vector<12x256xf32>
    %434 = arith.truncf %433 : vector<12x256xf32> to vector<12x256xbf16>
    %435 = tpu.concatenate %398, %400, %406, %412, %414, %420, %426, %428, %434 in 0 : vector<12x256xbf16>, vector<12x256xbf16>, vector<12x256xbf16>, vector<12x256xbf16>, vector<12x256xbf16>, vector<12x256xbf16>, vector<12x256xbf16>, vector<12x256xbf16>, vector<12x256xbf16> -> vector<108x256xbf16>
    %c0_201 = arith.constant 0 : index
    %c0_202 = arith.constant 0 : index
    %436 = vector.load %arg8[%c0_201, %c0_202] : memref<4x108xbf16, #tpu.memory_space<vmem>>, vector<4x108xbf16>
    %cst_203 = arith.constant dense<0.000000e+00> : vector<4x256xf32>
    %437 = tpu.matmul %436, %435, %cst_203 {dimension_numbers = #tpu.dot_dimension_numbers<[1], [0], [0], [1], [0, 0, 1, 1], [], []>} : vector<4x108xbf16>, vector<108x256xbf16>, vector<4x256xf32> -> vector<4x256xf32>
    %c0_204 = arith.constant 0 : index
    %c0_205 = arith.constant 0 : index
    %438 = vector.load %arg9[%c0_204, %c0_205] : memref<4x1xf32, #tpu.memory_space<vmem>>, vector<4x1xf32>
    %439 = vector.broadcast %438 : vector<4x1xf32> to vector<4x256xf32>
    %440 = arith.addf %437, %439 : vector<4x256xf32>
    %cst_206 = arith.constant 0.000000e+00 : f32
    %441 = vector.broadcast %cst_206 : f32 to vector<4x256xf32>
    %442 = arith.maximumf %440, %441 : vector<4x256xf32>
    %c12 = arith.constant 12 : index
    %c128_207 = arith.constant 128 : index
    %443 = vector.load %arg34[%c12, %c128_207] : memref<20x512xf32, #tpu.memory_space<vmem>>, vector<4x256xf32>
    tpu.vector_store %arg34[%c12, %c128_207], %442 {strides = array<i32>} : memref<20x512xf32, #tpu.memory_space<vmem>>, vector<4x256xf32>,
    %c0_208 = arith.constant 0 : index
    %c111_209 = arith.constant 111 : index
    %444 = vector.load %arg34[%c0_208, %c111_209] : memref<20x512xf32, #tpu.memory_space<vmem>>, vector<16x256xf32>
    %cst_210 = arith.constant 0.000000e+00 : f32
    %445 = vector.shape_cast %287 : vector<1x256xi1> to vector<1x256xi1>
    %446 = vector.broadcast %445 : vector<1x256xi1> to vector<16x256xi1>
    %447 = vector.broadcast %cst_210 : f32 to vector<16x256xf32>
    %448 = arith.select %446, %444, %447 : vector<16x256xi1>, vector<16x256xf32>
    %449 = arith.truncf %448 : vector<16x256xf32> to vector<16x256xbf16>
    %c0_211 = arith.constant 0 : index
    %c112_212 = arith.constant 112 : index
    %450 = vector.load %arg34[%c0_211, %c112_212] : memref<20x512xf32, #tpu.memory_space<vmem>>, vector<16x256xf32>
    %451 = arith.truncf %450 : vector<16x256xf32> to vector<16x256xbf16>
    %c0_213 = arith.constant 0 : index
    %c113_214 = arith.constant 113 : index
    %452 = vector.load %arg34[%c0_213, %c113_214] : memref<20x512xf32, #tpu.memory_space<vmem>>, vector<16x256xf32>
    %cst_215 = arith.constant 0.000000e+00 : f32
    %453 = vector.shape_cast %300 : vector<1x256xi1> to vector<1x256xi1>
    %454 = vector.broadcast %453 : vector<1x256xi1> to vector<16x256xi1>
    %455 = vector.broadcast %cst_215 : f32 to vector<16x256xf32>
    %456 = arith.select %454, %452, %455 : vector<16x256xi1>, vector<16x256xf32>
    %457 = arith.truncf %456 : vector<16x256xf32> to vector<16x256xbf16>
    %c0_216 = arith.constant 0 : index
    %c127_217 = arith.constant 127 : index
    %458 = vector.load %arg34[%c0_216, %c127_217] : memref<20x512xf32, #tpu.memory_space<vmem>>, vector<16x256xf32>
    %cst_218 = arith.constant 0.000000e+00 : f32
    %459 = vector.shape_cast %287 : vector<1x256xi1> to vector<1x256xi1>
    %460 = vector.broadcast %459 : vector<1x256xi1> to vector<16x256xi1>
    %461 = vector.broadcast %cst_218 : f32 to vector<16x256xf32>
    %462 = arith.select %460, %458, %461 : vector<16x256xi1>, vector<16x256xf32>
    %463 = arith.truncf %462 : vector<16x256xf32> to vector<16x256xbf16>
    %c0_219 = arith.constant 0 : index
    %c128_220 = arith.constant 128 : index
    %464 = vector.load %arg34[%c0_219, %c128_220] : memref<20x512xf32, #tpu.memory_space<vmem>>, vector<16x256xf32>
    %465 = arith.truncf %464 : vector<16x256xf32> to vector<16x256xbf16>
    %c0_221 = arith.constant 0 : index
    %c129_222 = arith.constant 129 : index
    %466 = vector.load %arg34[%c0_221, %c129_222] : memref<20x512xf32, #tpu.memory_space<vmem>>, vector<16x256xf32>
    %cst_223 = arith.constant 0.000000e+00 : f32
    %467 = vector.shape_cast %300 : vector<1x256xi1> to vector<1x256xi1>
    %468 = vector.broadcast %467 : vector<1x256xi1> to vector<16x256xi1>
    %469 = vector.broadcast %cst_223 : f32 to vector<16x256xf32>
    %470 = arith.select %468, %466, %469 : vector<16x256xi1>, vector<16x256xf32>
    %471 = arith.truncf %470 : vector<16x256xf32> to vector<16x256xbf16>
    %c0_224 = arith.constant 0 : index
    %c143_225 = arith.constant 143 : index
    %472 = vector.load %arg34[%c0_224, %c143_225] : memref<20x512xf32, #tpu.memory_space<vmem>>, vector<16x256xf32>
    %cst_226 = arith.constant 0.000000e+00 : f32
    %473 = vector.shape_cast %287 : vector<1x256xi1> to vector<1x256xi1>
    %474 = vector.broadcast %473 : vector<1x256xi1> to vector<16x256xi1>
    %475 = vector.broadcast %cst_226 : f32 to vector<16x256xf32>
    %476 = arith.select %474, %472, %475 : vector<16x256xi1>, vector<16x256xf32>
    %477 = arith.truncf %476 : vector<16x256xf32> to vector<16x256xbf16>
    %c0_227 = arith.constant 0 : index
    %c144_228 = arith.constant 144 : index
    %478 = vector.load %arg34[%c0_227, %c144_228] : memref<20x512xf32, #tpu.memory_space<vmem>>, vector<16x256xf32>
    %479 = arith.truncf %478 : vector<16x256xf32> to vector<16x256xbf16>
    %c0_229 = arith.constant 0 : index
    %c145_230 = arith.constant 145 : index
    %480 = vector.load %arg34[%c0_229, %c145_230] : memref<20x512xf32, #tpu.memory_space<vmem>>, vector<16x256xf32>
    %cst_231 = arith.constant 0.000000e+00 : f32
    %481 = vector.shape_cast %300 : vector<1x256xi1> to vector<1x256xi1>
    %482 = vector.broadcast %481 : vector<1x256xi1> to vector<16x256xi1>
    %483 = vector.broadcast %cst_231 : f32 to vector<16x256xf32>
    %484 = arith.select %482, %480, %483 : vector<16x256xi1>, vector<16x256xf32>
    %485 = arith.truncf %484 : vector<16x256xf32> to vector<16x256xbf16>
    %486 = tpu.concatenate %449, %451, %457, %463, %465, %471, %477, %479, %485 in 0 : vector<16x256xbf16>, vector<16x256xbf16>, vector<16x256xbf16>, vector<16x256xbf16>, vector<16x256xbf16>, vector<16x256xbf16>, vector<16x256xbf16>, vector<16x256xbf16>, vector<16x256xbf16> -> vector<144x256xbf16>
    %c0_232 = arith.constant 0 : index
    %c0_233 = arith.constant 0 : index
    %487 = vector.load %arg10[%c0_232, %c0_233] : memref<4x144xbf16, #tpu.memory_space<vmem>>, vector<4x144xbf16>
    %cst_234 = arith.constant dense<0.000000e+00> : vector<4x256xf32>
    %488 = tpu.matmul %487, %486, %cst_234 {dimension_numbers = #tpu.dot_dimension_numbers<[1], [0], [0], [1], [0, 0, 1, 1], [], []>} : vector<4x144xbf16>, vector<144x256xbf16>, vector<4x256xf32> -> vector<4x256xf32>
    %c0_235 = arith.constant 0 : index
    %c0_236 = arith.constant 0 : index
    %489 = vector.load %arg11[%c0_235, %c0_236] : memref<4x1xf32, #tpu.memory_space<vmem>>, vector<4x1xf32>
    %490 = vector.broadcast %489 : vector<4x1xf32> to vector<4x256xf32>
    %491 = arith.addf %488, %490 : vector<4x256xf32>
    %cst_237 = arith.constant 0.000000e+00 : f32
    %492 = vector.broadcast %cst_237 : f32 to vector<4x256xf32>
    %493 = arith.maximumf %491, %492 : vector<4x256xf32>
    %c16 = arith.constant 16 : index
    %c128_238 = arith.constant 128 : index
    %494 = vector.load %arg34[%c16, %c128_238] : memref<20x512xf32, #tpu.memory_space<vmem>>, vector<4x256xf32>
    tpu.vector_store %arg34[%c16, %c128_238], %493 {strides = array<i32>} : memref<20x512xf32, #tpu.memory_space<vmem>>, vector<4x256xf32>,
    %c0_239 = arith.constant 0 : index
    %c128_240 = arith.constant 128 : index
    %495 = vector.load %arg34[%c0_239, %c128_240] : memref<20x512xf32, #tpu.memory_space<vmem>>, vector<20x256xf32>
    %c0_241 = arith.constant 0 : index
    %c0_242 = arith.constant 0 : index
    %496 = vector.load %arg12[%c0_241, %c0_242] : memref<8x20xbf16, #tpu.memory_space<vmem>>, vector<8x20xbf16>
    %497 = arith.truncf %495 : vector<20x256xf32> to vector<20x256xbf16>
    %cst_243 = arith.constant dense<0.000000e+00> : vector<8x256xf32>
    %498 = tpu.matmul %496, %497, %cst_243 {dimension_numbers = #tpu.dot_dimension_numbers<[1], [0], [0], [1], [0, 0, 1, 1], [], []>} : vector<8x20xbf16>, vector<20x256xbf16>, vector<8x256xf32> -> vector<8x256xf32>
    %c0_244 = arith.constant 0 : index
    %c0_245 = arith.constant 0 : index
    %499 = vector.load %arg13[%c0_244, %c0_245] : memref<8x1xf32, #tpu.memory_space<vmem>>, vector<8x1xf32>
    %500 = vector.broadcast %499 : vector<8x1xf32> to vector<8x256xf32>
    %501 = arith.addf %498, %500 : vector<8x256xf32>
    %502 = arith.addf %339, %501 : vector<8x256xf32>
    %c0_246 = arith.constant 0 : index
    %c0_247 = arith.constant 0 : index
    %503 = vector.load %arg29[%c0_246, %c0_247] : memref<8x16xbf16, #tpu.memory_space<vmem>>, vector<8x8xbf16>
    %504 = arith.truncf %502 : vector<8x256xf32> to vector<8x256xbf16>
    %cst_248 = arith.constant dense<0.000000e+00> : vector<8x256xf32>
    %505 = tpu.matmul %503, %504, %cst_248 {dimension_numbers = #tpu.dot_dimension_numbers<[1], [0], [0], [1], [0, 0, 1, 1], [], []>} : vector<8x8xbf16>, vector<8x256xbf16>, vector<8x256xf32> -> vector<8x256xf32>
    %506 = arith.addf %340, %505 : vector<8x256xf32>
    %c0_249 = arith.constant 0 : index
    %c128_250 = arith.constant 128 : index
    %507 = vector.load %arg34[%c0_249, %c128_250] : memref<20x512xf32, #tpu.memory_space<vmem>>, vector<8x256xf32>
    tpu.vector_store %arg34[%c0_249, %c128_250], %502 {strides = array<i32>} : memref<20x512xf32, #tpu.memory_space<vmem>>, vector<8x256xf32>,
    %c0_251 = arith.constant 0 : index
    %c111_252 = arith.constant 111 : index
    %508 = vector.load %arg34[%c0_251, %c111_252] : memref<20x512xf32, #tpu.memory_space<vmem>>, vector<8x256xf32>
    %cst_253 = arith.constant 0.000000e+00 : f32
    %509 = vector.shape_cast %287 : vector<1x256xi1> to vector<1x256xi1>
    %510 = vector.broadcast %509 : vector<1x256xi1> to vector<8x256xi1>
    %511 = vector.broadcast %cst_253 : f32 to vector<8x256xf32>
    %512 = arith.select %510, %508, %511 : vector<8x256xi1>, vector<8x256xf32>
    %513 = arith.truncf %512 : vector<8x256xf32> to vector<8x256xbf16>
    %c0_254 = arith.constant 0 : index
    %c112_255 = arith.constant 112 : index
    %514 = vector.load %arg34[%c0_254, %c112_255] : memref<20x512xf32, #tpu.memory_space<vmem>>, vector<8x256xf32>
    %515 = arith.truncf %514 : vector<8x256xf32> to vector<8x256xbf16>
    %c0_256 = arith.constant 0 : index
    %c113_257 = arith.constant 113 : index
    %516 = vector.load %arg34[%c0_256, %c113_257] : memref<20x512xf32, #tpu.memory_space<vmem>>, vector<8x256xf32>
    %cst_258 = arith.constant 0.000000e+00 : f32
    %517 = vector.shape_cast %300 : vector<1x256xi1> to vector<1x256xi1>
    %518 = vector.broadcast %517 : vector<1x256xi1> to vector<8x256xi1>
    %519 = vector.broadcast %cst_258 : f32 to vector<8x256xf32>
    %520 = arith.select %518, %516, %519 : vector<8x256xi1>, vector<8x256xf32>
    %521 = arith.truncf %520 : vector<8x256xf32> to vector<8x256xbf16>
    %c0_259 = arith.constant 0 : index
    %c127_260 = arith.constant 127 : index
    %522 = vector.load %arg34[%c0_259, %c127_260] : memref<20x512xf32, #tpu.memory_space<vmem>>, vector<8x256xf32>
    %cst_261 = arith.constant 0.000000e+00 : f32
    %523 = vector.shape_cast %287 : vector<1x256xi1> to vector<1x256xi1>
    %524 = vector.broadcast %523 : vector<1x256xi1> to vector<8x256xi1>
    %525 = vector.broadcast %cst_261 : f32 to vector<8x256xf32>
    %526 = arith.select %524, %522, %525 : vector<8x256xi1>, vector<8x256xf32>
    %527 = arith.truncf %526 : vector<8x256xf32> to vector<8x256xbf16>
    %c0_262 = arith.constant 0 : index
    %c128_263 = arith.constant 128 : index
    %528 = vector.load %arg34[%c0_262, %c128_263] : memref<20x512xf32, #tpu.memory_space<vmem>>, vector<8x256xf32>
    %529 = arith.truncf %528 : vector<8x256xf32> to vector<8x256xbf16>
    %c0_264 = arith.constant 0 : index
    %c129_265 = arith.constant 129 : index
    %530 = vector.load %arg34[%c0_264, %c129_265] : memref<20x512xf32, #tpu.memory_space<vmem>>, vector<8x256xf32>
    %cst_266 = arith.constant 0.000000e+00 : f32
    %531 = vector.shape_cast %300 : vector<1x256xi1> to vector<1x256xi1>
    %532 = vector.broadcast %531 : vector<1x256xi1> to vector<8x256xi1>
    %533 = vector.broadcast %cst_266 : f32 to vector<8x256xf32>
    %534 = arith.select %532, %530, %533 : vector<8x256xi1>, vector<8x256xf32>
    %535 = arith.truncf %534 : vector<8x256xf32> to vector<8x256xbf16>
    %c0_267 = arith.constant 0 : index
    %c143_268 = arith.constant 143 : index
    %536 = vector.load %arg34[%c0_267, %c143_268] : memref<20x512xf32, #tpu.memory_space<vmem>>, vector<8x256xf32>
    %cst_269 = arith.constant 0.000000e+00 : f32
    %537 = vector.shape_cast %287 : vector<1x256xi1> to vector<1x256xi1>
    %538 = vector.broadcast %537 : vector<1x256xi1> to vector<8x256xi1>
    %539 = vector.broadcast %cst_269 : f32 to vector<8x256xf32>
    %540 = arith.select %538, %536, %539 : vector<8x256xi1>, vector<8x256xf32>
    %541 = arith.truncf %540 : vector<8x256xf32> to vector<8x256xbf16>
    %c0_270 = arith.constant 0 : index
    %c144_271 = arith.constant 144 : index
    %542 = vector.load %arg34[%c0_270, %c144_271] : memref<20x512xf32, #tpu.memory_space<vmem>>, vector<8x256xf32>
    %543 = arith.truncf %542 : vector<8x256xf32> to vector<8x256xbf16>
    %c0_272 = arith.constant 0 : index
    %c145_273 = arith.constant 145 : index
    %544 = vector.load %arg34[%c0_272, %c145_273] : memref<20x512xf32, #tpu.memory_space<vmem>>, vector<8x256xf32>
    %cst_274 = arith.constant 0.000000e+00 : f32
    %545 = vector.shape_cast %300 : vector<1x256xi1> to vector<1x256xi1>
    %546 = vector.broadcast %545 : vector<1x256xi1> to vector<8x256xi1>
    %547 = vector.broadcast %cst_274 : f32 to vector<8x256xf32>
    %548 = arith.select %546, %544, %547 : vector<8x256xi1>, vector<8x256xf32>
    %549 = arith.truncf %548 : vector<8x256xf32> to vector<8x256xbf16>
    %550 = tpu.concatenate %513, %515, %521, %527, %529, %535, %541, %543, %549 in 0 : vector<8x256xbf16>, vector<8x256xbf16>, vector<8x256xbf16>, vector<8x256xbf16>, vector<8x256xbf16>, vector<8x256xbf16>, vector<8x256xbf16>, vector<8x256xbf16>, vector<8x256xbf16> -> vector<72x256xbf16>
    %c0_275 = arith.constant 0 : index
    %c0_276 = arith.constant 0 : index
    %551 = vector.load %arg14[%c0_275, %c0_276] : memref<8x72xbf16, #tpu.memory_space<vmem>>, vector<8x72xbf16>
    %cst_277 = arith.constant dense<0.000000e+00> : vector<8x256xf32>
    %552 = tpu.matmul %551, %550, %cst_277 {dimension_numbers = #tpu.dot_dimension_numbers<[1], [0], [0], [1], [0, 0, 1, 1], [], []>} : vector<8x72xbf16>, vector<72x256xbf16>, vector<8x256xf32> -> vector<8x256xf32>
    %c0_278 = arith.constant 0 : index
    %c0_279 = arith.constant 0 : index
    %553 = vector.load %arg15[%c0_278, %c0_279] : memref<8x1xf32, #tpu.memory_space<vmem>>, vector<8x1xf32>
    %554 = vector.broadcast %553 : vector<8x1xf32> to vector<8x256xf32>
    %555 = arith.addf %552, %554 : vector<8x256xf32>
    %cst_280 = arith.constant 0.000000e+00 : f32
    %556 = vector.broadcast %cst_280 : f32 to vector<8x256xf32>
    %557 = arith.maximumf %555, %556 : vector<8x256xf32>
    %c0_281 = arith.constant 0 : index
    %c128_282 = arith.constant 128 : index
    %558 = vector.load %arg34[%c0_281, %c128_282] : memref<20x512xf32, #tpu.memory_space<vmem>>, vector<8x256xf32>
    tpu.vector_store %arg34[%c0_281, %c128_282], %557 {strides = array<i32>} : memref<20x512xf32, #tpu.memory_space<vmem>>, vector<8x256xf32>,
    %c0_283 = arith.constant 0 : index
    %c111_284 = arith.constant 111 : index
    %559 = vector.load %arg34[%c0_283, %c111_284] : memref<20x512xf32, #tpu.memory_space<vmem>>, vector<8x256xf32>
    %cst_285 = arith.constant 0.000000e+00 : f32
    %560 = vector.shape_cast %287 : vector<1x256xi1> to vector<1x256xi1>
    %561 = vector.broadcast %560 : vector<1x256xi1> to vector<8x256xi1>
    %562 = vector.broadcast %cst_285 : f32 to vector<8x256xf32>
    %563 = arith.select %561, %559, %562 : vector<8x256xi1>, vector<8x256xf32>
    %564 = arith.truncf %563 : vector<8x256xf32> to vector<8x256xbf16>
    %c0_286 = arith.constant 0 : index
    %c112_287 = arith.constant 112 : index
    %565 = vector.load %arg34[%c0_286, %c112_287] : memref<20x512xf32, #tpu.memory_space<vmem>>, vector<8x256xf32>
    %566 = arith.truncf %565 : vector<8x256xf32> to vector<8x256xbf16>
    %c0_288 = arith.constant 0 : index
    %c113_289 = arith.constant 113 : index
    %567 = vector.load %arg34[%c0_288, %c113_289] : memref<20x512xf32, #tpu.memory_space<vmem>>, vector<8x256xf32>
    %cst_290 = arith.constant 0.000000e+00 : f32
    %568 = vector.shape_cast %300 : vector<1x256xi1> to vector<1x256xi1>
    %569 = vector.broadcast %568 : vector<1x256xi1> to vector<8x256xi1>
    %570 = vector.broadcast %cst_290 : f32 to vector<8x256xf32>
    %571 = arith.select %569, %567, %570 : vector<8x256xi1>, vector<8x256xf32>
    %572 = arith.truncf %571 : vector<8x256xf32> to vector<8x256xbf16>
    %c0_291 = arith.constant 0 : index
    %c127_292 = arith.constant 127 : index
    %573 = vector.load %arg34[%c0_291, %c127_292] : memref<20x512xf32, #tpu.memory_space<vmem>>, vector<8x256xf32>
    %cst_293 = arith.constant 0.000000e+00 : f32
    %574 = vector.shape_cast %287 : vector<1x256xi1> to vector<1x256xi1>
    %575 = vector.broadcast %574 : vector<1x256xi1> to vector<8x256xi1>
    %576 = vector.broadcast %cst_293 : f32 to vector<8x256xf32>
    %577 = arith.select %575, %573, %576 : vector<8x256xi1>, vector<8x256xf32>
    %578 = arith.truncf %577 : vector<8x256xf32> to vector<8x256xbf16>
    %c0_294 = arith.constant 0 : index
    %c128_295 = arith.constant 128 : index
    %579 = vector.load %arg34[%c0_294, %c128_295] : memref<20x512xf32, #tpu.memory_space<vmem>>, vector<8x256xf32>
    %580 = arith.truncf %579 : vector<8x256xf32> to vector<8x256xbf16>
    %c0_296 = arith.constant 0 : index
    %c129_297 = arith.constant 129 : index
    %581 = vector.load %arg34[%c0_296, %c129_297] : memref<20x512xf32, #tpu.memory_space<vmem>>, vector<8x256xf32>
    %cst_298 = arith.constant 0.000000e+00 : f32
    %582 = vector.shape_cast %300 : vector<1x256xi1> to vector<1x256xi1>
    %583 = vector.broadcast %582 : vector<1x256xi1> to vector<8x256xi1>
    %584 = vector.broadcast %cst_298 : f32 to vector<8x256xf32>
    %585 = arith.select %583, %581, %584 : vector<8x256xi1>, vector<8x256xf32>
    %586 = arith.truncf %585 : vector<8x256xf32> to vector<8x256xbf16>
    %c0_299 = arith.constant 0 : index
    %c143_300 = arith.constant 143 : index
    %587 = vector.load %arg34[%c0_299, %c143_300] : memref<20x512xf32, #tpu.memory_space<vmem>>, vector<8x256xf32>
    %cst_301 = arith.constant 0.000000e+00 : f32
    %588 = vector.shape_cast %287 : vector<1x256xi1> to vector<1x256xi1>
    %589 = vector.broadcast %588 : vector<1x256xi1> to vector<8x256xi1>
    %590 = vector.broadcast %cst_301 : f32 to vector<8x256xf32>
    %591 = arith.select %589, %587, %590 : vector<8x256xi1>, vector<8x256xf32>
    %592 = arith.truncf %591 : vector<8x256xf32> to vector<8x256xbf16>
    %c0_302 = arith.constant 0 : index
    %c144_303 = arith.constant 144 : index
    %593 = vector.load %arg34[%c0_302, %c144_303] : memref<20x512xf32, #tpu.memory_space<vmem>>, vector<8x256xf32>
    %594 = arith.truncf %593 : vector<8x256xf32> to vector<8x256xbf16>
    %c0_304 = arith.constant 0 : index
    %c145_305 = arith.constant 145 : index
    %595 = vector.load %arg34[%c0_304, %c145_305] : memref<20x512xf32, #tpu.memory_space<vmem>>, vector<8x256xf32>
    %cst_306 = arith.constant 0.000000e+00 : f32
    %596 = vector.shape_cast %300 : vector<1x256xi1> to vector<1x256xi1>
    %597 = vector.broadcast %596 : vector<1x256xi1> to vector<8x256xi1>
    %598 = vector.broadcast %cst_306 : f32 to vector<8x256xf32>
    %599 = arith.select %597, %595, %598 : vector<8x256xi1>, vector<8x256xf32>
    %600 = arith.truncf %599 : vector<8x256xf32> to vector<8x256xbf16>
    %601 = tpu.concatenate %564, %566, %572, %578, %580, %586, %592, %594, %600 in 0 : vector<8x256xbf16>, vector<8x256xbf16>, vector<8x256xbf16>, vector<8x256xbf16>, vector<8x256xbf16>, vector<8x256xbf16>, vector<8x256xbf16>, vector<8x256xbf16>, vector<8x256xbf16> -> vector<72x256xbf16>
    %c0_307 = arith.constant 0 : index
    %c0_308 = arith.constant 0 : index
    %602 = vector.load %arg16[%c0_307, %c0_308] : memref<8x72xbf16, #tpu.memory_space<vmem>>, vector<8x72xbf16>
    %cst_309 = arith.constant dense<0.000000e+00> : vector<8x256xf32>
    %603 = tpu.matmul %602, %601, %cst_309 {dimension_numbers = #tpu.dot_dimension_numbers<[1], [0], [0], [1], [0, 0, 1, 1], [], []>} : vector<8x72xbf16>, vector<72x256xbf16>, vector<8x256xf32> -> vector<8x256xf32>
    %c0_310 = arith.constant 0 : index
    %c0_311 = arith.constant 0 : index
    %604 = vector.load %arg17[%c0_310, %c0_311] : memref<8x1xf32, #tpu.memory_space<vmem>>, vector<8x1xf32>
    %605 = vector.broadcast %604 : vector<8x1xf32> to vector<8x256xf32>
    %606 = arith.addf %603, %605 : vector<8x256xf32>
    %cst_312 = arith.constant dense<0.000000e+00> : vector<8xf32>
    %607 = vector.multi_reduction <add>, %606, %cst_312 [1] : vector<8x256xf32> to vector<8xf32>
    %608 = vector.shape_cast %607 : vector<8xf32> to vector<8x1xf32>
    %cst_313 = arith.constant 2.560000e+02 : f32
    %609 = vector.broadcast %cst_313 : f32 to vector<8x1xf32>
    %610 = arith.divf %608, %609 : vector<8x1xf32>
    %c0_314 = arith.constant 0 : index
    %c0_315 = arith.constant 0 : index
    %611 = vector.load %arg18[%c0_314, %c0_315] : memref<8x2xf32, #tpu.memory_space<vmem>>, vector<8x2xf32>
    %612 = vector.broadcast %610 : vector<8x1xf32> to vector<8x2xf32>
    %613 = arith.mulf %611, %612 : vector<8x2xf32>
    %cst_316 = arith.constant dense<0.000000e+00> : vector<2xf32>
    %614 = vector.multi_reduction <add>, %613, %cst_316 [0] : vector<8x2xf32> to vector<2xf32>
    %615 = vector.shape_cast %614 : vector<2xf32> to vector<1x2xf32>
    %c0_317 = arith.constant 0 : index
    %c0_318 = arith.constant 0 : index
    %616 = vector.load %arg19[%c0_317, %c0_318] : memref<1x2xf32, #tpu.memory_space<vmem>>, vector<1x2xf32>
    %617 = arith.addf %615, %616 : vector<1x2xf32>
    %cst_319 = arith.constant 0.000000e+00 : f32
    %618 = vector.broadcast %cst_319 : f32 to vector<1x2xf32>
    %619 = arith.maximumf %617, %618 : vector<1x2xf32>
    %c0_320 = arith.constant 0 : index
    %c0_321 = arith.constant 0 : index
    %620 = vector.load %arg20[%c0_320, %c0_321] : memref<8x2xf32, #tpu.memory_space<vmem>>, vector<8x2xf32>
    %621 = vector.broadcast %619 : vector<1x2xf32> to vector<8x2xf32>
    %622 = arith.mulf %620, %621 : vector<8x2xf32>
    %cst_322 = arith.constant dense<0.000000e+00> : vector<8xf32>
    %623 = vector.multi_reduction <add>, %622, %cst_322 [1] : vector<8x2xf32> to vector<8xf32>
    %624 = vector.shape_cast %623 : vector<8xf32> to vector<8x1xf32>
    %c0_323 = arith.constant 0 : index
    %c0_324 = arith.constant 0 : index
    %625 = vector.load %arg21[%c0_323, %c0_324] : memref<8x1xf32, #tpu.memory_space<vmem>>, vector<8x1xf32>
    %626 = arith.addf %624, %625 : vector<8x1xf32>
    %627 = arith.negf %626 : vector<8x1xf32>
    %628 = math.exp %627 : vector<8x1xf32>
    %cst_325 = arith.constant 1.000000e+00 : f32
    %629 = vector.broadcast %cst_325 : f32 to vector<8x1xf32>
    %630 = arith.addf %629, %628 : vector<8x1xf32>
    %631 = arith.divf %629, %630 : vector<8x1xf32>
    %632 = vector.broadcast %631 : vector<8x1xf32> to vector<8x256xf32>
    %633 = arith.mulf %606, %632 : vector<8x256xf32>
    %c0_326 = arith.constant 0 : index
    %c0_327 = arith.constant 0 : index
    %634 = vector.load %arg22[%c0_326, %c0_327] : memref<16x8xbf16, #tpu.memory_space<vmem>>, vector<16x8xbf16>
    %635 = arith.truncf %606 : vector<8x256xf32> to vector<8x256xbf16>
    %cst_328 = arith.constant dense<0.000000e+00> : vector<16x256xf32>
    %636 = tpu.matmul %634, %635, %cst_328 {dimension_numbers = #tpu.dot_dimension_numbers<[1], [0], [0], [1], [0, 0, 1, 1], [], []>} : vector<16x8xbf16>, vector<8x256xbf16>, vector<16x256xf32> -> vector<16x256xf32>
    %c0_329 = arith.constant 0 : index
    %c0_330 = arith.constant 0 : index
    %637 = vector.load %arg23[%c0_329, %c0_330] : memref<16x1xf32, #tpu.memory_space<vmem>>, vector<16x1xf32>
    %638 = vector.broadcast %637 : vector<16x1xf32> to vector<16x256xf32>
    %639 = arith.addf %636, %638 : vector<16x256xf32>
    %cst_331 = arith.constant 0.000000e+00 : f32
    %640 = vector.broadcast %cst_331 : f32 to vector<16x256xf32>
    %641 = arith.maximumf %639, %640 : vector<16x256xf32>
    %c0_332 = arith.constant 0 : index
    %c0_333 = arith.constant 0 : index
    %642 = vector.load %arg24[%c0_332, %c0_333] : memref<8x16xbf16, #tpu.memory_space<vmem>>, vector<8x16xbf16>
    %643 = arith.truncf %641 : vector<16x256xf32> to vector<16x256xbf16>
    %cst_334 = arith.constant dense<0.000000e+00> : vector<8x256xf32>
    %644 = tpu.matmul %642, %643, %cst_334 {dimension_numbers = #tpu.dot_dimension_numbers<[1], [0], [0], [1], [0, 0, 1, 1], [], []>} : vector<8x16xbf16>, vector<16x256xbf16>, vector<8x256xf32> -> vector<8x256xf32>
    %c0_335 = arith.constant 0 : index
    %c0_336 = arith.constant 0 : index
    %645 = vector.load %arg25[%c0_335, %c0_336] : memref<8x1xf32, #tpu.memory_space<vmem>>, vector<8x1xf32>
    %646 = vector.broadcast %645 : vector<8x1xf32> to vector<8x256xf32>
    %647 = arith.addf %644, %646 : vector<8x256xf32>
    %648 = arith.negf %647 : vector<8x256xf32>
    %649 = math.exp %648 : vector<8x256xf32>
    %cst_337 = arith.constant 1.000000e+00 : f32
    %650 = vector.broadcast %cst_337 : f32 to vector<8x256xf32>
    %651 = arith.addf %650, %649 : vector<8x256xf32>
    %652 = arith.divf %650, %651 : vector<8x256xf32>
    %c0_338 = arith.constant 0 : index
    %c0_339 = arith.constant 0 : index
    %653 = vector.load %arg26[%c0_338, %c0_339] : memref<8x8xbf16, #tpu.memory_space<vmem>>, vector<8x8xbf16>
    %654 = arith.mulf %606, %633 : vector<8x256xf32>
    %655 = arith.truncf %654 : vector<8x256xf32> to vector<8x256xbf16>
    %cst_340 = arith.constant dense<0.000000e+00> : vector<8x256xf32>
    %656 = tpu.matmul %653, %655, %cst_340 {dimension_numbers = #tpu.dot_dimension_numbers<[1], [0], [0], [1], [0, 0, 1, 1], [], []>} : vector<8x8xbf16>, vector<8x256xbf16>, vector<8x256xf32> -> vector<8x256xf32>
    %c0_341 = arith.constant 0 : index
    %c0_342 = arith.constant 0 : index
    %657 = vector.load %arg27[%c0_341, %c0_342] : memref<8x8xbf16, #tpu.memory_space<vmem>>, vector<8x8xbf16>
    %658 = arith.mulf %606, %652 : vector<8x256xf32>
    %659 = arith.truncf %658 : vector<8x256xf32> to vector<8x256xbf16>
    %cst_343 = arith.constant dense<0.000000e+00> : vector<8x256xf32>
    %660 = tpu.matmul %657, %659, %cst_343 {dimension_numbers = #tpu.dot_dimension_numbers<[1], [0], [0], [1], [0, 0, 1, 1], [], []>} : vector<8x8xbf16>, vector<8x256xbf16>, vector<8x256xf32> -> vector<8x256xf32>
    %661 = arith.addf %656, %660 : vector<8x256xf32>
    %c0_344 = arith.constant 0 : index
    %c0_345 = arith.constant 0 : index
    %662 = vector.load %arg28[%c0_344, %c0_345] : memref<8x1xf32, #tpu.memory_space<vmem>>, vector<8x1xf32>
    %663 = vector.broadcast %662 : vector<8x1xf32> to vector<8x256xf32>
    %664 = arith.addf %661, %663 : vector<8x256xf32>
    %665 = arith.addf %502, %664 : vector<8x256xf32>
    %c0_346 = arith.constant 0 : index
    %c8_347 = arith.constant 8 : index
    %666 = vector.load %arg29[%c0_346, %c8_347] : memref<8x16xbf16, #tpu.memory_space<vmem>>, vector<8x8xbf16>
    %667 = arith.truncf %665 : vector<8x256xf32> to vector<8x256xbf16>
    %cst_348 = arith.constant dense<0.000000e+00> : vector<8x256xf32>
    %668 = tpu.matmul %666, %667, %cst_348 {dimension_numbers = #tpu.dot_dimension_numbers<[1], [0], [0], [1], [0, 0, 1, 1], [], []>} : vector<8x8xbf16>, vector<8x256xbf16>, vector<8x256xf32> -> vector<8x256xf32>
    %669 = arith.addf %506, %668 : vector<8x256xf32>
    %c0_349 = arith.constant 0 : index
    %c0_350 = arith.constant 0 : index
    %670 = vector.load %arg30[%c0_349, %c0_350] : memref<8x1xf32, #tpu.memory_space<vmem>>, vector<8x1xf32>
    %671 = vector.broadcast %670 : vector<8x1xf32> to vector<8x256xf32>
    %672 = arith.addf %669, %671 : vector<8x256xf32>
    %c0_351 = arith.constant 0 : index
    %c128_352 = arith.constant 128 : index
    %673 = vector.load %arg34[%c0_351, %c128_352] : memref<20x512xf32, #tpu.memory_space<vmem>>, vector<8x256xf32>
    tpu.vector_store %arg34[%c0_351, %c128_352], %672 {strides = array<i32>} : memref<20x512xf32, #tpu.memory_space<vmem>>, vector<8x256xf32>,
    %c0_353 = arith.constant 0 : index
    %c111_354 = arith.constant 111 : index
    %674 = vector.load %arg34[%c0_353, %c111_354] : memref<20x512xf32, #tpu.memory_space<vmem>>, vector<8x256xf32>
    %cst_355 = arith.constant 0.000000e+00 : f32
    %675 = vector.shape_cast %287 : vector<1x256xi1> to vector<1x256xi1>
    %676 = vector.broadcast %675 : vector<1x256xi1> to vector<8x256xi1>
    %677 = vector.broadcast %cst_355 : f32 to vector<8x256xf32>
    %678 = arith.select %676, %674, %677 : vector<8x256xi1>, vector<8x256xf32>
    %679 = arith.truncf %678 : vector<8x256xf32> to vector<8x256xbf16>
    %c0_356 = arith.constant 0 : index
    %c112_357 = arith.constant 112 : index
    %680 = vector.load %arg34[%c0_356, %c112_357] : memref<20x512xf32, #tpu.memory_space<vmem>>, vector<8x256xf32>
    %681 = arith.truncf %680 : vector<8x256xf32> to vector<8x256xbf16>
    %c0_358 = arith.constant 0 : index
    %c113_359 = arith.constant 113 : index
    %682 = vector.load %arg34[%c0_358, %c113_359] : memref<20x512xf32, #tpu.memory_space<vmem>>, vector<8x256xf32>
    %cst_360 = arith.constant 0.000000e+00 : f32
    %683 = vector.shape_cast %300 : vector<1x256xi1> to vector<1x256xi1>
    %684 = vector.broadcast %683 : vector<1x256xi1> to vector<8x256xi1>
    %685 = vector.broadcast %cst_360 : f32 to vector<8x256xf32>
    %686 = arith.select %684, %682, %685 : vector<8x256xi1>, vector<8x256xf32>
    %687 = arith.truncf %686 : vector<8x256xf32> to vector<8x256xbf16>
    %c0_361 = arith.constant 0 : index
    %c127_362 = arith.constant 127 : index
    %688 = vector.load %arg34[%c0_361, %c127_362] : memref<20x512xf32, #tpu.memory_space<vmem>>, vector<8x256xf32>
    %cst_363 = arith.constant 0.000000e+00 : f32
    %689 = vector.shape_cast %287 : vector<1x256xi1> to vector<1x256xi1>
    %690 = vector.broadcast %689 : vector<1x256xi1> to vector<8x256xi1>
    %691 = vector.broadcast %cst_363 : f32 to vector<8x256xf32>
    %692 = arith.select %690, %688, %691 : vector<8x256xi1>, vector<8x256xf32>
    %693 = arith.truncf %692 : vector<8x256xf32> to vector<8x256xbf16>
    %c0_364 = arith.constant 0 : index
    %c128_365 = arith.constant 128 : index
    %694 = vector.load %arg34[%c0_364, %c128_365] : memref<20x512xf32, #tpu.memory_space<vmem>>, vector<8x256xf32>
    %695 = arith.truncf %694 : vector<8x256xf32> to vector<8x256xbf16>
    %c0_366 = arith.constant 0 : index
    %c129_367 = arith.constant 129 : index
    %696 = vector.load %arg34[%c0_366, %c129_367] : memref<20x512xf32, #tpu.memory_space<vmem>>, vector<8x256xf32>
    %cst_368 = arith.constant 0.000000e+00 : f32
    %697 = vector.shape_cast %300 : vector<1x256xi1> to vector<1x256xi1>
    %698 = vector.broadcast %697 : vector<1x256xi1> to vector<8x256xi1>
    %699 = vector.broadcast %cst_368 : f32 to vector<8x256xf32>
    %700 = arith.select %698, %696, %699 : vector<8x256xi1>, vector<8x256xf32>
    %701 = arith.truncf %700 : vector<8x256xf32> to vector<8x256xbf16>
    %c0_369 = arith.constant 0 : index
    %c143_370 = arith.constant 143 : index
    %702 = vector.load %arg34[%c0_369, %c143_370] : memref<20x512xf32, #tpu.memory_space<vmem>>, vector<8x256xf32>
    %cst_371 = arith.constant 0.000000e+00 : f32
    %703 = vector.shape_cast %287 : vector<1x256xi1> to vector<1x256xi1>
    %704 = vector.broadcast %703 : vector<1x256xi1> to vector<8x256xi1>
    %705 = vector.broadcast %cst_371 : f32 to vector<8x256xf32>
    %706 = arith.select %704, %702, %705 : vector<8x256xi1>, vector<8x256xf32>
    %707 = arith.truncf %706 : vector<8x256xf32> to vector<8x256xbf16>
    %c0_372 = arith.constant 0 : index
    %c144_373 = arith.constant 144 : index
    %708 = vector.load %arg34[%c0_372, %c144_373] : memref<20x512xf32, #tpu.memory_space<vmem>>, vector<8x256xf32>
    %709 = arith.truncf %708 : vector<8x256xf32> to vector<8x256xbf16>
    %c0_374 = arith.constant 0 : index
    %c145_375 = arith.constant 145 : index
    %710 = vector.load %arg34[%c0_374, %c145_375] : memref<20x512xf32, #tpu.memory_space<vmem>>, vector<8x256xf32>
    %cst_376 = arith.constant 0.000000e+00 : f32
    %711 = vector.shape_cast %300 : vector<1x256xi1> to vector<1x256xi1>
    %712 = vector.broadcast %711 : vector<1x256xi1> to vector<8x256xi1>
    %713 = vector.broadcast %cst_376 : f32 to vector<8x256xf32>
    %714 = arith.select %712, %710, %713 : vector<8x256xi1>, vector<8x256xf32>
    %715 = arith.truncf %714 : vector<8x256xf32> to vector<8x256xbf16>
    %716 = tpu.concatenate %679, %681, %687, %693, %695, %701, %707, %709, %715 in 0 : vector<8x256xbf16>, vector<8x256xbf16>, vector<8x256xbf16>, vector<8x256xbf16>, vector<8x256xbf16>, vector<8x256xbf16>, vector<8x256xbf16>, vector<8x256xbf16>, vector<8x256xbf16> -> vector<72x256xbf16>
    %c0_377 = arith.constant 0 : index
    %c0_378 = arith.constant 0 : index
    %717 = vector.load %arg31[%c0_377, %c0_378] : memref<8x72xbf16, #tpu.memory_space<vmem>>, vector<8x72xbf16>
    %cst_379 = arith.constant dense<0.000000e+00> : vector<8x256xf32>
    %718 = tpu.matmul %717, %716, %cst_379 {dimension_numbers = #tpu.dot_dimension_numbers<[1], [0], [0], [1], [0, 0, 1, 1], [], []>} : vector<8x72xbf16>, vector<72x256xbf16>, vector<8x256xf32> -> vector<8x256xf32>
    %c0_380 = arith.constant 0 : index
    %c0_381 = arith.constant 0 : index
    %719 = vector.load %arg32[%c0_380, %c0_381] : memref<8x1xf32, #tpu.memory_space<vmem>>, vector<8x1xf32>
    %720 = vector.broadcast %719 : vector<8x1xf32> to vector<8x256xf32>
    %721 = arith.addf %718, %720 : vector<8x256xf32>
    %722 = arith.addf %721, %280 : vector<8x256xf32>
    %c0_382 = arith.constant 0 : index
    %c0_383 = arith.constant 0 : index
    %c0_384 = arith.constant 0 : index
    %723 = vector.load %arg33[%c0_382, %c0_383, %c0_384] : memref<1x8x256xf32, #tpu.memory_space<vmem>>, vector<1x8x256xf32>
    %724 = vector.shape_cast %723 : vector<1x8x256xf32> to vector<8x256xf32>
    %725 = vector.shape_cast %722 : vector<8x256xf32> to vector<1x8x256xf32>
    tpu.vector_store %arg33[%c0_382, %c0_383, %c0_384], %725 {strides = array<i32>} : memref<1x8x256xf32, #tpu.memory_space<vmem>>, vector<1x8x256xf32>,
    return
  }
  func.func @transform_0(%arg0: i32) -> (i32, i32, i32) {
    %c0_i32 = arith.constant 0 : i32
    %c0_i32_0 = arith.constant 0 : i32
    %c0_i32_1 = arith.constant 0 : i32
    return %arg0, %c0_i32, %c0_i32_0 : i32, i32, i32
  }
  func.func @transform_1(%arg0: i32) -> (i32, i32) {
    %c0_i32 = arith.constant 0 : i32
    %c0_i32_0 = arith.constant 0 : i32
    %c0_i32_1 = arith.constant 0 : i32
    return %c0_i32, %c0_i32_0 : i32, i32
  }
  func.func @transform_2(%arg0: i32) -> (i32, i32) {
    %c0_i32 = arith.constant 0 : i32
    %c0_i32_0 = arith.constant 0 : i32
    %c0_i32_1 = arith.constant 0 : i32
    return %c0_i32, %c0_i32_0 : i32, i32
  }
  func.func @transform_3(%arg0: i32) -> (i32, i32) {
    %c0_i32 = arith.constant 0 : i32
    %c0_i32_0 = arith.constant 0 : i32
    %c0_i32_1 = arith.constant 0 : i32
    return %c0_i32, %c0_i32_0 : i32, i32
  }
  func.func @transform_4(%arg0: i32) -> (i32, i32) {
    %c0_i32 = arith.constant 0 : i32
    %c0_i32_0 = arith.constant 0 : i32
    %c0_i32_1 = arith.constant 0 : i32
    return %c0_i32, %c0_i32_0 : i32, i32
  }
  func.func @transform_5(%arg0: i32) -> (i32, i32) {
    %c0_i32 = arith.constant 0 : i32
    %c0_i32_0 = arith.constant 0 : i32
    %c0_i32_1 = arith.constant 0 : i32
    return %c0_i32, %c0_i32_0 : i32, i32
  }
  func.func @transform_6(%arg0: i32) -> (i32, i32) {
    %c0_i32 = arith.constant 0 : i32
    %c0_i32_0 = arith.constant 0 : i32
    %c0_i32_1 = arith.constant 0 : i32
    return %c0_i32, %c0_i32_0 : i32, i32
  }
  func.func @transform_7(%arg0: i32) -> (i32, i32) {
    %c0_i32 = arith.constant 0 : i32
    %c0_i32_0 = arith.constant 0 : i32
    %c0_i32_1 = arith.constant 0 : i32
    return %c0_i32, %c0_i32_0 : i32, i32
  }
  func.func @transform_8(%arg0: i32) -> (i32, i32) {
    %c0_i32 = arith.constant 0 : i32
    %c0_i32_0 = arith.constant 0 : i32
    %c0_i32_1 = arith.constant 0 : i32
    return %c0_i32, %c0_i32_0 : i32, i32
  }
  func.func @transform_9(%arg0: i32) -> (i32, i32) {
    %c0_i32 = arith.constant 0 : i32
    %c0_i32_0 = arith.constant 0 : i32
    %c0_i32_1 = arith.constant 0 : i32
    return %c0_i32, %c0_i32_0 : i32, i32
  }
  func.func @transform_10(%arg0: i32) -> (i32, i32) {
    %c0_i32 = arith.constant 0 : i32
    %c0_i32_0 = arith.constant 0 : i32
    %c0_i32_1 = arith.constant 0 : i32
    return %c0_i32, %c0_i32_0 : i32, i32
  }
  func.func @transform_11(%arg0: i32) -> (i32, i32) {
    %c0_i32 = arith.constant 0 : i32
    %c0_i32_0 = arith.constant 0 : i32
    %c0_i32_1 = arith.constant 0 : i32
    return %c0_i32, %c0_i32_0 : i32, i32
  }
  func.func @transform_12(%arg0: i32) -> (i32, i32) {
    %c0_i32 = arith.constant 0 : i32
    %c0_i32_0 = arith.constant 0 : i32
    %c0_i32_1 = arith.constant 0 : i32
    return %c0_i32, %c0_i32_0 : i32, i32
  }
  func.func @transform_13(%arg0: i32) -> (i32, i32) {
    %c0_i32 = arith.constant 0 : i32
    %c0_i32_0 = arith.constant 0 : i32
    %c0_i32_1 = arith.constant 0 : i32
    return %c0_i32, %c0_i32_0 : i32, i32
  }
  func.func @transform_14(%arg0: i32) -> (i32, i32) {
    %c0_i32 = arith.constant 0 : i32
    %c0_i32_0 = arith.constant 0 : i32
    %c0_i32_1 = arith.constant 0 : i32
    return %c0_i32, %c0_i32_0 : i32, i32
  }
  func.func @transform_15(%arg0: i32) -> (i32, i32) {
    %c0_i32 = arith.constant 0 : i32
    %c0_i32_0 = arith.constant 0 : i32
    %c0_i32_1 = arith.constant 0 : i32
    return %c0_i32, %c0_i32_0 : i32, i32
  }
  func.func @transform_16(%arg0: i32) -> (i32, i32) {
    %c0_i32 = arith.constant 0 : i32
    %c0_i32_0 = arith.constant 0 : i32
    %c0_i32_1 = arith.constant 0 : i32
    return %c0_i32, %c0_i32_0 : i32, i32
  }
  func.func @transform_17(%arg0: i32) -> (i32, i32) {
    %c0_i32 = arith.constant 0 : i32
    %c0_i32_0 = arith.constant 0 : i32
    %c0_i32_1 = arith.constant 0 : i32
    return %c0_i32, %c0_i32_0 : i32, i32
  }
  func.func @transform_18(%arg0: i32) -> (i32, i32) {
    %c0_i32 = arith.constant 0 : i32
    %c0_i32_0 = arith.constant 0 : i32
    %c0_i32_1 = arith.constant 0 : i32
    return %c0_i32, %c0_i32_0 : i32, i32
  }
  func.func @transform_19(%arg0: i32) -> (i32, i32) {
    %c0_i32 = arith.constant 0 : i32
    %c0_i32_0 = arith.constant 0 : i32
    %c0_i32_1 = arith.constant 0 : i32
    return %c0_i32, %c0_i32_0 : i32, i32
  }
  func.func @transform_20(%arg0: i32) -> (i32, i32) {
    %c0_i32 = arith.constant 0 : i32
    %c0_i32_0 = arith.constant 0 : i32
    %c0_i32_1 = arith.constant 0 : i32
    return %c0_i32, %c0_i32_0 : i32, i32
  }
  func.func @transform_21(%arg0: i32) -> (i32, i32) {
    %c0_i32 = arith.constant 0 : i32
    %c0_i32_0 = arith.constant 0 : i32
    %c0_i32_1 = arith.constant 0 : i32
    return %c0_i32, %c0_i32_0 : i32, i32
  }
  func.func @transform_22(%arg0: i32) -> (i32, i32) {
    %c0_i32 = arith.constant 0 : i32
    %c0_i32_0 = arith.constant 0 : i32
    %c0_i32_1 = arith.constant 0 : i32
    return %c0_i32, %c0_i32_0 : i32, i32
  }
  func.func @transform_23(%arg0: i32) -> (i32, i32) {
    %c0_i32 = arith.constant 0 : i32
    %c0_i32_0 = arith.constant 0 : i32
    %c0_i32_1 = arith.constant 0 : i32
    return %c0_i32, %c0_i32_0 : i32, i32
  }
  func.func @transform_24(%arg0: i32) -> (i32, i32) {
    %c0_i32 = arith.constant 0 : i32
    %c0_i32_0 = arith.constant 0 : i32
    %c0_i32_1 = arith.constant 0 : i32
    return %c0_i32, %c0_i32_0 : i32, i32
  }
  func.func @transform_25(%arg0: i32) -> (i32, i32) {
    %c0_i32 = arith.constant 0 : i32
    %c0_i32_0 = arith.constant 0 : i32
    %c0_i32_1 = arith.constant 0 : i32
    return %c0_i32, %c0_i32_0 : i32, i32
  }
  func.func @transform_26(%arg0: i32) -> (i32, i32) {
    %c0_i32 = arith.constant 0 : i32
    %c0_i32_0 = arith.constant 0 : i32
    %c0_i32_1 = arith.constant 0 : i32
    return %c0_i32, %c0_i32_0 : i32, i32
  }
  func.func @transform_27(%arg0: i32) -> (i32, i32) {
    %c0_i32 = arith.constant 0 : i32
    %c0_i32_0 = arith.constant 0 : i32
    %c0_i32_1 = arith.constant 0 : i32
    return %c0_i32, %c0_i32_0 : i32, i32
  }
  func.func @transform_28(%arg0: i32) -> (i32, i32) {
    %c0_i32 = arith.constant 0 : i32
    %c0_i32_0 = arith.constant 0 : i32
    %c0_i32_1 = arith.constant 0 : i32
    return %c0_i32, %c0_i32_0 : i32, i32
  }
  func.func @transform_29(%arg0: i32) -> (i32, i32) {
    %c0_i32 = arith.constant 0 : i32
    %c0_i32_0 = arith.constant 0 : i32
    %c0_i32_1 = arith.constant 0 : i32
    return %c0_i32, %c0_i32_0 : i32, i32
  }
  func.func @transform_30(%arg0: i32) -> (i32, i32) {
    %c0_i32 = arith.constant 0 : i32
    %c0_i32_0 = arith.constant 0 : i32
    %c0_i32_1 = arith.constant 0 : i32
    return %c0_i32, %c0_i32_0 : i32, i32
  }
  func.func @transform_31(%arg0: i32) -> (i32, i32) {
    %c0_i32 = arith.constant 0 : i32
    %c0_i32_0 = arith.constant 0 : i32
    %c0_i32_1 = arith.constant 0 : i32
    return %c0_i32, %c0_i32_0 : i32, i32
  }
  func.func @transform_32(%arg0: i32) -> (i32, i32, i32) {
    %c0_i32 = arith.constant 0 : i32
    %c0_i32_0 = arith.constant 0 : i32
    %c0_i32_1 = arith.constant 0 : i32
    return %arg0, %c0_i32, %c0_i32_0 : i32, i32, i32
  }
}

</mosaic_0001>

<llo_original>
// kernel: rdn_forward_pallas.1
$region0: #{rdn_forward_pallas.1}
  #allocation0 [shape = 'u32[]', space=smem, size = 0x4, offset = 0x4, fixed_abs, tag = 'smem constant byte address 0x4 - core index']
  #allocation1 [shape = 'u32[144,128]{1,0:T(1,128)}', space=vmem, size = 0x12000, scoped, tag = 'internal scratch']
  #allocation2 [shape = 'f32[20,512]{1,0:T(8,128)}', space=vmem, size = 0xc000, scoped, tag = 'scratch operand']
  %s0 = inlined_call_operand.smem [shape: u32[33], index: -1, kind: input, shape index: {}]
  %s1 = sld [smem:[%s0]]
  %s2 = scalar_lea.smem %s0, 1
  %s3 = sld [smem:[%s2]]
  %s4 = scalar_lea.smem %s0, 2
  %s5 = sld [smem:[%s4]]
  %s6 = scalar_lea.smem %s0, 3
  %s7 = sld [smem:[%s6]]
  %s8 = scalar_lea.smem %s0, 4
  %s9 = sld [smem:[%s8]]
  %s10 = scalar_lea.smem %s0, 5
  %s11 = sld [smem:[%s10]]
  %s12 = scalar_lea.smem %s0, 6
  %s13 = sld [smem:[%s12]]
  %s14 = scalar_lea.smem %s0, 7
  %s15 = sld [smem:[%s14]]
  %s16 = scalar_lea.smem %s0, 8
  %s17 = sld [smem:[%s16]]
  %s18 = scalar_lea.smem %s0, 9
  %s19 = sld [smem:[%s18]]
  %s20 = scalar_lea.smem %s0, 10
  %s21 = sld [smem:[%s20]]
  %s22 = scalar_lea.smem %s0, 11
  %s23 = sld [smem:[%s22]]
  %s24 = scalar_lea.smem %s0, 12
  %s25 = sld [smem:[%s24]]
  %s26 = scalar_lea.smem %s0, 13
  %s27 = sld [smem:[%s26]]
  %s28 = scalar_lea.smem %s0, 14
  %s29 = sld [smem:[%s28]]
  %s30 = scalar_lea.smem %s0, 15
  %s31 = sld [smem:[%s30]]
  %s32 = scalar_lea.smem %s0, 16
  %s33 = sld [smem:[%s32]]
  %s34 = scalar_lea.smem %s0, 17
  %s35 = sld [smem:[%s34]]
  %s36 = scalar_lea.smem %s0, 18
  %s37 = sld [smem:[%s36]]
  %s38 = scalar_lea.smem %s0, 19
  %s39 = sld [smem:[%s38]]
  %s40 = scalar_lea.smem %s0, 20
  %s41 = sld [smem:[%s40]]
  %s42 = scalar_lea.smem %s0, 21
  %s43 = sld [smem:[%s42]]
  %s44 = scalar_lea.smem %s0, 22
  %s45 = sld [smem:[%s44]]
  %s46 = scalar_lea.smem %s0, 23
  %s47 = sld [smem:[%s46]]
  %s48 = scalar_lea.smem %s0, 24
  %s49 = sld [smem:[%s48]]
  %s50 = scalar_lea.smem %s0, 25
  %s51 = sld [smem:[%s50]]
  %s52 = scalar_lea.smem %s0, 26
  %s53 = sld [smem:[%s52]]
  %s54 = scalar_lea.smem %s0, 27
  %s55 = sld [smem:[%s54]]
  %s56 = scalar_lea.smem %s0, 28
  %s57 = sld [smem:[%s56]]
  %s58 = scalar_lea.smem %s0, 29
  %s59 = sld [smem:[%s58]]
  %s60 = scalar_lea.smem %s0, 30
  %s61 = sld [smem:[%s60]]
  %s62 = scalar_lea.smem %s0, 31
  %s63 = sld [smem:[%s62]]
  %s64 = scalar_lea.smem %s0, 32
  %s65 = sld [smem:[%s64]]
  %s66 = sld [smem:[#allocation0]]
  $region161: #{rdn_forward_pallas.1} parent=0
    _
  %s68 = ssub.s32 1, %s66
  %s69 = scalar_select 0, %s68, %s66
  loop: start=0, step=1, limit=4
  $region2: #{rdn_forward_pallas.1} parent=0 // loop_pre_header
    _
  $region3: #{rdn_forward_pallas.1} parent=0 // loop_header
    %s71 = sphi 0, %s75
    %p72 = scmp.ge.s32.totalorder %s71, 4
    %s81 = sphi 0, %s83
    %s84 = sphi 0, %s81
    %s85 = sphi 0, %s84
    %s101 = sphi 0, %s85
    %s105 = sphi 0, %s105
    %s107 = sphi 0, %s105
    %s108 = sphi 0, %s107
    %s122 = sphi 0, %s108
    %s126 = sphi 0, %s126
    %s128 = sphi 0, %s126
    %s129 = sphi 0, %s128
    %s143 = sphi 0, %s129
    %s147 = sphi 0, %s147
    %s149 = sphi 0, %s147
    %s150 = sphi 0, %s149
    %s164 = sphi 0, %s150
    %s168 = sphi 0, %s168
    %s170 = sphi 0, %s168
    %s171 = sphi 0, %s170
    %s185 = sphi 0, %s171
    %s189 = sphi 0, %s189
    %s191 = sphi 0, %s189
    %s192 = sphi 0, %s191
    %s206 = sphi 0, %s192
    %s210 = sphi 0, %s210
    %s212 = sphi 0, %s210
    %s213 = sphi 0, %s212
    %s227 = sphi 0, %s213
    %s231 = sphi 0, %s231
    %s233 = sphi 0, %s231
    %s234 = sphi 0, %s233
    %s248 = sphi 0, %s234
    %s252 = sphi 0, %s252
    %s254 = sphi 0, %s252
    %s255 = sphi 0, %s254
    %s269 = sphi 0, %s255
    %s273 = sphi 0, %s273
    %s275 = sphi 0, %s273
    %s276 = sphi 0, %s275
    %s290 = sphi 0, %s276
    %s294 = sphi 0, %s294
    %s296 = sphi 0, %s294
    %s297 = sphi 0, %s296
    %s311 = sphi 0, %s297
    %s315 = sphi 0, %s315
    %s317 = sphi 0, %s315
    %s318 = sphi 0, %s317
    %s332 = sphi 0, %s318
    %s336 = sphi 0, %s336
    %s338 = sphi 0, %s336
    %s339 = sphi 0, %s338
    %s353 = sphi 0, %s339
    %s357 = sphi 0, %s357
    %s359 = sphi 0, %s357
    %s360 = sphi 0, %s359
    %s374 = sphi 0, %s360
    %s378 = sphi 0, %s378
    %s380 = sphi 0, %s378
    %s381 = sphi 0, %s380
    %s395 = sphi 0, %s381
    %s399 = sphi 0, %s399
    %s401 = sphi 0, %s399
    %s402 = sphi 0, %s401
    %s416 = sphi 0, %s402
    %s420 = sphi 0, %s420
    %s422 = sphi 0, %s420
    %s423 = sphi 0, %s422
    %s437 = sphi 0, %s423
    %s441 = sphi 0, %s441
    %s443 = sphi 0, %s441
    %s444 = sphi 0, %s443
    %s458 = sphi 0, %s444
    %s462 = sphi 0, %s462
    %s464 = sphi 0, %s462
    %s465 = sphi 0, %s464
    %s479 = sphi 0, %s465
    %s483 = sphi 0, %s483
    %s485 = sphi 0, %s483
    %s486 = sphi 0, %s485
    %s500 = sphi 0, %s486
    %s504 = sphi 0, %s504
    %s506 = sphi 0, %s504
    %s507 = sphi 0, %s506
    %s521 = sphi 0, %s507
    %s525 = sphi 0, %s525
    %s527 = sphi 0, %s525
    %s528 = sphi 0, %s527
    %s542 = sphi 0, %s528
    %s546 = sphi 0, %s546
    %s548 = sphi 0, %s546
    %s549 = sphi 0, %s548
    %s563 = sphi 0, %s549
    %s567 = sphi 0, %s567
    %s569 = sphi 0, %s567
    %s570 = sphi 0, %s569
    %s584 = sphi 0, %s570
    %s588 = sphi 0, %s588
    %s590 = sphi 0, %s588
    %s591 = sphi 0, %s590
    %s605 = sphi 0, %s591
    %s609 = sphi 0, %s609
    %s611 = sphi 0, %s609
    %s612 = sphi 0, %s611
    %s626 = sphi 0, %s612
    %s630 = sphi 0, %s630
    %s632 = sphi 0, %s630
    %s633 = sphi 0, %s632
    %s647 = sphi 0, %s633
    %s651 = sphi 0, %s651
    %s653 = sphi 0, %s651
    %s654 = sphi 0, %s653
    %s668 = sphi 0, %s654
    %s672 = sphi 0, %s672
    %s674 = sphi 0, %s672
    %s675 = sphi 0, %s674
    %s689 = sphi 0, %s675
    %s693 = sphi 0, %s693
    %s695 = sphi 0, %s693
    %s696 = sphi 0, %s695
    %s710 = sphi 0, %s696
    %s714 = sphi 0, %s714
    %s716 = sphi 0, %s714
    %s717 = sphi 0, %s716
    %s731 = sphi 0, %s717
    %s735 = sphi 0, %s735
    %s737 = sphi 0, %s735
    %s738 = sphi 0, %s737
    %s752 = sphi 0, %s738
    %s758 = sphi 0, %s760
    %s761 = sphi 0, %s758
    %s762 = sphi 0, %s761
    %s778 = sphi 0, %s762
  $region4: #{rdn_forward_pallas.1} parent=0 // loop_header_branch
    %74 = sbr.rel (%p72) target = $region8
  $region5: #{rdn_forward_pallas.1} parent=0 // loop_body
    %s76 = ssub.s32 %s71, 1
    %s77 = ssub.s32 %s71, 2
    %s78 = sadd.s32 %s71, 1
    %s79 = ssub.s32 %s71, %s78
    %p80 = scmp.eq.s32.totalorder %s79, 0
    %s82 = sadd.s32 %s81, 1
    %s83 = scalar_select %p80, %s81, %s82
    %p86 = pneg %p80
    %p87 = scmp.eq.s32.totalorder %s71, 1
    %p88 = por %p86, %p87
    %p89 = scmp.ne.s32.totalorder %s81, %s84
    %p90 = scmp.eq.s32.totalorder %s71, 0
    %p91 = por %p89, %p90
    %p92 = scmp.ne.s32.totalorder %s81, %s84
    %p93 = scmp.eq.s32.totalorder %s76, 1
    %p94 = por %p92, %p93
    %p95 = scmp.ne.s32.totalorder %s84, %s85
    %p96 = scmp.eq.s32.totalorder %s76, 0
    %p97 = por %p95, %p96
    %p98 = scmp.ne.s32.totalorder %s84, %s85
    %p99 = scmp.eq.s32.totalorder %s77, 1
    %p100 = por %p98, %p99
    %p102 = scmp.ne.s32.totalorder %s85, %s101
    %p103 = scmp.eq.s32.totalorder %s77, 0
    %p104 = por %p102, %p103
    %s106 = sadd.s32 %s105, 1
    %p109 = scmp.eq.s32.totalorder %s71, 1
    %p110 = scmp.ne.s32.totalorder %s105, %s107
    %p111 = scmp.eq.s32.totalorder %s71, 0
    %p112 = por %p110, %p111
    %p113 = scmp.ne.s32.totalorder %s105, %s107
    %p114 = scmp.eq.s32.totalorder %s76, 1
    %p115 = por %p113, %p114
    %p116 = scmp.ne.s32.totalorder %s107, %s108
    %p117 = scmp.eq.s32.totalorder %s76, 0
    %p118 = por %p116, %p117
    %p119 = scmp.ne.s32.totalorder %s107, %s108
    %p120 = scmp.eq.s32.totalorder %s77, 1
    %p121 = por %p119, %p120
    %p123 = scmp.ne.s32.totalorder %s108, %s122
    %p124 = scmp.eq.s32.totalorder %s77, 0
    %p125 = por %p123, %p124
    %s127 = sadd.s32 %s126, 1
    %p130 = scmp.eq.s32.totalorder %s71, 1
    %p131 = scmp.ne.s32.totalorder %s126, %s128
    %p132 = scmp.eq.s32.totalorder %s71, 0
    %p133 = por %p131, %p132
    %p134 = scmp.ne.s32.totalorder %s126, %s128
    %p135 = scmp.eq.s32.totalorder %s76, 1
    %p136 = por %p134, %p135
    %p137 = scmp.ne.s32.totalorder %s128, %s129
    %p138 = scmp.eq.s32.totalorder %s76, 0
    %p139 = por %p137, %p138
    %p140 = scmp.ne.s32.totalorder %s128, %s129
    %p141 = scmp.eq.s32.totalorder %s77, 1
    %p142 = por %p140, %p141
    %p144 = scmp.ne.s32.totalorder %s129, %s143
    %p145 = scmp.eq.s32.totalorder %s77, 0
    %p146 = por %p144, %p145
    %s148 = sadd.s32 %s147, 1
    %p151 = scmp.eq.s32.totalorder %s71, 1
    %p152 = scmp.ne.s32.totalorder %s147, %s149
    %p153 = scmp.eq.s32.totalorder %s71, 0
    %p154 = por %p152, %p153
    %p155 = scmp.ne.s32.totalorder %s147, %s149
    %p156 = scmp.eq.s32.totalorder %s76, 1
    %p157 = por %p155, %p156
    %p158 = scmp.ne.s32.totalorder %s149, %s150
    %p159 = scmp.eq.s32.totalorder %s76, 0
    %p160 = por %p158, %p159
    %p161 = scmp.ne.s32.totalorder %s149, %s150
    %p162 = scmp.eq.s32.totalorder %s77, 1
    %p163 = por %p161, %p162
    %p165 = scmp.ne.s32.totalorder %s150, %s164
    %p166 = scmp.eq.s32.totalorder %s77, 0
    %p167 = por %p165, %p166
    %s169 = sadd.s32 %s168, 1
    %p172 = scmp.eq.s32.totalorder %s71, 1
    %p173 = scmp.ne.s32.totalorder %s168, %s170
    %p174 = scmp.eq.s32.totalorder %s71, 0
    %p175 = por %p173, %p174
    %p176 = scmp.ne.s32.totalorder %s168, %s170
    %p177 = scmp.eq.s32.totalorder %s76, 1
    %p178 = por %p176, %p177
    %p179 = scmp.ne.s32.totalorder %s170, %s171
    %p180 = scmp.eq.s32.totalorder %s76, 0
    %p181 = por %p179, %p180
    %p182 = scmp.ne.s32.totalorder %s170, %s171
    %p183 = scmp.eq.s32.totalorder %s77, 1
    %p184 = por %p182, %p183
    %p186 = scmp.ne.s32.totalorder %s171, %s185
    %p187 = scmp.eq.s32.totalorder %s77, 0
    %p188 = por %p186, %p187
    %s190 = sadd.s32 %s189, 1
    %p193 = scmp.eq.s32.totalorder %s71, 1
    %p194 = scmp.ne.s32.totalorder %s189, %s191
    %p195 = scmp.eq.s32.totalorder %s71, 0
    %p196 = por %p194, %p195
    %p197 = scmp.ne.s32.totalorder %s189, %s191
    %p198 = scmp.eq.s32.totalorder %s76, 1
    %p199 = por %p197, %p198
    %p200 = scmp.ne.s32.totalorder %s191, %s192
    %p201 = scmp.eq.s32.totalorder %s76, 0
    %p202 = por %p200, %p201
    %p203 = scmp.ne.s32.totalorder %s191, %s192
    %p204 = scmp.eq.s32.totalorder %s77, 1
    %p205 = por %p203, %p204
    %p207 = scmp.ne.s32.totalorder %s192, %s206
    %p208 = scmp.eq.s32.totalorder %s77, 0
    %p209 = por %p207, %p208
    %s211 = sadd.s32 %s210, 1
    %p214 = scmp.eq.s32.totalorder %s71, 1
    %p215 = scmp.ne.s32.totalorder %s210, %s212
    %p216 = scmp.eq.s32.totalorder %s71, 0
    %p217 = por %p215, %p216
    %p218 = scmp.ne.s32.totalorder %s210, %s212
    %p219 = scmp.eq.s32.totalorder %s76, 1
    %p220 = por %p218, %p219
    %p221 = scmp.ne.s32.totalorder %s212, %s213
    %p222 = scmp.eq.s32.totalorder %s76, 0
    %p223 = por %p221, %p222
    %p224 = scmp.ne.s32.totalorder %s212, %s213
    %p225 = scmp.eq.s32.totalorder %s77, 1
    %p226 = por %p224, %p225
    %p228 = scmp.ne.s32.totalorder %s213, %s227
    %p229 = scmp.eq.s32.totalorder %s77, 0
    %p230 = por %p228, %p229
    %s232 = sadd.s32 %s231, 1
    %p235 = scmp.eq.s32.totalorder %s71, 1
    %p236 = scmp.ne.s32.totalorder %s231, %s233
    %p237 = scmp.eq.s32.totalorder %s71, 0
    %p238 = por %p236, %p237
    %p239 = scmp.ne.s32.totalorder %s231, %s233
    %p240 = scmp.eq.s32.totalorder %s76, 1
    %p241 = por %p239, %p240
    %p242 = scmp.ne.s32.totalorder %s233, %s234
    %p243 = scmp.eq.s32.totalorder %s76, 0
    %p244 = por %p242, %p243
    %p245 = scmp.ne.s32.totalorder %s233, %s234
    %p246 = scmp.eq.s32.totalorder %s77, 1
    %p247 = por %p245, %p246
    %p249 = scmp.ne.s32.totalorder %s234, %s248
    %p250 = scmp.eq.s32.totalorder %s77, 0
    %p251 = por %p249, %p250
    %s253 = sadd.s32 %s252, 1
    %p256 = scmp.eq.s32.totalorder %s71, 1
    %p257 = scmp.ne.s32.totalorder %s252, %s254
    %p258 = scmp.eq.s32.totalorder %s71, 0
    %p259 = por %p257, %p258
    %p260 = scmp.ne.s32.totalorder %s252, %s254
    %p261 = scmp.eq.s32.totalorder %s76, 1
    %p262 = por %p260, %p261
    %p263 = scmp.ne.s32.totalorder %s254, %s255
    %p264 = scmp.eq.s32.totalorder %s76, 0
    %p265 = por %p263, %p264
    %p266 = scmp.ne.s32.totalorder %s254, %s255
    %p267 = scmp.eq.s32.totalorder %s77, 1
    %p268 = por %p266, %p267
    %p270 = scmp.ne.s32.totalorder %s255, %s269
    %p271 = scmp.eq.s32.totalorder %s77, 0
    %p272 = por %p270, %p271
    %s274 = sadd.s32 %s273, 1
    %p277 = scmp.eq.s32.totalorder %s71, 1
    %p278 = scmp.ne.s32.totalorder %s273, %s275
    %p279 = scmp.eq.s32.totalorder %s71, 0
    %p280 = por %p278, %p279
    %p281 = scmp.ne.s32.totalorder %s273, %s275
    %p282 = scmp.eq.s32.totalorder %s76, 1
    %p283 = por %p281, %p282
    %p284 = scmp.ne.s32.totalorder %s275, %s276
    %p285 = scmp.eq.s32.totalorder %s76, 0
    %p286 = por %p284, %p285
    %p287 = scmp.ne.s32.totalorder %s275, %s276
    %p288 = scmp.eq.s32.totalorder %s77, 1
    %p289 = por %p287, %p288
    %p291 = scmp.ne.s32.totalorder %s276, %s290
    %p292 = scmp.eq.s32.totalorder %s77, 0
    %p293 = por %p291, %p292
    %s295 = sadd.s32 %s294, 1
    %p298 = scmp.eq.s32.totalorder %s71, 1
    %p299 = scmp.ne.s32.totalorder %s294, %s296
    %p300 = scmp.eq.s32.totalorder %s71, 0
    %p301 = por %p299, %p300
    %p302 = scmp.ne.s32.totalorder %s294, %s296
    %p303 = scmp.eq.s32.totalorder %s76, 1
    %p304 = por %p302, %p303
    %p305 = scmp.ne.s32.totalorder %s296, %s297
    %p306 = scmp.eq.s32.totalorder %s76, 0
    %p307 = por %p305, %p306
    %p308 = scmp.ne.s32.totalorder %s296, %s297
    %p309 = scmp.eq.s32.totalorder %s77, 1
    %p310 = por %p308, %p309
    %p312 = scmp.ne.s32.totalorder %s297, %s311
    %p313 = scmp.eq.s32.totalorder %s77, 0
    %p314 = por %p312, %p313
    %s316 = sadd.s32 %s315, 1
    %p319 = scmp.eq.s32.totalorder %s71, 1
    %p320 = scmp.ne.s32.totalorder %s315, %s317
    %p321 = scmp.eq.s32.totalorder %s71, 0
    %p322 = por %p320, %p321
    %p323 = scmp.ne.s32.totalorder %s315, %s317
    %p324 = scmp.eq.s32.totalorder %s76, 1
    %p325 = por %p323, %p324
    %p326 = scmp.ne.s32.totalorder %s317, %s318
    %p327 = scmp.eq.s32.totalorder %s76, 0
    %p328 = por %p326, %p327
    %p329 = scmp.ne.s32.totalorder %s317, %s318
    %p330 = scmp.eq.s32.totalorder %s77, 1
    %p331 = por %p329, %p330
    %p333 = scmp.ne.s32.totalorder %s318, %s332
    %p334 = scmp.eq.s32.totalorder %s77, 0
    %p335 = por %p333, %p334
    %s337 = sadd.s32 %s336, 1
    %p340 = scmp.eq.s32.totalorder %s71, 1
    %p341 = scmp.ne.s32.totalorder %s336, %s338
    %p342 = scmp.eq.s32.totalorder %s71, 0
    %p343 = por %p341, %p342
    %p344 = scmp.ne.s32.totalorder %s336, %s338
    %p345 = scmp.eq.s32.totalorder %s76, 1
    %p346 = por %p344, %p345
    %p347 = scmp.ne.s32.totalorder %s338, %s339
    %p348 = scmp.eq.s32.totalorder %s76, 0
    %p349 = por %p347, %p348
    %p350 = scmp.ne.s32.totalorder %s338, %s339
    %p351 = scmp.eq.s32.totalorder %s77, 1
    %p352 = por %p350, %p351
    %p354 = scmp.ne.s32.totalorder %s339, %s353
    %p355 = scmp.eq.s32.totalorder %s77, 0
    %p356 = por %p354, %p355
    %s358 = sadd.s32 %s357, 1
    %p361 = scmp.eq.s32.totalorder %s71, 1
    %p362 = scmp.ne.s32.totalorder %s357, %s359
    %p363 = scmp.eq.s32.totalorder %s71, 0
    %p364 = por %p362, %p363
    %p365 = scmp.ne.s32.totalorder %s357, %s359
    %p366 = scmp.eq.s32.totalorder %s76, 1
    %p367 = por %p365, %p366
    %p368 = scmp.ne.s32.totalorder %s359, %s360
    %p369 = scmp.eq.s32.totalorder %s76, 0
    %p370 = por %p368, %p369
    %p371 = scmp.ne.s32.totalorder %s359, %s360
    %p372 = scmp.eq.s32.totalorder %s77, 1
    %p373 = por %p371, %p372
    %p375 = scmp.ne.s32.totalorder %s360, %s374
    %p376 = scmp.eq.s32.totalorder %s77, 0
    %p377 = por %p375, %p376
    %s379 = sadd.s32 %s378, 1
    %p382 = scmp.eq.s32.totalorder %s71, 1
    %p383 = scmp.ne.s32.totalorder %s378, %s380
    %p384 = scmp.eq.s32.totalorder %s71, 0
    %p385 = por %p383, %p384
    %p386 = scmp.ne.s32.totalorder %s378, %s380
    %p387 = scmp.eq.s32.totalorder %s76, 1
    %p388 = por %p386, %p387
    %p389 = scmp.ne.s32.totalorder %s380, %s381
    %p390 = scmp.eq.s32.totalorder %s76, 0
    %p391 = por %p389, %p390
    %p392 = scmp.ne.s32.totalorder %s380, %s381
    %p393 = scmp.eq.s32.totalorder %s77, 1
    %p394 = por %p392, %p393
    %p396 = scmp.ne.s32.totalorder %s381, %s395
    %p397 = scmp.eq.s32.totalorder %s77, 0
    %p398 = por %p396, %p397
    %s400 = sadd.s32 %s399, 1
    %p403 = scmp.eq.s32.totalorder %s71, 1
    %p404 = scmp.ne.s32.totalorder %s399, %s401
    %p405 = scmp.eq.s32.totalorder %s71, 0
    %p406 = por %p404, %p405
    %p407 = scmp.ne.s32.totalorder %s399, %s401
    %p408 = scmp.eq.s32.totalorder %s76, 1
    %p409 = por %p407, %p408
    %p410 = scmp.ne.s32.totalorder %s401, %s402
    %p411 = scmp.eq.s32.totalorder %s76, 0
    %p412 = por %p410, %p411
    %p413 = scmp.ne.s32.totalorder %s401, %s402
    %p414 = scmp.eq.s32.totalorder %s77, 1
    %p415 = por %p413, %p414
    %p417 = scmp.ne.s32.totalorder %s402, %s416
    %p418 = scmp.eq.s32.totalorder %s77, 0
    %p419 = por %p417, %p418
    %s421 = sadd.s32 %s420, 1
    %p424 = scmp.eq.s32.totalorder %s71, 1
    %p425 = scmp.ne.s32.totalorder %s420, %s422
    %p426 = scmp.eq.s32.totalorder %s71, 0
    %p427 = por %p425, %p426
    %p428 = scmp.ne.s32.totalorder %s420, %s422
    %p429 = scmp.eq.s32.totalorder %s76, 1
    %p430 = por %p428, %p429
    %p431 = scmp.ne.s32.totalorder %s422, %s423
    %p432 = scmp.eq.s32.totalorder %s76, 0
    %p433 = por %p431, %p432
    %p434 = scmp.ne.s32.totalorder %s422, %s423
    %p435 = scmp.eq.s32.totalorder %s77, 1
    %p436 = por %p434, %p435
    %p438 = scmp.ne.s32.totalorder %s423, %s437
    %p439 = scmp.eq.s32.totalorder %s77, 0
    %p440 = por %p438, %p439
    %s442 = sadd.s32 %s441, 1
    %p445 = scmp.eq.s32.totalorder %s71, 1
    %p446 = scmp.ne.s32.totalorder %s441, %s443
    %p447 = scmp.eq.s32.totalorder %s71, 0
    %p448 = por %p446, %p447
    %p449 = scmp.ne.s32.totalorder %s441, %s443
    %p450 = scmp.eq.s32.totalorder %s76, 1
    %p451 = por %p449, %p450
    %p452 = scmp.ne.s32.totalorder %s443, %s444
    %p453 = scmp.eq.s32.totalorder %s76, 0
    %p454 = por %p452, %p453
    %p455 = scmp.ne.s32.totalorder %s443, %s444
    %p456 = scmp.eq.s32.totalorder %s77, 1
    %p457 = por %p455, %p456
    %p459 = scmp.ne.s32.totalorder %s444, %s458
    %p460 = scmp.eq.s32.totalorder %s77, 0
    %p461 = por %p459, %p460
    %s463 = sadd.s32 %s462, 1
    %p466 = scmp.eq.s32.totalorder %s71, 1
    %p467 = scmp.ne.s32.totalorder %s462, %s464
    %p468 = scmp.eq.s32.totalorder %s71, 0
    %p469 = por %p467, %p468
    %p470 = scmp.ne.s32.totalorder %s462, %s464
    %p471 = scmp.eq.s32.totalorder %s76, 1
    %p472 = por %p470, %p471
    %p473 = scmp.ne.s32.totalorder %s464, %s465
    %p474 = scmp.eq.s32.totalorder %s76, 0
    %p475 = por %p473, %p474
    %p476 = scmp.ne.s32.totalorder %s464, %s465
    %p477 = scmp.eq.s32.totalorder %s77, 1
    %p478 = por %p476, %p477
    %p480 = scmp.ne.s32.totalorder %s465, %s479
    %p481 = scmp.eq.s32.totalorder %s77, 0
    %p482 = por %p480, %p481
    %s484 = sadd.s32 %s483, 1
    %p487 = scmp.eq.s32.totalorder %s71, 1
    %p488 = scmp.ne.s32.totalorder %s483, %s485
    %p489 = scmp.eq.s32.totalorder %s71, 0
    %p490 = por %p488, %p489
    %p491 = scmp.ne.s32.totalorder %s483, %s485
    %p492 = scmp.eq.s32.totalorder %s76, 1
    %p493 = por %p491, %p492
    %p494 = scmp.ne.s32.totalorder %s485, %s486
    %p495 = scmp.eq.s32.totalorder %s76, 0
    %p496 = por %p494, %p495
    %p497 = scmp.ne.s32.totalorder %s485, %s486
    %p498 = scmp.eq.s32.totalorder %s77, 1
    %p499 = por %p497, %p498
    %p501 = scmp.ne.s32.totalorder %s486, %s500
    %p502 = scmp.eq.s32.totalorder %s77, 0
    %p503 = por %p501, %p502
    %s505 = sadd.s32 %s504, 1
    %p508 = scmp.eq.s32.totalorder %s71, 1
    %p509 = scmp.ne.s32.totalorder %s504, %s506
    %p510 = scmp.eq.s32.totalorder %s71, 0
    %p511 = por %p509, %p510
    %p512 = scmp.ne.s32.totalorder %s504, %s506
    %p513 = scmp.eq.s32.totalorder %s76, 1
    %p514 = por %p512, %p513
    %p515 = scmp.ne.s32.totalorder %s506, %s507
    %p516 = scmp.eq.s32.totalorder %s76, 0
    %p517 = por %p515, %p516
    %p518 = scmp.ne.s32.totalorder %s506, %s507
    %p519 = scmp.eq.s32.totalorder %s77, 1
    %p520 = por %p518, %p519
    %p522 = scmp.ne.s32.totalorder %s507, %s521
    %p523 = scmp.eq.s32.totalorder %s77, 0
    %p524 = por %p522, %p523
    %s526 = sadd.s32 %s525, 1
    %p529 = scmp.eq.s32.totalorder %s71, 1
    %p530 = scmp.ne.s32.totalorder %s525, %s527
    %p531 = scmp.eq.s32.totalorder %s71, 0
    %p532 = por %p530, %p531
    %p533 = scmp.ne.s32.totalorder %s525, %s527
    %p534 = scmp.eq.s32.totalorder %s76, 1
    %p535 = por %p533, %p534
    %p536 = scmp.ne.s32.totalorder %s527, %s528
    %p537 = scmp.eq.s32.totalorder %s76, 0
    %p538 = por %p536, %p537
    %p539 = scmp.ne.s32.totalorder %s527, %s528
    %p540 = scmp.eq.s32.totalorder %s77, 1
    %p541 = por %p539, %p540
    %p543 = scmp.ne.s32.totalorder %s528, %s542
    %p544 = scmp.eq.s32.totalorder %s77, 0
    %p545 = por %p543, %p544
    %s547 = sadd.s32 %s546, 1
    %p550 = scmp.eq.s32.totalorder %s71, 1
    %p551 = scmp.ne.s32.totalorder %s546, %s548
    %p552 = scmp.eq.s32.totalorder %s71, 0
    %p553 = por %p551, %p552
    %p554 = scmp.ne.s32.totalorder %s546, %s548
    %p555 = scmp.eq.s32.totalorder %s76, 1
    %p556 = por %p554, %p555
    %p557 = scmp.ne.s32.totalorder %s548, %s549
    %p558 = scmp.eq.s32.totalorder %s76, 0
    %p559 = por %p557, %p558
    %p560 = scmp.ne.s32.totalorder %s548, %s549
    %p561 = scmp.eq.s32.totalorder %s77, 1
    %p562 = por %p560, %p561
    %p564 = scmp.ne.s32.totalorder %s549, %s563
    %p565 = scmp.eq.s32.totalorder %s77, 0
    %p566 = por %p564, %p565
    %s568 = sadd.s32 %s567, 1
    %p571 = scmp.eq.s32.totalorder %s71, 1
    %p572 = scmp.ne.s32.totalorder %s567, %s569
    %p573 = scmp.eq.s32.totalorder %s71, 0
    %p574 = por %p572, %p573
    %p575 = scmp.ne.s32.totalorder %s567, %s569
    %p576 = scmp.eq.s32.totalorder %s76, 1
    %p577 = por %p575, %p576
    %p578 = scmp.ne.s32.totalorder %s569, %s570
    %p579 = scmp.eq.s32.totalorder %s76, 0
    %p580 = por %p578, %p579
    %p581 = scmp.ne.s32.totalorder %s569, %s570
    %p582 = scmp.eq.s32.totalorder %s77, 1
    %p583 = por %p581, %p582
    %p585 = scmp.ne.s32.totalorder %s570, %s584
    %p586 = scmp.eq.s32.totalorder %s77, 0
    %p587 = por %p585, %p586
    %s589 = sadd.s32 %s588, 1
    %p592 = scmp.eq.s32.totalorder %s71, 1
    %p593 = scmp.ne.s32.totalorder %s588, %s590
    %p594 = scmp.eq.s32.totalorder %s71, 0
    %p595 = por %p593, %p594
    %p596 = scmp.ne.s32.totalorder %s588, %s590
    %p597 = scmp.eq.s32.totalorder %s76, 1
    %p598 = por %p596, %p597
    %p599 = scmp.ne.s32.totalorder %s590, %s591
    %p600 = scmp.eq.s32.totalorder %s76, 0
    %p601 = por %p599, %p600
    %p602 = scmp.ne.s32.totalorder %s590, %s591
    %p603 = scmp.eq.s32.totalorder %s77, 1
    %p604 = por %p602, %p603
    %p606 = scmp.ne.s32.totalorder %s591, %s605
    %p607 = scmp.eq.s32.totalorder %s77, 0
    %p608 = por %p606, %p607
    %s610 = sadd.s32 %s609, 1
    %p613 = scmp.eq.s32.totalorder %s71, 1
    %p614 = scmp.ne.s32.totalorder %s609, %s611
    %p615 = scmp.eq.s32.totalorder %s71, 0
    %p616 = por %p614, %p615
    %p617 = scmp.ne.s32.totalorder %s609, %s611
    %p618 = scmp.eq.s32.totalorder %s76, 1
    %p619 = por %p617, %p618
    %p620 = scmp.ne.s32.totalorder %s611, %s612
    %p621 = scmp.eq.s32.totalorder %s76, 0
    %p622 = por %p620, %p621
    %p623 = scmp.ne.s32.totalorder %s611, %s612
    %p624 = scmp.eq.s32.totalorder %s77, 1
    %p625 = por %p623, %p624
    %p627 = scmp.ne.s32.totalorder %s612, %s626
    %p628 = scmp.eq.s32.totalorder %s77, 0
    %p629 = por %p627, %p628
    %s631 = sadd.s32 %s630, 1
    %p634 = scmp.eq.s32.totalorder %s71, 1
    %p635 = scmp.ne.s32.totalorder %s630, %s632
    %p636 = scmp.eq.s32.totalorder %s71, 0
    %p637 = por %p635, %p636
    %p638 = scmp.ne.s32.totalorder %s630, %s632
    %p639 = scmp.eq.s32.totalorder %s76, 1
    %p640 = por %p638, %p639
    %p641 = scmp.ne.s32.totalorder %s632, %s633
    %p642 = scmp.eq.s32.totalorder %s76, 0
    %p643 = por %p641, %p642
    %p644 = scmp.ne.s32.totalorder %s632, %s633
    %p645 = scmp.eq.s32.totalorder %s77, 1
    %p646 = por %p644, %p645
    %p648 = scmp.ne.s32.totalorder %s633, %s647
    %p649 = scmp.eq.s32.totalorder %s77, 0
    %p650 = por %p648, %p649
    %s652 = sadd.s32 %s651, 1
    %p655 = scmp.eq.s32.totalorder %s71, 1
    %p656 = scmp.ne.s32.totalorder %s651, %s653
    %p657 = scmp.eq.s32.totalorder %s71, 0
    %p658 = por %p656, %p657
    %p659 = scmp.ne.s32.totalorder %s651, %s653
    %p660 = scmp.eq.s32.totalorder %s76, 1
    %p661 = por %p659, %p660
    %p662 = scmp.ne.s32.totalorder %s653, %s654
    %p663 = scmp.eq.s32.totalorder %s76, 0
    %p664 = por %p662, %p663
    %p665 = scmp.ne.s32.totalorder %s653, %s654
    %p666 = scmp.eq.s32.totalorder %s77, 1
    %p667 = por %p665, %p666
    %p669 = scmp.ne.s32.totalorder %s654, %s668
    %p670 = scmp.eq.s32.totalorder %s77, 0
    %p671 = por %p669, %p670
    %s673 = sadd.s32 %s672, 1
    %p676 = scmp.eq.s32.totalorder %s71, 1
    %p677 = scmp.ne.s32.totalorder %s672, %s674
    %p678 = scmp.eq.s32.totalorder %s71, 0
    %p679 = por %p677, %p678
    %p680 = scmp.ne.s32.totalorder %s672, %s674
    %p681 = scmp.eq.s32.totalorder %s76, 1
    %p682 = por %p680, %p681
    %p683 = scmp.ne.s32.totalorder %s674, %s675
    %p684 = scmp.eq.s32.totalorder %s76, 0
    %p685 = por %p683, %p684
    %p686 = scmp.ne.s32.totalorder %s674, %s675
    %p687 = scmp.eq.s32.totalorder %s77, 1
    %p688 = por %p686, %p687
    %p690 = scmp.ne.s32.totalorder %s675, %s689
    %p691 = scmp.eq.s32.totalorder %s77, 0
    %p692 = por %p690, %p691
    %s694 = sadd.s32 %s693, 1
    %p697 = scmp.eq.s32.totalorder %s71, 1
    %p698 = scmp.ne.s32.totalorder %s693, %s695
    %p699 = scmp.eq.s32.totalorder %s71, 0
    %p700 = por %p698, %p699
    %p701 = scmp.ne.s32.totalorder %s693, %s695
    %p702 = scmp.eq.s32.totalorder %s76, 1
    %p703 = por %p701, %p702
    %p704 = scmp.ne.s32.totalorder %s695, %s696
    %p705 = scmp.eq.s32.totalorder %s76, 0
    %p706 = por %p704, %p705
    %p707 = scmp.ne.s32.totalorder %s695, %s696
    %p708 = scmp.eq.s32.totalorder %s77, 1
    %p709 = por %p707, %p708
    %p711 = scmp.ne.s32.totalorder %s696, %s710
    %p712 = scmp.eq.s32.totalorder %s77, 0
    %p713 = por %p711, %p712
    %s715 = sadd.s32 %s714, 1
    %p718 = scmp.eq.s32.totalorder %s71, 1
    %p719 = scmp.ne.s32.totalorder %s714, %s716
    %p720 = scmp.eq.s32.totalorder %s71, 0
    %p721 = por %p719, %p720
    %p722 = scmp.ne.s32.totalorder %s714, %s716
    %p723 = scmp.eq.s32.totalorder %s76, 1
    %p724 = por %p722, %p723
    %p725 = scmp.ne.s32.totalorder %s716, %s717
    %p726 = scmp.eq.s32.totalorder %s76, 0
    %p727 = por %p725, %p726
    %p728 = scmp.ne.s32.totalorder %s716, %s717
    %p729 = scmp.eq.s32.totalorder %s77, 1
    %p730 = por %p728, %p729
    %p732 = scmp.ne.s32.totalorder %s717, %s731
    %p733 = scmp.eq.s32.totalorder %s77, 0
    %p734 = por %p732, %p733
    %s736 = sadd.s32 %s735, 1
    %p739 = scmp.eq.s32.totalorder %s71, 1
    %p740 = scmp.ne.s32.totalorder %s735, %s737
    %p741 = scmp.eq.s32.totalorder %s71, 0
    %p742 = por %p740, %p741
    %p743 = scmp.ne.s32.totalorder %s735, %s737
    %p744 = scmp.eq.s32.totalorder %s76, 1
    %p745 = por %p743, %p744
    %p746 = scmp.ne.s32.totalorder %s737, %s738
    %p747 = scmp.eq.s32.totalorder %s76, 0
    %p748 = por %p746, %p747
    %p749 = scmp.ne.s32.totalorder %s737, %s738
    %p750 = scmp.eq.s32.totalorder %s77, 1
    %p751 = por %p749, %p750
    %p753 = scmp.ne.s32.totalorder %s738, %s752
    %p754 = scmp.eq.s32.totalorder %s77, 0
    %p755 = por %p753, %p754
    %s756 = ssub.s32 %s71, %s78
    %p757 = scmp.eq.s32.totalorder %s756, 0
    %s759 = sadd.s32 %s758, 1
    %s760 = scalar_select %p757, %s758, %s759
    %p763 = pneg %p757
    %p764 = scmp.eq.s32.totalorder %s71, 1
    %p765 = por %p763, %p764
    %p766 = scmp.ne.s32.totalorder %s758, %s761
    %p767 = scmp.eq.s32.totalorder %s71, 0
    %p768 = por %p766, %p767
    %p769 = scmp.ne.s32.totalorder %s758, %s761
    %p770 = scmp.eq.s32.totalorder %s76, 1
    %p771 = por %p769, %p770
    %p772 = scmp.ne.s32.totalorder %s761, %s762
    %p773 = scmp.eq.s32.totalorder %s76, 0
    %p774 = por %p772, %p773
    %p775 = scmp.ne.s32.totalorder %s761, %s762
    %p776 = scmp.eq.s32.totalorder %s77, 1
    %p777 = por %p775, %p776
    %p779 = scmp.ne.s32.totalorder %s762, %s778
    %p780 = scmp.eq.s32.totalorder %s77, 0
    %p781 = por %p779, %p780
    %p782 = scmp.le.s32.totalorder 1, %s71
    %p783 = scmp.lt.s32.totalorder %s71, 3
    %p784 = pnand %p782, %p783
    %p785 = pneg %p784
    // Predicated region
    $region9: #{rdn_forward_pallas.1} parent=5 // pred_check
      _
    $region10: #{rdn_forward_pallas.1} parent=5 // pred_check_branch
      %787 = sbr.rel (%p784) target = $region12
    $region11: #{rdn_forward_pallas.1} parent=5 // pred_region
      %s788 = ssub.s32 %s71, 1
      // Predicated region
      $region13: #{rdn_forward_pallas.1} parent=11 // pred_check
        %p789 = pneg %p118
      $region14: #{rdn_forward_pallas.1} parent=11 // pred_check_branch
        %791 = sbr.rel (%p789) target = $region16
      $region15: #{rdn_forward_pallas.1} parent=11 // pred_region
        _
      $region16: #{rdn_forward_pallas.1} parent=11 // pred_fallthru
        _
      // Predicated region
      $region17: #{rdn_forward_pallas.1} parent=11 // pred_check
        %p792 = pneg %p139
      $region18: #{rdn_forward_pallas.1} parent=11 // pred_check_branch
        %794 = sbr.rel (%p792) target = $region20
      $region19: #{rdn_forward_pallas.1} parent=11 // pred_region
        _
      $region20: #{rdn_forward_pallas.1} parent=11 // pred_fallthru
        _
      // Predicated region
      $region21: #{rdn_forward_pallas.1} parent=11 // pred_check
        %p795 = pneg %p160
      $region22: #{rdn_forward_pallas.1} parent=11 // pred_check_branch
        %797 = sbr.rel (%p795) target = $region24
      $region23: #{rdn_forward_pallas.1} parent=11 // pred_region
        _
      $region24: #{rdn_forward_pallas.1} parent=11 // pred_fallthru
        _
      // Predicated region
      $region25: #{rdn_forward_pallas.1} parent=11 // pred_check
        %p798 = pneg %p181
      $region26: #{rdn_forward_pallas.1} parent=11 // pred_check_branch
        %800 = sbr.rel (%p798) target = $region28
      $region27: #{rdn_forward_pallas.1} parent=11 // pred_region
        _
      $region28: #{rdn_forward_pallas.1} parent=11 // pred_fallthru
        _
      // Predicated region
      $region29: #{rdn_forward_pallas.1} parent=11 // pred_check
        %p801 = pneg %p202
      $region30: #{rdn_forward_pallas.1} parent=11 // pred_check_branch
        %803 = sbr.rel (%p801) target = $region32
      $region31: #{rdn_forward_pallas.1} parent=11 // pred_region
        _
      $region32: #{rdn_forward_pallas.1} parent=11 // pred_fallthru
        _
      // Predicated region
      $region33: #{rdn_forward_pallas.1} parent=11 // pred_check
        %p804 = pneg %p223
      $region34: #{rdn_forward_pallas.1} parent=11 // pred_check_branch
        %806 = sbr.rel (%p804) target = $region36
      $region35: #{rdn_forward_pallas.1} parent=11 // pred_region
        _
      $region36: #{rdn_forward_pallas.1} parent=11 // pred_fallthru
        _
      // Predicated region
      $region37: #{rdn_forward_pallas.1} parent=11 // pred_check
        %p807 = pneg %p244
      $region38: #{rdn_forward_pallas.1} parent=11 // pred_check_branch
        %809 = sbr.rel (%p807) target = $region40
      $region39: #{rdn_forward_pallas.1} parent=11 // pred_region
        _
      $region40: #{rdn_forward_pallas.1} parent=11 // pred_fallthru
        _
      // Predicated region
      $region41: #{rdn_forward_pallas.1} parent=11 // pred_check
        %p810 = pneg %p265
      $region42: #{rdn_forward_pallas.1} parent=11 // pred_check_branch
        %812 = sbr.rel (%p810) target = $region44
      $region43: #{rdn_forward_pallas.1} parent=11 // pred_region
        _
      $region44: #{rdn_forward_pallas.1} parent=11 // pred_fallthru
        _
      // Predicated region
      $region45: #{rdn_forward_pallas.1} parent=11 // pred_check
        %p813 = pneg %p286
      $region46: #{rdn_forward_pallas.1} parent=11 // pred_check_branch
        %815 = sbr.rel (%p813) target = $region48
      $region47: #{rdn_forward_pallas.1} parent=11 // pred_region
        _
      $region48: #{rdn_forward_pallas.1} parent=11 // pred_fallthru
        _
      // Predicated region
      $region49: #{rdn_forward_pallas.1} parent=11 // pred_check
        %p816 = pneg %p307
      $region50: #{rdn_forward_pallas.1} parent=11 // pred_check_branch
        %818 = sbr.rel (%p816) target = $region52
      $region51: #{rdn_forward_pallas.1} parent=11 // pred_region
        _
      $region52: #{rdn_forward_pallas.1} parent=11 // pred_fallthru
        _
      // Predicated region
      $region53: #{rdn_forward_pallas.1} parent=11 // pred_check
        %p819 = pneg %p328
      $region54: #{rdn_forward_pallas.1} parent=11 // pred_check_branch
        %821 = sbr.rel (%p819) target = $region56
      $region55: #{rdn_forward_pallas.1} parent=11 // pred_region
        _
      $region56: #{rdn_forward_pallas.1} parent=11 // pred_fallthru
        _
      // Predicated region
      $region57: #{rdn_forward_pallas.1} parent=11 // pred_check
        %p822 = pneg %p349
      $region58: #{rdn_forward_pallas.1} parent=11 // pred_check_branch
        %824 = sbr.rel (%p822) target = $region60
      $region59: #{rdn_forward_pallas.1} parent=11 // pred_region
        _
      $region60: #{rdn_forward_pallas.1} parent=11 // pred_fallthru
        _
      // Predicated region
      $region61: #{rdn_forward_pallas.1} parent=11 // pred_check
        %p825 = pneg %p370
      $region62: #{rdn_forward_pallas.1} parent=11 // pred_check_branch
        %827 = sbr.rel (%p825) target = $region64
      $region63: #{rdn_forward_pallas.1} parent=11 // pred_region
        _
      $region64: #{rdn_forward_pallas.1} parent=11 // pred_fallthru
        _
      // Predicated region
      $region65: #{rdn_forward_pallas.1} parent=11 // pred_check
        %p828 = pneg %p391
      $region66: #{rdn_forward_pallas.1} parent=11 // pred_check_branch
        %830 = sbr.rel (%p828) target = $region68
      $region67: #{rdn_forward_pallas.1} parent=11 // pred_region
        _
      $region68: #{rdn_forward_pallas.1} parent=11 // pred_fallthru
        _
      // Predicated region
      $region69: #{rdn_forward_pallas.1} parent=11 // pred_check
        %p831 = pneg %p412
      $region70: #{rdn_forward_pallas.1} parent=11 // pred_check_branch
        %833 = sbr.rel (%p831) target = $region72
      $region71: #{rdn_forward_pallas.1} parent=11 // pred_region
        _
      $region72: #{rdn_forward_pallas.1} parent=11 // pred_fallthru
        _
      // Predicated region
      $region73: #{rdn_forward_pallas.1} parent=11 // pred_check
        %p834 = pneg %p433
      $region74: #{rdn_forward_pallas.1} parent=11 // pred_check_branch
        %836 = sbr.rel (%p834) target = $region76
      $region75: #{rdn_forward_pallas.1} parent=11 // pred_region
        _
      $region76: #{rdn_forward_pallas.1} parent=11 // pred_fallthru
        _
      // Predicated region
      $region77: #{rdn_forward_pallas.1} parent=11 // pred_check
        %p837 = pneg %p454
      $region78: #{rdn_forward_pallas.1} parent=11 // pred_check_branch
        %839 = sbr.rel (%p837) target = $region80
      $region79: #{rdn_forward_pallas.1} parent=11 // pred_region
        _
      $region80: #{rdn_forward_pallas.1} parent=11 // pred_fallthru
        _
      // Predicated region
      $region81: #{rdn_forward_pallas.1} parent=11 // pred_check
        %p840 = pneg %p475
      $region82: #{rdn_forward_pallas.1} parent=11 // pred_check_branch
        %842 = sbr.rel (%p840) target = $region84
      $region83: #{rdn_forward_pallas.1} parent=11 // pred_region
        _
      $region84: #{rdn_forward_pallas.1} parent=11 // pred_fallthru
        _
      // Predicated region
      $region85: #{rdn_forward_pallas.1} parent=11 // pred_check
        %p843 = pneg %p496
      $region86: #{rdn_forward_pallas.1} parent=11 // pred_check_branch
        %845 = sbr.rel (%p843) target = $region88
      $region87: #{rdn_forward_pallas.1} parent=11 // pred_region
        _
      $region88: #{rdn_forward_pallas.1} parent=11 // pred_fallthru
        _
      // Predicated region
      $region89: #{rdn_forward_pallas.1} parent=11 // pred_check
        %p846 = pneg %p517
      $region90: #{rdn_forward_pallas.1} parent=11 // pred_check_branch
        %848 = sbr.rel (%p846) target = $region92
      $region91: #{rdn_forward_pallas.1} parent=11 // pred_region
        _
      $region92: #{rdn_forward_pallas.1} parent=11 // pred_fallthru
        _
      // Predicated region
      $region93: #{rdn_forward_pallas.1} parent=11 // pred_check
        %p849 = pneg %p538
      $region94: #{rdn_forward_pallas.1} parent=11 // pred_check_branch
        %851 = sbr.rel (%p849) target = $region96
      $region95: #{rdn_forward_pallas.1} parent=11 // pred_region
        _
      $region96: #{rdn_forward_pallas.1} parent=11 // pred_fallthru
        _
      // Predicated region
      $region97: #{rdn_forward_pallas.1} parent=11 // pred_check
        %p852 = pneg %p559
      $region98: #{rdn_forward_pallas.1} parent=11 // pred_check_branch
        %854 = sbr.rel (%p852) target = $region100
      $region99: #{rdn_forward_pallas.1} parent=11 // pred_region
        _
      $region100: #{rdn_forward_pallas.1} parent=11 // pred_fallthru
        _
      // Predicated region
      $region101: #{rdn_forward_pallas.1} parent=11 // pred_check
        %p855 = pneg %p580
      $region102: #{rdn_forward_pallas.1} parent=11 // pred_check_branch
        %857 = sbr.rel (%p855) target = $region104
      $region103: #{rdn_forward_pallas.1} parent=11 // pred_region
        _
      $region104: #{rdn_forward_pallas.1} parent=11 // pred_fallthru
        _
      // Predicated region
      $region105: #{rdn_forward_pallas.1} parent=11 // pred_check
        %p858 = pneg %p601
      $region106: #{rdn_forward_pallas.1} parent=11 // pred_check_branch
        %860 = sbr.rel (%p858) target = $region108
      $region107: #{rdn_forward_pallas.1} parent=11 // pred_region
        _
      $region108: #{rdn_forward_pallas.1} parent=11 // pred_fallthru
        _
      // Predicated region
      $region109: #{rdn_forward_pallas.1} parent=11 // pred_check
        %p861 = pneg %p622
      $region110: #{rdn_forward_pallas.1} parent=11 // pred_check_branch
        %863 = sbr.rel (%p861) target = $region112
      $region111: #{rdn_forward_pallas.1} parent=11 // pred_region
        _
      $region112: #{rdn_forward_pallas.1} parent=11 // pred_fallthru
        _
      // Predicated region
      $region113: #{rdn_forward_pallas.1} parent=11 // pred_check
        %p864 = pneg %p643
      $region114: #{rdn_forward_pallas.1} parent=11 // pred_check_branch
        %866 = sbr.rel (%p864) target = $region116
      $region115: #{rdn_forward_pallas.1} parent=11 // pred_region
        _
      $region116: #{rdn_forward_pallas.1} parent=11 // pred_fallthru
        _
      // Predicated region
      $region117: #{rdn_forward_pallas.1} parent=11 // pred_check
        %p867 = pneg %p664
      $region118: #{rdn_forward_pallas.1} parent=11 // pred_check_branch
        %869 = sbr.rel (%p867) target = $region120
      $region119: #{rdn_forward_pallas.1} parent=11 // pred_region
        _
      $region120: #{rdn_forward_pallas.1} parent=11 // pred_fallthru
        _
      // Predicated region
      $region121: #{rdn_forward_pallas.1} parent=11 // pred_check
        %p870 = pneg %p685
      $region122: #{rdn_forward_pallas.1} parent=11 // pred_check_branch
        %872 = sbr.rel (%p870) target = $region124
      $region123: #{rdn_forward_pallas.1} parent=11 // pred_region
        _
      $region124: #{rdn_forward_pallas.1} parent=11 // pred_fallthru
        _
      // Predicated region
      $region125: #{rdn_forward_pallas.1} parent=11 // pred_check
        %p873 = pneg %p706
      $region126: #{rdn_forward_pallas.1} parent=11 // pred_check_branch
        %875 = sbr.rel (%p873) target = $region128
      $region127: #{rdn_forward_pallas.1} parent=11 // pred_region
        _
      $region128: #{rdn_forward_pallas.1} parent=11 // pred_fallthru
        _
      // Predicated region
      $region129: #{rdn_forward_pallas.1} parent=11 // pred_check
        %p876 = pneg %p727
      $region130: #{rdn_forward_pallas.1} parent=11 // pred_check_branch
        %878 = sbr.rel (%p876) target = $region132
      $region131: #{rdn_forward_pallas.1} parent=11 // pred_region
        _
      $region132: #{rdn_forward_pallas.1} parent=11 // pred_fallthru
        _
      // Predicated region
      $region133: #{rdn_forward_pallas.1} parent=11 // pred_check
        %p879 = pneg %p748
      $region134: #{rdn_forward_pallas.1} parent=11 // pred_check_branch
        %881 = sbr.rel (%p879) target = $region136
      $region135: #{rdn_forward_pallas.1} parent=11 // pred_region
        _
      $region136: #{rdn_forward_pallas.1} parent=11 // pred_fallthru
        _
    $region12: #{rdn_forward_pallas.1} parent=5 // pred_fallthru
      _
    %p882 = scmp.lt.s32.totalorder %s71, 2
    // Predicated region
    $region137: #{rdn_forward_pallas.1} parent=5 // pred_check
      %p883 = pneg %p882
    $region138: #{rdn_forward_pallas.1} parent=5 // pred_check_branch
      %885 = sbr.rel (%p883) target = $region140
    $region139: #{rdn_forward_pallas.1} parent=5 // pred_region
      // Predicated region
      $region141: #{rdn_forward_pallas.1} parent=139 // pred_check
        %p886 = pneg %p91
      $region142: #{rdn_forward_pallas.1} parent=139 // pred_check_branch
        %888 = sbr.rel (%p886) target = $region144
      $region143: #{rdn_forward_pallas.1} parent=139 // pred_region
        %p889 = scmp.lt.s32.totalorder %s71, 1
        %s890 = scalar_select %p889, %s71, 1
        %s891 = smul.addr %s890, 2
        %s892 = smul.addr %s891, 4
        %s893 = scalar_lea.vmem %s1, %s892
      $region144: #{rdn_forward_pallas.1} parent=139 // pred_fallthru
        _
    $region140: #{rdn_forward_pallas.1} parent=5 // pred_fallthru
      _
    %p894 = scmp.le.s32.totalorder 1, %s71
    %p895 = scmp.lt.s32.totalorder %s71, 3
    %p896 = pnand %p894, %p895
    %p897 = pneg %p896
    // Predicated region
    $region145: #{rdn_forward_pallas.1} parent=5 // pred_check
      _
    $region146: #{rdn_forward_pallas.1} parent=5 // pred_check_branch
      %899 = sbr.rel (%p896) target = $region148
    $region147: #{rdn_forward_pallas.1} parent=5 // pred_region
      %s900 = ssub.s32 %s71, 1
      %p901 = scmp.lt.s32.totalorder %s76, 1
      %s902 = scalar_select %p901, %s76, 1
      %s903 = smul.addr %s902, 2
      %s904 = smul.addr %s903, 4
      %s905 = scalar_lea.vmem %s1, %s904
      %p906 = pneg %p97
      %p907 = pneg %p94
      %p908 = pneg %p118
      %p909 = pneg %p115
      %p910 = pneg %p139
      %p911 = pneg %p136
      %p912 = pneg %p160
      %p913 = pneg %p157
      %p914 = pneg %p181
      %p915 = pneg %p178
      %p916 = pneg %p202
      %p917 = pneg %p199
      %p918 = pneg %p223
      %p919 = pneg %p220
      %p920 = pneg %p244
      %p921 = pneg %p241
      %p922 = pneg %p265
      %p923 = pneg %p262
      %p924 = pneg %p286
      %p925 = pneg %p283
      %p926 = pneg %p307
      %p927 = pneg %p304
      %p928 = pneg %p328
      %p929 = pneg %p325
      %p930 = pneg %p349
      %p931 = pneg %p346
      %p932 = pneg %p370
      %p933 = pneg %p367
      %p934 = pneg %p391
      %p935 = pneg %p388
      %p936 = pneg %p412
      %p937 = pneg %p409
      %p938 = pneg %p433
      %p939 = pneg %p430
      %p940 = pneg %p454
      %p941 = pneg %p451
      %p942 = pneg %p475
      %p943 = pneg %p472
      %p944 = pneg %p496
      %p945 = pneg %p493
      %p946 = pneg %p517
      %p947 = pneg %p514
      %p948 = pneg %p538
      %p949 = pneg %p535
      %p950 = pneg %p559
      %p951 = pneg %p556
      %p952 = pneg %p580
      %p953 = pneg %p577
      %p954 = pneg %p601
      %p955 = pneg %p598
      %p956 = pneg %p622
      %p957 = pneg %p619
      %p958 = pneg %p643
      %p959 = pneg %p640
      %p960 = pneg %p664
      %p961 = pneg %p661
      %p962 = pneg %p685
      %p963 = pneg %p682
      %p964 = pneg %p706
      %p965 = pneg %p703
      %p966 = pneg %p727
      %p967 = pneg %p724
      %p968 = pneg %p748
      %p969 = pneg %p745
      %p970 = pneg %p774
      %p971 = pneg %p771
      %p972 = scmp.lt.s32.totalorder %s76, 1
      %s973 = scalar_select %p972, %s76, 1
      %s974 = smul.addr %s973, 2
      %s975 = smul.addr %s974, 8
      %s976 = scalar_lea.vmem %s65, %s975
      %p977 = scmp.lt.s32.totalorder %s76, 1
      %s978 = scalar_select %p977, %s76, 1
      %s979 = smul.addr %s978, 2
      %s980 = smul.addr %s979, 4
      %s981 = scalar_lea.vmem %s1, %s980
      %p982 = scmp.lt.s32.totalorder %s76, 1
      %s983 = scalar_select %p982, %s76, 1
      %s984 = smul.addr %s983, 2
      %s985 = smul.addr %s984, 8
      %s986 = scalar_lea.vmem %s65, %s985
      %v988 = vlaneseq
      %v989 = vand.u32 %v988, 127
      %v990 = vadd.s32 %v989, 128
      %vm991 = vcmp.lt.s32.totalorder %v989, 0
      %v992 = vsub.s32 0, %v989
      %v993 = vsel %vm991, %v992, %v989
      %v994 = vshrl.u32 %v993, 4
      %v995 = vand.u32 %v993, 15
      %v996 = vsub.s32 0, %v995
      %v997 = vsel %vm991, %v996, %v995
      %vm998 = vcmp.lt.s32.totalorder %v990, 0
      %v999 = vsub.s32 0, %v990
      %v1000 = vsel %vm998, %v999, %v990
      %v1001 = vshrl.u32 %v1000, 4
      %v1002 = vand.u32 %v1000, 15
      %v1003 = vsub.s32 0, %v1002
      %v1004 = vsel %vm998, %v1003, %v1002
      %vm1005 = vcmp.ne.s32.totalorder %v997, 0
      %vm1006 = vcmp.ne.s32.totalorder %v1004, 0
      %vm1007 = vcmp.lt.s32.totalorder %v997, 0
      %vm1008 = vcmp.lt.s32.totalorder %v1004, 0
      %vm1009 = vmand %vm1007, %vm1005
      %vm1010 = vmand %vm1008, %vm1006
      %v1011 = vadd.s32 %v997, 16
      %v1012 = vadd.s32 %v1004, 16
      %v1013 = vsel %vm1009, %v1011, %v997
      %v1014 = vsel %vm1010, %v1012, %v1004
      %1015 = vst [vmem:[#allocation2] sm:$0xff] 0.0
      %1016 = vst [vmem:[#allocation2 + $0x20] sm:$0xff] 0.0
      %1017 = vst [vmem:[#allocation2 + $0x40] sm:$0xf] 0.0
      %1018 = vst [vmem:[#allocation2 + $0x18] sm:$0xff] 0.0
      %1019 = vst [vmem:[#allocation2 + $0x38] sm:$0xff] 0.0
      %1020 = vst [vmem:[#allocation2 + $0x58] sm:$0xf] 0.0
      %v1021 = vld [vmem:[%s981] sm:$0x77]
      %v1023 = vcombine.high %v1021, %v1021
      %1025 = vst [vmem:[#allocation2 + $0x8] sm:$0x7] %v1021
      %1026 = vst [vmem:[#allocation2 + $0x10] sm:$0x7] %v1023
      %v1027 = vld [vmem:[#allocation2] sm:$0x7]
      %v1028 = vld [vmem:[#allocation2 + $0x8] sm:$0x7]
      %v1029 = vld [vmem:[#allocation2 + $0x10] sm:$0x7]
      %vm1030 = vcmp.ge.s32.totalorder %v1013, 3
      %vm1031 = vcmp.ge.s32.totalorder %v1014, 3
      %vm1032 = vcmp.lt.s32.totalorder %v1013, 19
      %vm1033 = vcmp.lt.s32.totalorder %v1014, 19
      %vm1034 = vmand %vm1030, %vm1032
      %vm1035 = vmand %vm1031, %vm1033
      %v1036 = vsel %vm1034, 1, 0
      %v1037 = vsel %vm1035, 1, 0
      %vm1038 = vcmp.eq.s32.totalorder %v1036, 1
      %vm1039 = vcmp.eq.s32.totalorder %v1037, 1
      %1043 = vrot.lane.b32.xlu0 %v1027, 51
      %v1044 = vpop.permute.xlu0 %1043
      %1045 = vrot.lane.b32.xlu0 %v1028, 51
      %v1046 = vpop.permute.xlu0 %1045
      %1047 = vrot.lane.b32.xlu0 %v1029, 51
      %v1048 = vpop.permute.xlu0 %1047
      %vm1049 = vcmask 416768
      %v1050 = vsel %vm1049, %v1044, %v1046
      %v1051 = vsel %vm1049, %v1046, %v1048
      %v1054 = vsel %vm1038, %v1050, 0.0
      %v1055 = vsel %vm1039, %v1051, 0.0
      %vm1056 = vcmp.ge.s32.totalorder %v1013, 2
      %vm1057 = vcmp.ge.s32.totalorder %v1014, 2
      %vm1058 = vcmp.lt.s32.totalorder %v1013, 18
      %vm1059 = vcmp.lt.s32.totalorder %v1014, 18
      %vm1060 = vmand %vm1056, %vm1058
      %vm1061 = vmand %vm1057, %vm1059
      %v1062 = vsel %vm1060, 1, 0
      %v1063 = vsel %vm1061, 1, 0
      %vm1064 = vcmp.eq.s32.totalorder %v1062, 1
      %vm1065 = vcmp.eq.s32.totalorder %v1063, 1
      %1066 = vrot.lane.b32.xlu0 %v1027, 50
      %v1067 = vpop.permute.xlu0 %1066
      %1068 = vrot.lane.b32.xlu0 %v1028, 50
      %v1069 = vpop.permute.xlu0 %1068
      %1070 = vrot.lane.b32.xlu0 %v1029, 50
      %v1071 = vpop.permute.xlu0 %1070
      %vm1072 = vcmask 408576
      %v1073 = vsel %vm1072, %v1067, %v1069
      %v1074 = vsel %vm1072, %v1069, %v1071
      %v1077 = vsel %vm1064, %v1073, 0.0
      %v1078 = vsel %vm1065, %v1074, 0.0
      %vm1079 = vcmp.ge.s32.totalorder %v1013, 1
      %vm1080 = vcmp.ge.s32.totalorder %v1014, 1
      %vm1081 = vcmp.lt.s32.totalorder %v1013, 17
      %vm1082 = vcmp.lt.s32.totalorder %v1014, 17
      %vm1083 = vmand %vm1079, %vm1081
      %vm1084 = vmand %vm1080, %vm1082
      %v1085 = vsel %vm1083, 1, 0
      %v1086 = vsel %vm1084, 1, 0
      %vm1087 = vcmp.eq.s32.totalorder %v1085, 1
      %vm1088 = vcmp.eq.s32.totalorder %v1086, 1
      %1089 = vrot.lane.b32.xlu0 %v1027, 49
      %v1090 = vpop.permute.xlu0 %1089
      %1091 = vrot.lane.b32.xlu0 %v1028, 49
      %v1092 = vpop.permute.xlu0 %1091
      %1093 = vrot.lane.b32.xlu0 %v1029, 49
      %v1094 = vpop.permute.xlu0 %1093
      %vm1095 = vcmask 400384
      %v1096 = vsel %vm1095, %v1090, %v1092
      %v1097 = vsel %vm1095, %v1092, %v1094
      %v1100 = vsel %vm1087, %v1096, 0.0
      %v1101 = vsel %vm1088, %v1097, 0.0
      %vm1102 = vcmp.ge.s32.totalorder %v1013, 4294967295
      %vm1103 = vcmp.ge.s32.totalorder %v1014, 4294967295
      %vm1104 = vcmp.lt.s32.totalorder %v1013, 15
      %vm1105 = vcmp.lt.s32.totalorder %v1014, 15
      %vm1106 = vmand %vm1102, %vm1104
      %vm1107 = vmand %vm1103, %vm1105
      %v1108 = vsel %vm1106, 1, 0
      %v1109 = vsel %vm1107, 1, 0
      %vm1110 = vcmp.eq.s32.totalorder %v1108, 1
      %vm1111 = vcmp.eq.s32.totalorder %v1109, 1
      %1112 = vrot.lane.b32.xlu0 %v1027, 47
      %v1113 = vpop.permute.xlu0 %1112
      %1114 = vrot.lane.b32.xlu0 %v1028, 47
      %v1115 = vpop.permute.xlu0 %1114
      %1116 = vrot.lane.b32.xlu0 %v1029, 47
      %v1117 = vpop.permute.xlu0 %1116
      %vm1118 = vcmask 384000
      %v1119 = vsel %vm1118, %v1113, %v1115
      %v1120 = vsel %vm1118, %v1115, %v1117
      %v1123 = vsel %vm1110, %v1119, 0.0
      %v1124 = vsel %vm1111, %v1120, 0.0
      %vm1125 = vcmp.ge.s32.totalorder %v1013, 4294967294
      %vm1126 = vcmp.ge.s32.totalorder %v1014, 4294967294
      %vm1127 = vcmp.lt.s32.totalorder %v1013, 14
      %vm1128 = vcmp.lt.s32.totalorder %v1014, 14
      %vm1129 = vmand %vm1125, %vm1127
      %vm1130 = vmand %vm1126, %vm1128
      %v1131 = vsel %vm1129, 1, 0
      %v1132 = vsel %vm1130, 1, 0
      %vm1133 = vcmp.eq.s32.totalorder %v1131, 1
      %vm1134 = vcmp.eq.s32.totalorder %v1132, 1
      %1135 = vrot.lane.b32.xlu0 %v1027, 46
      %v1136 = vpop.permute.xlu0 %1135
      %1137 = vrot.lane.b32.xlu0 %v1028, 46
      %v1138 = vpop.permute.xlu0 %1137
      %1139 = vrot.lane.b32.xlu0 %v1029, 46
      %v1140 = vpop.permute.xlu0 %1139
      %vm1141 = vcmask 375808
      %v1142 = vsel %vm1141, %v1136, %v1138
      %v1143 = vsel %vm1141, %v1138, %v1140
      %v1146 = vsel %vm1133, %v1142, 0.0
      %v1147 = vsel %vm1134, %v1143, 0.0
      %vm1148 = vcmp.ge.s32.totalorder %v1013, 4294967293
      %vm1149 = vcmp.ge.s32.totalorder %v1014, 4294967293
      %vm1150 = vcmp.lt.s32.totalorder %v1013, 13
      %vm1151 = vcmp.lt.s32.totalorder %v1014, 13
      %vm1152 = vmand %vm1148, %vm1150
      %vm1153 = vmand %vm1149, %vm1151
      %v1154 = vsel %vm1152, 1, 0
      %v1155 = vsel %vm1153, 1, 0
      %vm1156 = vcmp.eq.s32.totalorder %v1154, 1
      %vm1157 = vcmp.eq.s32.totalorder %v1155, 1
      %1158 = vrot.lane.b32.xlu0 %v1027, 45
      %v1159 = vpop.permute.xlu0 %1158
      %1160 = vrot.lane.b32.xlu0 %v1028, 45
      %v1161 = vpop.permute.xlu0 %1160
      %1162 = vrot.lane.b32.xlu0 %v1029, 45
      %v1163 = vpop.permute.xlu0 %1162
      %vm1164 = vcmask 367616
      %v1165 = vsel %vm1164, %v1159, %v1161
      %v1166 = vsel %vm1164, %v1161, %v1163
      %v1169 = vsel %vm1156, %v1165, 0.0
      %v1170 = vsel %vm1157, %v1166, 0.0
      %1171 = vrot.lane.b32.xlu0 %v1027, 35
      %v1172 = vpop.permute.xlu0 %1171
      %1173 = vrot.lane.b32.xlu0 %v1028, 35
      %v1174 = vpop.permute.xlu0 %1173
      %1175 = vrot.lane.b32.xlu0 %v1029, 35
      %v1176 = vpop.permute.xlu0 %1175
      %vm1177 = vcmask 285696
      %v1178 = vsel %vm1177, %v1172, %v1174
      %v1179 = vsel %vm1177, %v1174, %v1176
      %v1182 = vsel %vm1038, %v1178, 0.0
      %v1183 = vsel %vm1039, %v1179, 0.0
      %1184 = vrot.lane.b32.xlu0 %v1027, 34
      %v1185 = vpop.permute.xlu0 %1184
      %1186 = vrot.lane.b32.xlu0 %v1028, 34
      %v1187 = vpop.permute.xlu0 %1186
      %1188 = vrot.lane.b32.xlu0 %v1029, 34
      %v1189 = vpop.permute.xlu0 %1188
      %vm1190 = vcmask 277504
      %v1191 = vsel %vm1190, %v1185, %v1187
      %v1192 = vsel %vm1190, %v1187, %v1189
      %v1195 = vsel %vm1064, %v1191, 0.0
      %v1196 = vsel %vm1065, %v1192, 0.0
      %1197 = vrot.lane.b32.xlu0 %v1027, 33
      %v1198 = vpop.permute.xlu0 %1197
      %1199 = vrot.lane.b32.xlu0 %v1028, 33
      %v1200 = vpop.permute.xlu0 %1199
      %1201 = vrot.lane.b32.xlu0 %v1029, 33
      %v1202 = vpop.permute.xlu0 %1201
      %vm1203 = vcmask 269312
      %v1204 = vsel %vm1203, %v1198, %v1200
      %v1205 = vsel %vm1203, %v1200, %v1202
      %v1208 = vsel %vm1087, %v1204, 0.0
      %v1209 = vsel %vm1088, %v1205, 0.0
      %1210 = vrot.lane.b32.xlu0 %v1027, 31
      %v1211 = vpop.permute.xlu0 %1210
      %1212 = vrot.lane.b32.xlu0 %v1028, 31
      %v1213 = vpop.permute.xlu0 %1212
      %1214 = vrot.lane.b32.xlu0 %v1029, 31
      %v1215 = vpop.permute.xlu0 %1214
      %vm1216 = vcmask 252928
      %v1217 = vsel %vm1216, %v1211, %v1213
      %v1218 = vsel %vm1216, %v1213, %v1215
      %v1221 = vsel %vm1110, %v1217, 0.0
      %v1222 = vsel %vm1111, %v1218, 0.0
      %1223 = vrot.lane.b32.xlu0 %v1027, 30
      %v1224 = vpop.permute.xlu0 %1223
      %1225 = vrot.lane.b32.xlu0 %v1028, 30
      %v1226 = vpop.permute.xlu0 %1225
      %1227 = vrot.lane.b32.xlu0 %v1029, 30
      %v1228 = vpop.permute.xlu0 %1227
      %vm1229 = vcmask 244736
      %v1230 = vsel %vm1229, %v1224, %v1226
      %v1231 = vsel %vm1229, %v1226, %v1228
      %v1234 = vsel %vm1133, %v1230, 0.0
      %v1235 = vsel %vm1134, %v1231, 0.0
      %1236 = vrot.lane.b32.xlu0 %v1027, 29
      %v1237 = vpop.permute.xlu0 %1236
      %1238 = vrot.lane.b32.xlu0 %v1028, 29
      %v1239 = vpop.permute.xlu0 %1238
      %1240 = vrot.lane.b32.xlu0 %v1029, 29
      %v1241 = vpop.permute.xlu0 %1240
      %vm1242 = vcmask 236544
      %v1243 = vsel %vm1242, %v1237, %v1239
      %v1244 = vsel %vm1242, %v1239, %v1241
      %v1247 = vsel %vm1156, %v1243, 0.0
      %v1248 = vsel %vm1157, %v1244, 0.0
      %1249 = vrot.lane.b32.xlu0 %v1027, 19
      %v1250 = vpop.permute.xlu0 %1249
      %1251 = vrot.lane.b32.xlu0 %v1028, 19
      %v1252 = vpop.permute.xlu0 %1251
      %1253 = vrot.lane.b32.xlu0 %v1029, 19
      %v1254 = vpop.permute.xlu0 %1253
      %vm1255 = vcmask 154624
      %v1256 = vsel %vm1255, %v1250, %v1252
      %v1257 = vsel %vm1255, %v1252, %v1254
      %v1260 = vsel %vm1038, %v1256, 0.0
      %v1261 = vsel %vm1039, %v1257, 0.0
      %1262 = vrot.lane.b32.xlu0 %v1027, 18
      %v1263 = vpop.permute.xlu0 %1262
      %1264 = vrot.lane.b32.xlu0 %v1028, 18
      %v1265 = vpop.permute.xlu0 %1264
      %1266 = vrot.lane.b32.xlu0 %v1029, 18
      %v1267 = vpop.permute.xlu0 %1266
      %vm1268 = vcmask 146432
      %v1269 = vsel %vm1268, %v1263, %v1265
      %v1270 = vsel %vm1268, %v1265, %v1267
      %v1273 = vsel %vm1064, %v1269, 0.0
      %v1274 = vsel %vm1065, %v1270, 0.0
      %1275 = vrot.lane.b32.xlu0 %v1027, 17
      %v1276 = vpop.permute.xlu0 %1275
      %1277 = vrot.lane.b32.xlu0 %v1028, 17
      %v1278 = vpop.permute.xlu0 %1277
      %1279 = vrot.lane.b32.xlu0 %v1029, 17
      %v1280 = vpop.permute.xlu0 %1279
      %vm1281 = vcmask 138240
      %v1282 = vsel %vm1281, %v1276, %v1278
      %v1283 = vsel %vm1281, %v1278, %v1280
      %v1286 = vsel %vm1087, %v1282, 0.0
      %v1287 = vsel %vm1088, %v1283, 0.0
      %1288 = vrot.lane.b32.xlu0 %v1027, 15
      %v1289 = vpop.permute.xlu0 %1288
      %1290 = vrot.lane.b32.xlu0 %v1028, 15
      %v1291 = vpop.permute.xlu0 %1290
      %1292 = vrot.lane.b32.xlu0 %v1029, 15
      %v1293 = vpop.permute.xlu0 %1292
      %vm1294 = vcmask 121856
      %v1295 = vsel %vm1294, %v1289, %v1291
      %v1296 = vsel %vm1294, %v1291, %v1293
      %v1299 = vsel %vm1110, %v1295, 0.0
      %v1300 = vsel %vm1111, %v1296, 0.0
      %1301 = vrot.lane.b32.xlu0 %v1027, 14
      %v1302 = vpop.permute.xlu0 %1301
      %1303 = vrot.lane.b32.xlu0 %v1028, 14
      %v1304 = vpop.permute.xlu0 %1303
      %1305 = vrot.lane.b32.xlu0 %v1029, 14
      %v1306 = vpop.permute.xlu0 %1305
      %vm1307 = vcmask 113664
      %v1308 = vsel %vm1307, %v1302, %v1304
      %v1309 = vsel %vm1307, %v1304, %v1306
      %v1312 = vsel %vm1133, %v1308, 0.0
      %v1313 = vsel %vm1134, %v1309, 0.0
      %1314 = vrot.lane.b32.xlu0 %v1027, 13
      %v1315 = vpop.permute.xlu0 %1314
      %1316 = vrot.lane.b32.xlu0 %v1028, 13
      %v1317 = vpop.permute.xlu0 %1316
      %1318 = vrot.lane.b32.xlu0 %v1029, 13
      %v1319 = vpop.permute.xlu0 %1318
      %vm1320 = vcmask 105472
      %v1321 = vsel %vm1320, %v1315, %v1317
      %v1322 = vsel %vm1320, %v1317, %v1319
      %v1325 = vsel %vm1156, %v1321, 0.0
      %v1326 = vsel %vm1157, %v1322, 0.0
      %1327 = vrot.lane.b32.xlu0 %v1027, 3
      %v1328 = vpop.permute.xlu0 %1327
      %1329 = vrot.lane.b32.xlu0 %v1028, 3
      %v1330 = vpop.permute.xlu0 %1329
      %1331 = vrot.lane.b32.xlu0 %v1029, 3
      %v1332 = vpop.permute.xlu0 %1331
      %vm1333 = vcmask 23552
      %v1334 = vsel %vm1333, %v1328, %v1330
      %v1335 = vsel %vm1333, %v1330, %v1332
      %v1338 = vsel %vm1038, %v1334, 0.0
      %v1339 = vsel %vm1039, %v1335, 0.0
      %1340 = vrot.lane.b32.xlu0 %v1027, 2
      %v1341 = vpop.permute.xlu0 %1340
      %1342 = vrot.lane.b32.xlu0 %v1028, 2
      %v1343 = vpop.permute.xlu0 %1342
      %1344 = vrot.lane.b32.xlu0 %v1029, 2
      %v1345 = vpop.permute.xlu0 %1344
      %vm1346 = vcmask 15360
      %v1347 = vsel %vm1346, %v1341, %v1343
      %v1348 = vsel %vm1346, %v1343, %v1345
      %v1351 = vsel %vm1064, %v1347, 0.0
      %v1352 = vsel %vm1065, %v1348, 0.0
      %1353 = vrot.lane.b32.xlu0 %v1027, 1
      %v1354 = vpop.permute.xlu0 %1353
      %1355 = vrot.lane.b32.xlu0 %v1028, 1
      %v1356 = vpop.permute.xlu0 %1355
      %1357 = vrot.lane.b32.xlu0 %v1029, 1
      %v1358 = vpop.permute.xlu0 %1357
      %vm1359 = vcmask 7168
      %v1360 = vsel %vm1359, %v1354, %v1356
      %v1361 = vsel %vm1359, %v1356, %v1358
      %v1364 = vsel %vm1087, %v1360, 0.0
      %v1365 = vsel %vm1088, %v1361, 0.0
      %v1366 = vld [vmem:[#allocation2 + $0x18] sm:$0x7]
      %1368 = vrot.lane.b32.xlu0 %v1028, 127
      %v1369 = vpop.permute.xlu0 %1368
      %1370 = vrot.lane.b32.xlu0 %v1029, 127
      %v1371 = vpop.permute.xlu0 %1370
      %1372 = vrot.lane.b32.xlu0 %v1366, 127
      %v1373 = vpop.permute.xlu0 %1372
      %vm1374 = vcmask 1039360
      %v1375 = vsel %vm1374, %v1369, %v1371
      %v1376 = vsel %vm1374, %v1371, %v1373
      %v1379 = vsel %vm1110, %v1375, 0.0
      %v1380 = vsel %vm1111, %v1376, 0.0
      %1381 = vrot.lane.b32.xlu0 %v1028, 126
      %v1382 = vpop.permute.xlu0 %1381
      %1383 = vrot.lane.b32.xlu0 %v1029, 126
      %v1384 = vpop.permute.xlu0 %1383
      %1385 = vrot.lane.b32.xlu0 %v1366, 126
      %v1386 = vpop.permute.xlu0 %1385
      %vm1387 = vcmask 1031168
      %v1388 = vsel %vm1387, %v1382, %v1384
      %v1389 = vsel %vm1387, %v1384, %v1386
      %v1392 = vsel %vm1133, %v1388, 0.0
      %v1393 = vsel %vm1134, %v1389, 0.0
      %1394 = vrot.lane.b32.xlu0 %v1028, 125
      %v1395 = vpop.permute.xlu0 %1394
      %1396 = vrot.lane.b32.xlu0 %v1029, 125
      %v1397 = vpop.permute.xlu0 %1396
      %1398 = vrot.lane.b32.xlu0 %v1366, 125
      %v1399 = vpop.permute.xlu0 %1398
      %vm1400 = vcmask 1022976
      %v1401 = vsel %vm1400, %v1395, %v1397
      %v1402 = vsel %vm1400, %v1397, %v1399
      %v1405 = vsel %vm1156, %v1401, 0.0
      %v1406 = vsel %vm1157, %v1402, 0.0
      %1407 = vrot.lane.b32.xlu0 %v1028, 115
      %v1408 = vpop.permute.xlu0 %1407
      %1409 = vrot.lane.b32.xlu0 %v1029, 115
      %v1410 = vpop.permute.xlu0 %1409
      %1411 = vrot.lane.b32.xlu0 %v1366, 115
      %v1412 = vpop.permute.xlu0 %1411
      %vm1413 = vcmask 941056
      %v1414 = vsel %vm1413, %v1408, %v1410
      %v1415 = vsel %vm1413, %v1410, %v1412
      %v1418 = vsel %vm1038, %v1414, 0.0
      %v1419 = vsel %vm1039, %v1415, 0.0
      %1420 = vrot.lane.b32.xlu0 %v1028, 114
      %v1421 = vpop.permute.xlu0 %1420
      %1422 = vrot.lane.b32.xlu0 %v1029, 114
      %v1423 = vpop.permute.xlu0 %1422
      %1424 = vrot.lane.b32.xlu0 %v1366, 114
      %v1425 = vpop.permute.xlu0 %1424
      %vm1426 = vcmask 932864
      %v1427 = vsel %vm1426, %v1421, %v1423
      %v1428 = vsel %vm1426, %v1423, %v1425
      %v1431 = vsel %vm1064, %v1427, 0.0
      %v1432 = vsel %vm1065, %v1428, 0.0
      %1433 = vrot.lane.b32.xlu0 %v1028, 113
      %v1434 = vpop.permute.xlu0 %1433
      %1435 = vrot.lane.b32.xlu0 %v1029, 113
      %v1436 = vpop.permute.xlu0 %1435
      %1437 = vrot.lane.b32.xlu0 %v1366, 113
      %v1438 = vpop.permute.xlu0 %1437
      %vm1439 = vcmask 924672
      %v1440 = vsel %vm1439, %v1434, %v1436
      %v1441 = vsel %vm1439, %v1436, %v1438
      %v1444 = vsel %vm1087, %v1440, 0.0
      %v1445 = vsel %vm1088, %v1441, 0.0
      %1446 = vrot.lane.b32.xlu0 %v1028, 111
      %v1447 = vpop.permute.xlu0 %1446
      %1448 = vrot.lane.b32.xlu0 %v1029, 111
      %v1449 = vpop.permute.xlu0 %1448
      %1450 = vrot.lane.b32.xlu0 %v1366, 111
      %v1451 = vpop.permute.xlu0 %1450
      %vm1452 = vcmask 908288
      %v1453 = vsel %vm1452, %v1447, %v1449
      %v1454 = vsel %vm1452, %v1449, %v1451
      %v1457 = vsel %vm1110, %v1453, 0.0
      %v1458 = vsel %vm1111, %v1454, 0.0
      %1459 = vrot.lane.b32.xlu0 %v1028, 110
      %v1460 = vpop.permute.xlu0 %1459
      %1461 = vrot.lane.b32.xlu0 %v1029, 110
      %v1462 = vpop.permute.xlu0 %1461
      %1463 = vrot.lane.b32.xlu0 %v1366, 110
      %v1464 = vpop.permute.xlu0 %1463
      %vm1465 = vcmask 900096
      %v1466 = vsel %vm1465, %v1460, %v1462
      %v1467 = vsel %vm1465, %v1462, %v1464
      %v1470 = vsel %vm1133, %v1466, 0.0
      %v1471 = vsel %vm1134, %v1467, 0.0
      %1472 = vrot.lane.b32.xlu0 %v1028, 109
      %v1473 = vpop.permute.xlu0 %1472
      %1474 = vrot.lane.b32.xlu0 %v1029, 109
      %v1475 = vpop.permute.xlu0 %1474
      %1476 = vrot.lane.b32.xlu0 %v1366, 109
      %v1477 = vpop.permute.xlu0 %1476
      %vm1478 = vcmask 891904
      %v1479 = vsel %vm1478, %v1473, %v1475
      %v1480 = vsel %vm1478, %v1475, %v1477
      %v1483 = vsel %vm1156, %v1479, 0.0
      %v1484 = vsel %vm1157, %v1480, 0.0
      %1485 = vrot.lane.b32.xlu0 %v1028, 99
      %v1486 = vpop.permute.xlu0 %1485
      %1487 = vrot.lane.b32.xlu0 %v1029, 99
      %v1488 = vpop.permute.xlu0 %1487
      %1489 = vrot.lane.b32.xlu0 %v1366, 99
      %v1490 = vpop.permute.xlu0 %1489
      %vm1491 = vcmask 809984
      %v1492 = vsel %vm1491, %v1486, %v1488
      %v1493 = vsel %vm1491, %v1488, %v1490
      %v1496 = vsel %vm1038, %v1492, 0.0
      %v1497 = vsel %vm1039, %v1493, 0.0
      %1498 = vrot.lane.b32.xlu0 %v1028, 98
      %v1499 = vpop.permute.xlu0 %1498
      %1500 = vrot.lane.b32.xlu0 %v1029, 98
      %v1501 = vpop.permute.xlu0 %1500
      %1502 = vrot.lane.b32.xlu0 %v1366, 98
      %v1503 = vpop.permute.xlu0 %1502
      %vm1504 = vcmask 801792
      %v1505 = vsel %vm1504, %v1499, %v1501
      %v1506 = vsel %vm1504, %v1501, %v1503
      %v1509 = vsel %vm1064, %v1505, 0.0
      %v1510 = vsel %vm1065, %v1506, 0.0
      %1511 = vrot.lane.b32.xlu0 %v1028, 97
      %v1512 = vpop.permute.xlu0 %1511
      %1513 = vrot.lane.b32.xlu0 %v1029, 97
      %v1514 = vpop.permute.xlu0 %1513
      %1515 = vrot.lane.b32.xlu0 %v1366, 97
      %v1516 = vpop.permute.xlu0 %1515
      %vm1517 = vcmask 793600
      %v1518 = vsel %vm1517, %v1512, %v1514
      %v1519 = vsel %vm1517, %v1514, %v1516
      %v1522 = vsel %vm1087, %v1518, 0.0
      %v1523 = vsel %vm1088, %v1519, 0.0
      %1524 = vrot.lane.b32.xlu0 %v1028, 95
      %v1525 = vpop.permute.xlu0 %1524
      %1526 = vrot.lane.b32.xlu0 %v1029, 95
      %v1527 = vpop.permute.xlu0 %1526
      %1528 = vrot.lane.b32.xlu0 %v1366, 95
      %v1529 = vpop.permute.xlu0 %1528
      %vm1530 = vcmask 777216
      %v1531 = vsel %vm1530, %v1525, %v1527
      %v1532 = vsel %vm1530, %v1527, %v1529
      %v1535 = vsel %vm1110, %v1531, 0.0
      %v1536 = vsel %vm1111, %v1532, 0.0
      %1537 = vrot.lane.b32.xlu0 %v1028, 94
      %v1538 = vpop.permute.xlu0 %1537
      %1539 = vrot.lane.b32.xlu0 %v1029, 94
      %v1540 = vpop.permute.xlu0 %1539
      %1541 = vrot.lane.b32.xlu0 %v1366, 94
      %v1542 = vpop.permute.xlu0 %1541
      %vm1543 = vcmask 769024
      %v1544 = vsel %vm1543, %v1538, %v1540
      %v1545 = vsel %vm1543, %v1540, %v1542
      %v1548 = vsel %vm1133, %v1544, 0.0
      %v1549 = vsel %vm1134, %v1545, 0.0
      %1550 = vrot.lane.b32.xlu0 %v1028, 93
      %v1551 = vpop.permute.xlu0 %1550
      %1552 = vrot.lane.b32.xlu0 %v1029, 93
      %v1553 = vpop.permute.xlu0 %1552
      %1554 = vrot.lane.b32.xlu0 %v1366, 93
      %v1555 = vpop.permute.xlu0 %1554
      %vm1556 = vcmask 760832
      %v1557 = vsel %vm1556, %v1551, %v1553
      %v1558 = vsel %vm1556, %v1553, %v1555
      %v1561 = vsel %vm1156, %v1557, 0.0
      %v1562 = vsel %vm1157, %v1558, 0.0
      %1563 = vrot.lane.b32.xlu0 %v1028, 83
      %v1564 = vpop.permute.xlu0 %1563
      %1565 = vrot.lane.b32.xlu0 %v1029, 83
      %v1566 = vpop.permute.xlu0 %1565
      %1567 = vrot.lane.b32.xlu0 %v1366, 83
      %v1568 = vpop.permute.xlu0 %1567
      %vm1569 = vcmask 678912
      %v1570 = vsel %vm1569, %v1564, %v1566
      %v1571 = vsel %vm1569, %v1566, %v1568
      %v1574 = vsel %vm1038, %v1570, 0.0
      %v1575 = vsel %vm1039, %v1571, 0.0
      %1576 = vrot.lane.b32.xlu0 %v1028, 82
      %v1577 = vpop.permute.xlu0 %1576
      %1578 = vrot.lane.b32.xlu0 %v1029, 82
      %v1579 = vpop.permute.xlu0 %1578
      %1580 = vrot.lane.b32.xlu0 %v1366, 82
      %v1581 = vpop.permute.xlu0 %1580
      %vm1582 = vcmask 670720
      %v1583 = vsel %vm1582, %v1577, %v1579
      %v1584 = vsel %vm1582, %v1579, %v1581
      %v1587 = vsel %vm1064, %v1583, 0.0
      %v1588 = vsel %vm1065, %v1584, 0.0
      %1589 = vrot.lane.b32.xlu0 %v1028, 81
      %v1590 = vpop.permute.xlu0 %1589
      %1591 = vrot.lane.b32.xlu0 %v1029, 81
      %v1592 = vpop.permute.xlu0 %1591
      %1593 = vrot.lane.b32.xlu0 %v1366, 81
      %v1594 = vpop.permute.xlu0 %1593
      %vm1595 = vcmask 662528
      %v1596 = vsel %vm1595, %v1590, %v1592
      %v1597 = vsel %vm1595, %v1592, %v1594
      %v1600 = vsel %vm1087, %v1596, 0.0
      %v1601 = vsel %vm1088, %v1597, 0.0
      %1602 = vrot.lane.b32.xlu0 %v1028, 79
      %v1603 = vpop.permute.xlu0 %1602
      %1604 = vrot.lane.b32.xlu0 %v1029, 79
      %v1605 = vpop.permute.xlu0 %1604
      %1606 = vrot.lane.b32.xlu0 %v1366, 79
      %v1607 = vpop.permute.xlu0 %1606
      %vm1608 = vcmask 646144
      %v1609 = vsel %vm1608, %v1603, %v1605
      %v1610 = vsel %vm1608, %v1605, %v1607
      %v1613 = vsel %vm1110, %v1609, 0.0
      %v1614 = vsel %vm1111, %v1610, 0.0
      %1615 = vrot.lane.b32.xlu0 %v1028, 78
      %v1616 = vpop.permute.xlu0 %1615
      %1617 = vrot.lane.b32.xlu0 %v1029, 78
      %v1618 = vpop.permute.xlu0 %1617
      %1619 = vrot.lane.b32.xlu0 %v1366, 78
      %v1620 = vpop.permute.xlu0 %1619
      %vm1621 = vcmask 637952
      %v1622 = vsel %vm1621, %v1616, %v1618
      %v1623 = vsel %vm1621, %v1618, %v1620
      %v1626 = vsel %vm1133, %v1622, 0.0
      %v1627 = vsel %vm1134, %v1623, 0.0
      %1628 = vrot.lane.b32.xlu0 %v1028, 77
      %v1629 = vpop.permute.xlu0 %1628
      %1630 = vrot.lane.b32.xlu0 %v1029, 77
      %v1631 = vpop.permute.xlu0 %1630
      %1632 = vrot.lane.b32.xlu0 %v1366, 77
      %v1633 = vpop.permute.xlu0 %1632
      %vm1634 = vcmask 629760
      %v1635 = vsel %vm1634, %v1629, %v1631
      %v1636 = vsel %vm1634, %v1631, %v1633
      %v1639 = vsel %vm1156, %v1635, 0.0
      %v1640 = vsel %vm1157, %v1636, 0.0
      %v1643 = vrot.slane %v1077, 5
      %v1644 = vrot.slane %v1078, 5
      %v1649 = vrot.slane %v1100, 2
      %v1650 = vrot.slane %v1101, 2
      %v1653 = vrot.slane %v1027, 7
      %v1654 = vrot.slane %v1028, 7
      %v1655 = vrot.slane %v1029, 7
      %1656 = vrot.lane.b32.xlu0 %v1653, 48
      %v1657 = vpop.permute.xlu0 %1656
      %1658 = vrot.lane.b32.xlu0 %v1654, 48
      %v1659 = vpop.permute.xlu0 %1658
      %1660 = vrot.lane.b32.xlu0 %v1655, 48
      %v1661 = vpop.permute.xlu0 %1660
      %vm1662 = vcmask 392192
      %v1663 = vsel %vm1662, %v1657, %v1659
      %v1664 = vsel %vm1662, %v1659, %v1661
      %v1669 = vrot.slane %v1123, 4
      %v1670 = vrot.slane %v1124, 4
      %v1675 = vrot.slane %v1146, 1
      %v1676 = vrot.slane %v1147, 1
      %v1681 = vrot.slane %v1169, 6
      %v1682 = vrot.slane %v1170, 6
      %v1687 = vrot.slane %v1182, 3
      %v1688 = vrot.slane %v1183, 3
      %v1693 = vrot.slane %v1208, 5
      %v1694 = vrot.slane %v1209, 5
      %v1697 = vrot.slane %v1027, 2
      %v1698 = vrot.slane %v1028, 2
      %v1699 = vrot.slane %v1029, 2
      %1700 = vrot.lane.b32.xlu0 %v1697, 32
      %v1701 = vpop.permute.xlu0 %1700
      %1702 = vrot.lane.b32.xlu0 %v1698, 32
      %v1703 = vpop.permute.xlu0 %1702
      %1704 = vrot.lane.b32.xlu0 %v1699, 32
      %v1705 = vpop.permute.xlu0 %1704
      %vm1706 = vcmask 261120
      %v1707 = vsel %vm1706, %v1701, %v1703
      %v1708 = vsel %vm1706, %v1703, %v1705
      %v1713 = vrot.slane %v1221, 7
      %v1714 = vrot.slane %v1222, 7
      %v1719 = vrot.slane %v1234, 4
      %v1720 = vrot.slane %v1235, 4
      %v1725 = vrot.slane %v1247, 1
      %v1726 = vrot.slane %v1248, 1
      %v1731 = vrot.slane %v1260, 6
      %v1732 = vrot.slane %v1261, 6
      %v1737 = vrot.slane %v1273, 3
      %v1738 = vrot.slane %v1274, 3
      %vm1741 = vcmask 1042432
      %v1742 = vsel %vm1741, %v1054, %v1643
      %v1743 = vsel %vm1741, %v1055, %v1644
      %vm1744 = vcmask 1045504
      %v1745 = vsel %vm1744, %v1742, %v1649
      %v1746 = vsel %vm1744, %v1743, %v1650
      %vm1747 = vcmask 1040384
      %v1748 = vsel %vm1747, %v1649, %v1663
      %v1749 = vsel %vm1747, %v1650, %v1664
      %vm1750 = vcmask 1043456
      %v1751 = vsel %vm1750, %v1748, %v1669
      %v1752 = vsel %vm1750, %v1749, %v1670
      %vm1753 = vcmask 1046528
      %v1754 = vsel %vm1753, %v1751, %v1675
      %v1755 = vsel %vm1753, %v1752, %v1676
      %vm1756 = vcmask 1041408
      %v1757 = vsel %vm1756, %v1675, %v1681
      %v1758 = vsel %vm1756, %v1676, %v1682
      %vm1759 = vcmask 1044480
      %v1760 = vsel %vm1759, %v1757, %v1687
      %v1761 = vsel %vm1759, %v1758, %v1688
      %v1762 = vsel %vm1741, %v1195, %v1693
      %v1763 = vsel %vm1741, %v1196, %v1694
      %v1764 = vsel %vm1744, %v1762, %v1707
      %v1765 = vsel %vm1744, %v1763, %v1708
      %v1766 = vsel %vm1747, %v1707, %v1713
      %v1767 = vsel %vm1747, %v1708, %v1714
      %v1768 = vsel %vm1750, %v1766, %v1719
      %v1769 = vsel %vm1750, %v1767, %v1720
      %v1770 = vsel %vm1753, %v1768, %v1725
      %v1771 = vsel %vm1753, %v1769, %v1726
      %v1772 = vsel %vm1756, %v1725, %v1731
      %v1773 = vsel %vm1756, %v1726, %v1732
      %v1774 = vsel %vm1759, %v1772, %v1737
      %v1775 = vsel %vm1759, %v1773, %v1738
      %v1776 = vrot.slane %v1027, 5
      %v1777 = vrot.slane %v1028, 5
      %v1778 = vrot.slane %v1029, 5
      %1779 = vrot.lane.b32.xlu0 %v1776, 16
      %v1780 = vpop.permute.xlu0 %1779
      %1781 = vrot.lane.b32.xlu0 %v1777, 16
      %v1782 = vpop.permute.xlu0 %1781
      %1783 = vrot.lane.b32.xlu0 %v1778, 16
      %v1784 = vpop.permute.xlu0 %1783
      %vm1785 = vcmask 130048
      %v1786 = vsel %vm1785, %v1780, %v1782
      %v1787 = vsel %vm1785, %v1782, %v1784
      %v1792 = vrot.slane %v1299, 2
      %v1793 = vrot.slane %v1300, 2
      %v1798 = vrot.slane %v1312, 7
      %v1799 = vrot.slane %v1313, 7
      %v1804 = vrot.slane %v1325, 4
      %v1805 = vrot.slane %v1326, 4
      %v1810 = vrot.slane %v1338, 1
      %v1811 = vrot.slane %v1339, 1
      %v1816 = vrot.slane %v1351, 6
      %v1817 = vrot.slane %v1352, 6
      %v1822 = vrot.slane %v1364, 3
      %v1823 = vrot.slane %v1365, 3
      %v1828 = vrot.slane %v1379, 5
      %v1829 = vrot.slane %v1380, 5
      %v1834 = vrot.slane %v1392, 2
      %v1835 = vrot.slane %v1393, 2
      %v1840 = vrot.slane %v1405, 7
      %v1841 = vrot.slane %v1406, 7
      %v1846 = vrot.slane %v1418, 4
      %v1847 = vrot.slane %v1419, 4
      %v1852 = vrot.slane %v1431, 1
      %v1853 = vrot.slane %v1432, 1
      %v1858 = vrot.slane %v1444, 6
      %v1859 = vrot.slane %v1445, 6
      %v1862 = vrot.slane %v1028, 3
      %v1863 = vrot.slane %v1029, 3
      %v1864 = vrot.slane %v1366, 3
      %1865 = vrot.lane.b32.xlu0 %v1862, 112
      %v1866 = vpop.permute.xlu0 %1865
      %1867 = vrot.lane.b32.xlu0 %v1863, 112
      %v1868 = vpop.permute.xlu0 %1867
      %1869 = vrot.lane.b32.xlu0 %v1864, 112
      %v1870 = vpop.permute.xlu0 %1869
      %vm1871 = vcmask 916480
      %v1872 = vsel %vm1871, %v1866, %v1868
      %v1873 = vsel %vm1871, %v1868, %v1870
      %v1876 = vsel %vm1741, %v1286, %v1786
      %v1877 = vsel %vm1741, %v1287, %v1787
      %v1878 = vsel %vm1744, %v1876, %v1792
      %v1879 = vsel %vm1744, %v1877, %v1793
      %v1880 = vsel %vm1747, %v1792, %v1798
      %v1881 = vsel %vm1747, %v1793, %v1799
      %v1882 = vsel %vm1750, %v1880, %v1804
      %v1883 = vsel %vm1750, %v1881, %v1805
      %v1884 = vsel %vm1753, %v1882, %v1810
      %v1885 = vsel %vm1753, %v1883, %v1811
      %v1886 = vsel %vm1756, %v1810, %v1816
      %v1887 = vsel %vm1756, %v1811, %v1817
      %v1888 = vsel %vm1759, %v1886, %v1822
      %v1889 = vsel %vm1759, %v1887, %v1823
      %v1890 = vsel %vm1741, %v1028, %v1828
      %v1891 = vsel %vm1741, %v1029, %v1829
      %v1892 = vsel %vm1744, %v1890, %v1834
      %v1893 = vsel %vm1744, %v1891, %v1835
      %v1894 = vsel %vm1747, %v1834, %v1840
      %v1895 = vsel %vm1747, %v1835, %v1841
      %v1896 = vsel %vm1750, %v1894, %v1846
      %v1897 = vsel %vm1750, %v1895, %v1847
      %v1898 = vsel %vm1753, %v1896, %v1852
      %v1899 = vsel %vm1753, %v1897, %v1853
      %v1900 = vsel %vm1756, %v1852, %v1858
      %v1901 = vsel %vm1756, %v1853, %v1859
      %v1902 = vsel %vm1759, %v1900, %v1872
      %v1903 = vsel %vm1759, %v1901, %v1873
      %v1906 = vrot.slane %v1470, 5
      %v1907 = vrot.slane %v1471, 5
      %v1912 = vrot.slane %v1483, 2
      %v1913 = vrot.slane %v1484, 2
      %v1918 = vrot.slane %v1496, 7
      %v1919 = vrot.slane %v1497, 7
      %v1924 = vrot.slane %v1509, 4
      %v1925 = vrot.slane %v1510, 4
      %v1930 = vrot.slane %v1522, 1
      %v1931 = vrot.slane %v1523, 1
      %v1934 = vrot.slane %v1028, 6
      %v1935 = vrot.slane %v1029, 6
      %v1936 = vrot.slane %v1366, 6
      %1937 = vrot.lane.b32.xlu0 %v1934, 96
      %v1938 = vpop.permute.xlu0 %1937
      %1939 = vrot.lane.b32.xlu0 %v1935, 96
      %v1940 = vpop.permute.xlu0 %1939
      %1941 = vrot.lane.b32.xlu0 %v1936, 96
      %v1942 = vpop.permute.xlu0 %1941
      %vm1943 = vcmask 785408
      %v1944 = vsel %vm1943, %v1938, %v1940
      %v1945 = vsel %vm1943, %v1940, %v1942
      %v1950 = vrot.slane %v1535, 3
      %v1951 = vrot.slane %v1536, 3
      %v1956 = vrot.slane %v1561, 5
      %v1957 = vrot.slane %v1562, 5
      %v1962 = vrot.slane %v1574, 2
      %v1963 = vrot.slane %v1575, 2
      %v1968 = vrot.slane %v1587, 7
      %v1969 = vrot.slane %v1588, 7
      %v1974 = vrot.slane %v1600, 4
      %v1975 = vrot.slane %v1601, 4
      %v1978 = vrot.slane %v1028, 1
      %v1979 = vrot.slane %v1029, 1
      %v1980 = vrot.slane %v1366, 1
      %1981 = vrot.lane.b32.xlu0 %v1978, 80
      %v1982 = vpop.permute.xlu0 %1981
      %1983 = vrot.lane.b32.xlu0 %v1979, 80
      %v1984 = vpop.permute.xlu0 %1983
      %1985 = vrot.lane.b32.xlu0 %v1980, 80
      %v1986 = vpop.permute.xlu0 %1985
      %vm1987 = vcmask 654336
      %v1988 = vsel %vm1987, %v1982, %v1984
      %v1989 = vsel %vm1987, %v1984, %v1986
      %v1994 = vrot.slane %v1613, 6
      %v1995 = vrot.slane %v1614, 6
      %v2000 = vrot.slane %v1626, 3
      %v2001 = vrot.slane %v1627, 3
      %v2004 = vsel %vm1741, %v1457, %v1906
      %v2005 = vsel %vm1741, %v1458, %v1907
      %v2006 = vsel %vm1744, %v2004, %v1912
      %v2007 = vsel %vm1744, %v2005, %v1913
      %v2008 = vsel %vm1747, %v1912, %v1918
      %v2009 = vsel %vm1747, %v1913, %v1919
      %v2010 = vsel %vm1750, %v2008, %v1924
      %v2011 = vsel %vm1750, %v2009, %v1925
      %v2012 = vsel %vm1753, %v2010, %v1930
      %v2013 = vsel %vm1753, %v2011, %v1931
      %v2014 = vsel %vm1756, %v1930, %v1944
      %v2015 = vsel %vm1756, %v1931, %v1945
      %v2016 = vsel %vm1759, %v2014, %v1950
      %v2017 = vsel %vm1759, %v2015, %v1951
      %v2018 = vsel %vm1741, %v1548, %v1956
      %v2019 = vsel %vm1741, %v1549, %v1957
      %v2020 = vsel %vm1744, %v2018, %v1962
      %v2021 = vsel %vm1744, %v2019, %v1963
      %v2022 = vsel %vm1747, %v1962, %v1968
      %v2023 = vsel %vm1747, %v1963, %v1969
      %v2024 = vsel %vm1750, %v2022, %v1974
      %v2025 = vsel %vm1750, %v2023, %v1975
      %v2026 = vsel %vm1753, %v2024, %v1988
      %v2027 = vsel %vm1753, %v2025, %v1989
      %v2028 = vsel %vm1756, %v1988, %v1994
      %v2029 = vsel %vm1756, %v1989, %v1995
      %v2030 = vsel %vm1759, %v2028, %v2000
      %v2031 = vsel %vm1759, %v2029, %v2001
      %v2032 = vpack.c.bf16 %v1754, %v1745
      %v2033 = vpack.c.bf16 %v1755, %v1746
      %v2034 = vpack.c.bf16 %v1764, %v1760
      %v2035 = vpack.c.bf16 %v1765, %v1761
      %v2036 = vpack.c.bf16 %v1774, %v1770
      %v2037 = vpack.c.bf16 %v1775, %v1771
      %v2038 = vpack.c.bf16 %v1884, %v1878
      %v2039 = vpack.c.bf16 %v1885, %v1879
      %v2040 = vpack.c.bf16 %v1892, %v1888
      %v2041 = vpack.c.bf16 %v1893, %v1889
      %v2042 = vpack.c.bf16 %v1902, %v1898
      %v2043 = vpack.c.bf16 %v1903, %v1899
      %v2044 = vpack.c.bf16 %v2012, %v2006
      %v2045 = vpack.c.bf16 %v2013, %v2007
      %v2046 = vpack.c.bf16 %v2020, %v2016
      %v2047 = vpack.c.bf16 %v2021, %v2017
      %v2048 = vpack.c.bf16 %v2030, %v2026
      %v2049 = vpack.c.bf16 %v2031, %v2027
      %v2050 = vpack.c.bf16 %v1639, %v1639
      %v2051 = vpack.c.bf16 %v1640, %v1640
      %v2052 = vld [vmem:[%s3] sm:$0xff]
      %v2053 = vld [vmem:[%s5] sm:$0xff]
      %2055 = vset.pattern.permute.xlu0 0
      %2056 = vperm.xlu0 %2055, %v2053
      %v2057 = vpop.permute.xlu0 %2056
      %v2060 = vunpack.c.l.b16 %v2052
      %v2061 = vunpack.c.h.b16 %v2052
      %v2062 = vpack.c.b16 %v2060, %v2060
      %v2063 = vpack.c.b16 %v2061, %v2061
      %v2066 = vsel %vm1255, %v2063, 0
      %v2068 = vsel %vm1747, 4294967295, 65535
      %v2069 = vsel %vm1756, %v2068, 0
      %v2071 = vand.u32 %v2050, %v2069
      %v2074 = vand.u32 %v2051, %v2069
      %2076 = vmatprep.subr.bf16.mxu0 %v2033
      %2077 = vmatpush1.bf16.msra.mxu0 %v2032
      %2078 = vmatprep.subr.bf16.mxu0 %v2035
      %2079 = vmatpush1.bf16.msra.mxu0 %v2034
      %2080 = vmatprep.subr.bf16.mxu0 %v2037
      %2081 = vmatpush1.bf16.msra.mxu0 %v2036
      %2082 = vmatprep.subr.bf16.mxu0 %v2039
      %2083 = vmatpush1.bf16.msra.mxu0 %v2038
      %2084 = vmatprep.subr.bf16.mxu0 %v2041
      %2085 = vmatpush1.bf16.msra.mxu0 %v2040
      %2086 = vmatprep.subr.bf16.mxu0 %v2043
      %2087 = vmatpush1.bf16.msra.mxu0 %v2042
      %2088 = vmatprep.subr.bf16.mxu0 %v2045
      %2089 = vmatpush1.bf16.msra.mxu0 %v2044
      %2090 = vmatprep.subr.bf16.mxu0 %v2047
      %2091 = vmatpush1.bf16.msra.mxu0 %v2046
      %2092 = vmatprep.subr.bf16.mxu0 %v2049
      %2093 = vmatpush1.bf16.msra.mxu0 %v2048
      %2094 = vmatprep.subr.bf16.mxu0 %v2074
      %2095 = vmatpush1.bf16.msra.mxu0 %v2071
      %2096 = vmatprep.subr.bf16.mxu0 0
      %2097 = vmatpush1.bf16.msra.mxu0 0
      %2098 = vmatprep.subr.bf16.mxu0 0
      %2099 = vmatpush1.bf16.msra.mxu0 0
      %2100 = vmatprep.subr.bf16.mxu0 0
      %2101 = vmatpush1.bf16.msra.mxu0 0
      %2102 = vmatprep.subr.bf16.mxu0 0
      %2103 = vmatpush1.bf16.msra.mxu0 0
      %2104 = vmatprep.subr.bf16.mxu0 0
      %2105 = vmatpush1.bf16.msra.mxu0 0
      %2106 = vmatprep.subr.bf16.mxu0 0
      %2107 = vmatpush1.bf16.msra.mxu0 0
      %2108 = vmatprep.mubr.bf16.mxu0 %v2066
      %2109 = vmatmul.mubr.bf16.gmra.mrb[0].mxu0 %v2062
      %v2110 = vpop.f32.mrb[0].mxu0
      %v2111 = vadd.f32 %v2057, %v2110
      %v2112 = vpop.f32.mrb[0].mxu0
      %v2113 = vadd.f32 %v2057, %v2112
      %v2114 = vpop.f32.mrb[0].mxu0
      %v2115 = vpop.f32.mrb[0].mxu0
      %2116 = vdwg.mxu0
      %2117 = vst [vmem:[#allocation2 + $0x8] sm:$0xff] %v2111
      %2118 = vst [vmem:[#allocation2 + $0x10] sm:$0xff] %v2113
      %v2119 = vld [vmem:[#allocation2] sm:$0xff]
      %v2120 = vld [vmem:[#allocation2 + $0x8] sm:$0xff]
      %v2121 = vld [vmem:[#allocation2 + $0x10] sm:$0xff]
      %2125 = vrot.lane.b32.xlu0 %v2119, 17
      %v2126 = vpop.permute.xlu0 %2125
      %2127 = vrot.lane.b32.xlu0 %v2120, 17
      %v2128 = vpop.permute.xlu0 %2127
      %2129 = vrot.lane.b32.xlu0 %v2121, 17
      %v2130 = vpop.permute.xlu0 %2129
      %v2131 = vsel %vm1281, %v2126, %v2128
      %v2132 = vsel %vm1281, %v2128, %v2130
      %v2135 = vsel %vm1087, %v2131, 0.0
      %v2136 = vsel %vm1088, %v2132, 0.0
      %v2137 = vpack.c.bf16 %v2135, %v2135
      %v2138 = vpack.c.bf16 %v2136, %v2136
      %v2139 = vpack.c.bf16 %v2119, %v2119
      %v2140 = vpack.c.bf16 %v2120, %v2120
      %v2141 = vpack.c.bf16 %v2121, %v2121
      %2142 = vrot.lane.b32.xlu0 %v2119, 15
      %v2143 = vpop.permute.xlu0 %2142
      %2144 = vrot.lane.b32.xlu0 %v2120, 15
      %v2145 = vpop.permute.xlu0 %2144
      %2146 = vrot.lane.b32.xlu0 %v2121, 15
      %v2147 = vpop.permute.xlu0 %2146
      %v2148 = vsel %vm1294, %v2143, %v2145
      %v2149 = vsel %vm1294, %v2145, %v2147
      %v2152 = vsel %vm1110, %v2148, 0.0
      %v2153 = vsel %vm1111, %v2149, 0.0
      %v2154 = vpack.c.bf16 %v2152, %v2152
      %v2155 = vpack.c.bf16 %v2153, %v2153
      %2156 = vrot.lane.b32.xlu0 %v2119, 1
      %v2157 = vpop.permute.xlu0 %2156
      %2158 = vrot.lane.b32.xlu0 %v2120, 1
      %v2159 = vpop.permute.xlu0 %2158
      %2160 = vrot.lane.b32.xlu0 %v2121, 1
      %v2161 = vpop.permute.xlu0 %2160
      %v2162 = vsel %vm1359, %v2157, %v2159
      %v2163 = vsel %vm1359, %v2159, %v2161
      %v2166 = vsel %vm1087, %v2162, 0.0
      %v2167 = vsel %vm1088, %v2163, 0.0
      %v2168 = vpack.c.bf16 %v2166, %v2166
      %v2169 = vpack.c.bf16 %v2167, %v2167
      %v2170 = vld [vmem:[#allocation2 + $0x18] sm:$0xff]
      %2172 = vrot.lane.b32.xlu0 %v2120, 127
      %v2173 = vpop.permute.xlu0 %2172
      %2174 = vrot.lane.b32.xlu0 %v2121, 127
      %v2175 = vpop.permute.xlu0 %2174
      %2176 = vrot.lane.b32.xlu0 %v2170, 127
      %v2177 = vpop.permute.xlu0 %2176
      %v2178 = vsel %vm1374, %v2173, %v2175
      %v2179 = vsel %vm1374, %v2175, %v2177
      %v2182 = vsel %vm1110, %v2178, 0.0
      %v2183 = vsel %vm1111, %v2179, 0.0
      %v2184 = vpack.c.bf16 %v2182, %v2182
      %v2185 = vpack.c.bf16 %v2183, %v2183
      %2186 = vrot.lane.b32.xlu0 %v2120, 113
      %v2187 = vpop.permute.xlu0 %2186
      %2188 = vrot.lane.b32.xlu0 %v2121, 113
      %v2189 = vpop.permute.xlu0 %2188
      %2190 = vrot.lane.b32.xlu0 %v2170, 113
      %v2191 = vpop.permute.xlu0 %2190
      %v2192 = vsel %vm1439, %v2187, %v2189
      %v2193 = vsel %vm1439, %v2189, %v2191
      %v2196 = vsel %vm1087, %v2192, 0.0
      %v2197 = vsel %vm1088, %v2193, 0.0
      %v2198 = vpack.c.bf16 %v2196, %v2196
      %v2199 = vpack.c.bf16 %v2197, %v2197
      %v2200 = vpack.c.bf16 %v2170, %v2170
      %2201 = vrot.lane.b32.xlu0 %v2120, 111
      %v2202 = vpop.permute.xlu0 %2201
      %2203 = vrot.lane.b32.xlu0 %v2121, 111
      %v2204 = vpop.permute.xlu0 %2203
      %2205 = vrot.lane.b32.xlu0 %v2170, 111
      %v2206 = vpop.permute.xlu0 %2205
      %v2207 = vsel %vm1452, %v2202, %v2204
      %v2208 = vsel %vm1452, %v2204, %v2206
      %v2211 = vsel %vm1110, %v2207, 0.0
      %v2212 = vsel %vm1111, %v2208, 0.0
      %v2213 = vpack.c.bf16 %v2211, %v2211
      %v2214 = vpack.c.bf16 %v2212, %v2212
      %v2218 = vrot.slane %v2139, 4
      %v2219 = vrot.slane %v2140, 4
      %v2220 = vrot.slane %v2141, 4
      %2221 = vrot.lane.b32.xlu0 %v2218, 16
      %v2222 = vpop.permute.xlu0 %2221
      %2223 = vrot.lane.b32.xlu0 %v2219, 16
      %v2224 = vpop.permute.xlu0 %2223
      %2225 = vrot.lane.b32.xlu0 %v2220, 16
      %v2226 = vpop.permute.xlu0 %2225
      %vm2227 = vcmask 130048
      %v2228 = vsel %vm2227, %v2222, %v2224
      %v2229 = vsel %vm2227, %v2224, %v2226
      %v2232 = vrot.slane %v2168, 4
      %v2233 = vrot.slane %v2169, 4
      %v2236 = vrot.slane %v2184, 4
      %v2237 = vrot.slane %v2185, 4
      %v2239 = vrot.slane %v2200, 4
      %2240 = vrot.lane.b32.xlu0 %v2219, 112
      %v2241 = vpop.permute.xlu0 %2240
      %2242 = vrot.lane.b32.xlu0 %v2220, 112
      %v2243 = vpop.permute.xlu0 %2242
      %2244 = vrot.lane.b32.xlu0 %v2239, 112
      %v2245 = vpop.permute.xlu0 %2244
      %vm2246 = vcmask 916480
      %v2247 = vsel %vm2246, %v2241, %v2243
      %v2248 = vsel %vm2246, %v2243, %v2245
      %v2251 = vsel %vm1750, %v2137, %v2228
      %v2255 = vsel %vm1750, %v2138, %v2229
      %v2259 = vsel %vm1750, %v2154, %v2232
      %v2263 = vsel %vm1750, %v2155, %v2233
      %v2267 = vsel %vm1750, %v2140, %v2236
      %v2271 = vsel %vm1750, %v2141, %v2237
      %v2275 = vsel %vm1750, %v2198, %v2247
      %v2279 = vsel %vm1750, %v2199, %v2248
      %v2281 = vld [vmem:[%s7] sm:$0xf]
      %v2282 = vld [vmem:[%s9] sm:$0xff]
      %2284 = vset.pattern.permute.xlu0 0
      %2285 = vperm.xlu0 %2284, %v2282
      %v2286 = vpop.permute.xlu0 %2285
      %vm2288 = vcmask 588800
      %v2290 = vsel %vm2288, %v2281, 0
      %v2293 = vsel %vm1750, %v2213, 0
      %v2296 = vsel %vm1750, %v2214, 0
      %2298 = vmatprep.subr.bf16.mxu0 %v2255
      %2299 = vmatpush1.bf16.msra.mxu0 %v2251
      %2300 = vmatprep.subr.bf16.mxu0 %v2263
      %2301 = vmatpush1.bf16.msra.mxu0 %v2259
      %2302 = vmatprep.subr.bf16.mxu0 %v2271
      %2303 = vmatpush1.bf16.msra.mxu0 %v2267
      %2304 = vmatprep.subr.bf16.mxu0 %v2279
      %2305 = vmatpush1.bf16.msra.mxu0 %v2275
      %2306 = vmatprep.subr.bf16.mxu0 %v2296
      %2307 = vmatpush1.bf16.msra.mxu0 %v2293
      %2308 = vmatprep.subr.bf16.mxu0 0
      %2309 = vmatpush1.bf16.msra.mxu0 0
      %2310 = vmatprep.subr.bf16.mxu0 0
      %2311 = vmatpush1.bf16.msra.mxu0 0
      %2312 = vmatprep.subr.bf16.mxu0 0
      %2313 = vmatpush1.bf16.msra.mxu0 0
      %2314 = vmatprep.subr.bf16.mxu0 0
      %2315 = vmatpush1.bf16.msra.mxu0 0
      %2316 = vmatprep.subr.bf16.mxu0 0
      %2317 = vmatpush1.bf16.msra.mxu0 0
      %2318 = vmatprep.subr.bf16.mxu0 0
      %2319 = vmatpush1.bf16.msra.mxu0 0
      %2320 = vmatprep.subr.bf16.mxu0 0
      %2321 = vmatpush1.bf16.msra.mxu0 0
      %2322 = vmatprep.subr.bf16.mxu0 0
      %2323 = vmatpush1.bf16.msra.mxu0 0
      %2324 = vmatprep.subr.bf16.mxu0 0
      %2325 = vmatpush1.bf16.msra.mxu0 0
      %2326 = vmatprep.subr.bf16.mxu0 0
      %2327 = vmatpush1.bf16.msra.mxu0 0
      %2328 = vmatprep.subr.bf16.mxu0 0
      %2329 = vmatpush1.bf16.msra.mxu0 0
      %2330 = vmatprep.mubr.bf16.mxu0 0
      %2331 = vmatmul.mubr.bf16.gmra.mrb[0].mxu0 %v2290
      %v2332 = vpop.f32.mrb[0].mxu0
      %v2333 = vadd.f32 %v2286, %v2332
      %v2334 = vpop.f32.mrb[0].mxu0
      %v2335 = vadd.f32 %v2286, %v2334
      %v2336 = vpop.f32.mrb[0].mxu0
      %v2337 = vpop.f32.mrb[0].mxu0
      %2338 = vdwg.mxu0
      %2339 = vst [vmem:[#allocation2 + $0x8] sm:$0xff] %v2333
      %2340 = vst [vmem:[#allocation2 + $0x10] sm:$0xff] %v2335
      %v2341 = vld [vmem:[#allocation2] sm:$0xff]
      %v2342 = vld [vmem:[#allocation2 + $0x8] sm:$0xff]
      %v2343 = vld [vmem:[#allocation2 + $0x10] sm:$0xff]
      %2347 = vrot.lane.b32.xlu0 %v2341, 17
      %v2348 = vpop.permute.xlu0 %2347
      %2349 = vrot.lane.b32.xlu0 %v2342, 17
      %v2350 = vpop.permute.xlu0 %2349
      %2351 = vrot.lane.b32.xlu0 %v2343, 17
      %v2352 = vpop.permute.xlu0 %2351
      %v2353 = vsel %vm1281, %v2348, %v2350
      %v2354 = vsel %vm1281, %v2350, %v2352
      %v2357 = vsel %vm1087, %v2353, 0.0
      %v2358 = vsel %vm1088, %v2354, 0.0
      %v2359 = vpack.c.bf16 %v2357, %v2357
      %v2360 = vpack.c.bf16 %v2358, %v2358
      %v2361 = vpack.c.bf16 %v2341, %v2341
      %v2362 = vpack.c.bf16 %v2342, %v2342
      %v2363 = vpack.c.bf16 %v2343, %v2343
      %2364 = vrot.lane.b32.xlu0 %v2341, 15
      %v2365 = vpop.permute.xlu0 %2364
      %2366 = vrot.lane.b32.xlu0 %v2342, 15
      %v2367 = vpop.permute.xlu0 %2366
      %2368 = vrot.lane.b32.xlu0 %v2343, 15
      %v2369 = vpop.permute.xlu0 %2368
      %v2370 = vsel %vm1294, %v2365, %v2367
      %v2371 = vsel %vm1294, %v2367, %v2369
      %v2374 = vsel %vm1110, %v2370, 0.0
      %v2375 = vsel %vm1111, %v2371, 0.0
      %v2376 = vpack.c.bf16 %v2374, %v2374
      %v2377 = vpack.c.bf16 %v2375, %v2375
      %2378 = vrot.lane.b32.xlu0 %v2341, 1
      %v2379 = vpop.permute.xlu0 %2378
      %2380 = vrot.lane.b32.xlu0 %v2342, 1
      %v2381 = vpop.permute.xlu0 %2380
      %2382 = vrot.lane.b32.xlu0 %v2343, 1
      %v2383 = vpop.permute.xlu0 %2382
      %v2384 = vsel %vm1359, %v2379, %v2381
      %v2385 = vsel %vm1359, %v2381, %v2383
      %v2388 = vsel %vm1087, %v2384, 0.0
      %v2389 = vsel %vm1088, %v2385, 0.0
      %v2390 = vpack.c.bf16 %v2388, %v2388
      %v2391 = vpack.c.bf16 %v2389, %v2389
      %v2392 = vld [vmem:[#allocation2 + $0x18] sm:$0xff]
      %2394 = vrot.lane.b32.xlu0 %v2342, 127
      %v2395 = vpop.permute.xlu0 %2394
      %2396 = vrot.lane.b32.xlu0 %v2343, 127
      %v2397 = vpop.permute.xlu0 %2396
      %2398 = vrot.lane.b32.xlu0 %v2392, 127
      %v2399 = vpop.permute.xlu0 %2398
      %v2400 = vsel %vm1374, %v2395, %v2397
      %v2401 = vsel %vm1374, %v2397, %v2399
      %v2404 = vsel %vm1110, %v2400, 0.0
      %v2405 = vsel %vm1111, %v2401, 0.0
      %v2406 = vpack.c.bf16 %v2404, %v2404
      %v2407 = vpack.c.bf16 %v2405, %v2405
      %2408 = vrot.lane.b32.xlu0 %v2342, 113
      %v2409 = vpop.permute.xlu0 %2408
      %2410 = vrot.lane.b32.xlu0 %v2343, 113
      %v2411 = vpop.permute.xlu0 %2410
      %2412 = vrot.lane.b32.xlu0 %v2392, 113
      %v2413 = vpop.permute.xlu0 %2412
      %v2414 = vsel %vm1439, %v2409, %v2411
      %v2415 = vsel %vm1439, %v2411, %v2413
      %v2418 = vsel %vm1087, %v2414, 0.0
      %v2419 = vsel %vm1088, %v2415, 0.0
      %v2420 = vpack.c.bf16 %v2418, %v2418
      %v2421 = vpack.c.bf16 %v2419, %v2419
      %v2422 = vpack.c.bf16 %v2392, %v2392
      %2423 = vrot.lane.b32.xlu0 %v2342, 111
      %v2424 = vpop.permute.xlu0 %2423
      %2425 = vrot.lane.b32.xlu0 %v2343, 111
      %v2426 = vpop.permute.xlu0 %2425
      %2427 = vrot.lane.b32.xlu0 %v2392, 111
      %v2428 = vpop.permute.xlu0 %2427
      %v2429 = vsel %vm1452, %v2424, %v2426
      %v2430 = vsel %vm1452, %v2426, %v2428
      %v2433 = vsel %vm1110, %v2429, 0.0
      %v2434 = vsel %vm1111, %v2430, 0.0
      %v2435 = vpack.c.bf16 %v2433, %v2433
      %v2436 = vpack.c.bf16 %v2434, %v2434
      %v2440 = vrot.slane %v2361, 4
      %v2441 = vrot.slane %v2362, 4
      %v2442 = vrot.slane %v2363, 4
      %2443 = vrot.lane.b32.xlu0 %v2440, 16
      %v2444 = vpop.permute.xlu0 %2443
      %2445 = vrot.lane.b32.xlu0 %v2441, 16
      %v2446 = vpop.permute.xlu0 %2445
      %2447 = vrot.lane.b32.xlu0 %v2442, 16
      %v2448 = vpop.permute.xlu0 %2447
      %v2449 = vsel %vm2227, %v2444, %v2446
      %v2450 = vsel %vm2227, %v2446, %v2448
      %v2453 = vrot.slane %v2390, 4
      %v2454 = vrot.slane %v2391, 4
      %v2457 = vrot.slane %v2406, 4
      %v2458 = vrot.slane %v2407, 4
      %v2460 = vrot.slane %v2422, 4
      %2461 = vrot.lane.b32.xlu0 %v2441, 112
      %v2462 = vpop.permute.xlu0 %2461
      %2463 = vrot.lane.b32.xlu0 %v2442, 112
      %v2464 = vpop.permute.xlu0 %2463
      %2465 = vrot.lane.b32.xlu0 %v2460, 112
      %v2466 = vpop.permute.xlu0 %2465
      %v2467 = vsel %vm2246, %v2462, %v2464
      %v2468 = vsel %vm2246, %v2464, %v2466
      %v2471 = vsel %vm1750, %v2359, %v2449
      %v2475 = vsel %vm1750, %v2360, %v2450
      %v2479 = vsel %vm1750, %v2376, %v2453
      %v2483 = vsel %vm1750, %v2377, %v2454
      %v2487 = vsel %vm1750, %v2362, %v2457
      %v2491 = vsel %vm1750, %v2363, %v2458
      %v2495 = vsel %vm1750, %v2420, %v2467
      %v2499 = vsel %vm1750, %v2421, %v2468
      %v2501 = vld [vmem:[%s11] sm:$0x3]
      %v2502 = vld [vmem:[%s13] sm:$0xf]
      %2504 = vset.pattern.permute.xlu0 0
      %2505 = vperm.xlu0 %2504, %v2502
      %v2506 = vpop.permute.xlu0 %2505
      %v2509 = vsel %vm2288, %v2501, 0
      %v2512 = vsel %vm1750, %v2435, 0
      %v2515 = vsel %vm1750, %v2436, 0
      %2517 = vmatprep.subr.bf16.mxu0 %v2475
      %2518 = vmatpush1.bf16.msra.mxu0 %v2471
      %2519 = vmatprep.subr.bf16.mxu0 %v2483
      %2520 = vmatpush1.bf16.msra.mxu0 %v2479
      %2521 = vmatprep.subr.bf16.mxu0 %v2491
      %2522 = vmatpush1.bf16.msra.mxu0 %v2487
      %2523 = vmatprep.subr.bf16.mxu0 %v2499
      %2524 = vmatpush1.bf16.msra.mxu0 %v2495
      %2525 = vmatprep.subr.bf16.mxu0 %v2515
      %2526 = vmatpush1.bf16.msra.mxu0 %v2512
      %2527 = vmatprep.subr.bf16.mxu0 0
      %2528 = vmatpush1.bf16.msra.mxu0 0
      %2529 = vmatprep.subr.bf16.mxu0 0
      %2530 = vmatpush1.bf16.msra.mxu0 0
      %2531 = vmatprep.subr.bf16.mxu0 0
      %2532 = vmatpush1.bf16.msra.mxu0 0
      %2533 = vmatprep.subr.bf16.mxu0 0
      %2534 = vmatpush1.bf16.msra.mxu0 0
      %2535 = vmatprep.subr.bf16.mxu0 0
      %2536 = vmatpush1.bf16.msra.mxu0 0
      %2537 = vmatprep.subr.bf16.mxu0 0
      %2538 = vmatpush1.bf16.msra.mxu0 0
      %2539 = vmatprep.subr.bf16.mxu0 0
      %2540 = vmatpush1.bf16.msra.mxu0 0
      %2541 = vmatprep.subr.bf16.mxu0 0
      %2542 = vmatpush1.bf16.msra.mxu0 0
      %2543 = vmatprep.subr.bf16.mxu0 0
      %2544 = vmatpush1.bf16.msra.mxu0 0
      %2545 = vmatprep.subr.bf16.mxu0 0
      %2546 = vmatpush1.bf16.msra.mxu0 0
      %2547 = vmatprep.subr.bf16.mxu0 0
      %2548 = vmatpush1.bf16.msra.mxu0 0
      %2549 = vmatprep.mubr.bf16.mxu0 0
      %2550 = vmatmul.mubr.bf16.gmra.mrb[0].mxu0 %v2509
      %v2551 = vpop.f32.mrb[0].mxu0
      %v2552 = vadd.f32 %v2506, %v2551
      %v2553 = vpop.f32.mrb[0].mxu0
      %v2554 = vadd.f32 %v2506, %v2553
      %v2555 = vpop.f32.mrb[0].mxu0
      %v2556 = vpop.f32.mrb[0].mxu0
      %2557 = vdwg.mxu0
      %v2558 = vmax.f32 %v2552, 0.0
      %v2559 = vmax.f32 %v2554, 0.0
      %2560 = vst [vmem:[#allocation2 + $0x28] sm:$0xf] %v2558
      %2561 = vst [vmem:[#allocation2 + $0x30] sm:$0xf] %v2559
      %v2562 = vld [vmem:[#allocation2] sm:$0xff]
      %v2563 = vld [vmem:[#allocation2 + $0x8] sm:$0xff]
      %v2564 = vld [vmem:[#allocation2 + $0x10] sm:$0xff]
      %v2565 = vld [vmem:[#allocation2 + $0x20] sm:$0xf]
      %v2566 = vld [vmem:[#allocation2 + $0x28] sm:$0xf]
      %v2567 = vld [vmem:[#allocation2 + $0x30] sm:$0xf]
      %2574 = vrot.lane.b32.xlu0 %v2562, 17
      %v2575 = vpop.permute.xlu0 %2574
      %2576 = vrot.lane.b32.xlu0 %v2563, 17
      %v2577 = vpop.permute.xlu0 %2576
      %2578 = vrot.lane.b32.xlu0 %v2564, 17
      %v2579 = vpop.permute.xlu0 %2578
      %2580 = vrot.lane.b32.xlu0 %v2565, 17
      %v2581 = vpop.permute.xlu0 %2580
      %2582 = vrot.lane.b32.xlu0 %v2566, 17
      %v2583 = vpop.permute.xlu0 %2582
      %2584 = vrot.lane.b32.xlu0 %v2567, 17
      %v2585 = vpop.permute.xlu0 %2584
      %v2586 = vsel %vm1281, %v2575, %v2577
      %v2587 = vsel %vm1281, %v2577, %v2579
      %v2588 = vsel %vm1281, %v2581, %v2583
      %v2589 = vsel %vm1281, %v2583, %v2585
      %v2594 = vsel %vm1087, %v2586, 0.0
      %v2595 = vsel %vm1088, %v2587, 0.0
      %v2596 = vsel %vm1087, %v2588, 0.0
      %v2597 = vsel %vm1088, %v2589, 0.0
      %v2598 = vpack.c.bf16 %v2596, %v2594
      %v2599 = vpack.c.bf16 %v2597, %v2595
      %v2600 = vpack.c.bf16 %v2565, %v2562
      %v2601 = vpack.c.bf16 %v2566, %v2563
      %v2602 = vpack.c.bf16 %v2567, %v2564
      %2603 = vrot.lane.b32.xlu0 %v2562, 15
      %v2604 = vpop.permute.xlu0 %2603
      %2605 = vrot.lane.b32.xlu0 %v2563, 15
      %v2606 = vpop.permute.xlu0 %2605
      %2607 = vrot.lane.b32.xlu0 %v2564, 15
      %v2608 = vpop.permute.xlu0 %2607
      %2609 = vrot.lane.b32.xlu0 %v2565, 15
      %v2610 = vpop.permute.xlu0 %2609
      %2611 = vrot.lane.b32.xlu0 %v2566, 15
      %v2612 = vpop.permute.xlu0 %2611
      %2613 = vrot.lane.b32.xlu0 %v2567, 15
      %v2614 = vpop.permute.xlu0 %2613
      %v2615 = vsel %vm1294, %v2604, %v2606
      %v2616 = vsel %vm1294, %v2606, %v2608
      %v2617 = vsel %vm1294, %v2610, %v2612
      %v2618 = vsel %vm1294, %v2612, %v2614
      %v2623 = vsel %vm1110, %v2615, 0.0
      %v2624 = vsel %vm1111, %v2616, 0.0
      %v2625 = vsel %vm1110, %v2617, 0.0
      %v2626 = vsel %vm1111, %v2618, 0.0
      %v2627 = vpack.c.bf16 %v2625, %v2623
      %v2628 = vpack.c.bf16 %v2626, %v2624
      %2629 = vrot.lane.b32.xlu0 %v2562, 1
      %v2630 = vpop.permute.xlu0 %2629
      %2631 = vrot.lane.b32.xlu0 %v2563, 1
      %v2632 = vpop.permute.xlu0 %2631
      %2633 = vrot.lane.b32.xlu0 %v2564, 1
      %v2634 = vpop.permute.xlu0 %2633
      %2635 = vrot.lane.b32.xlu0 %v2565, 1
      %v2636 = vpop.permute.xlu0 %2635
      %2637 = vrot.lane.b32.xlu0 %v2566, 1
      %v2638 = vpop.permute.xlu0 %2637
      %2639 = vrot.lane.b32.xlu0 %v2567, 1
      %v2640 = vpop.permute.xlu0 %2639
      %v2641 = vsel %vm1359, %v2630, %v2632
      %v2642 = vsel %vm1359, %v2632, %v2634
      %v2643 = vsel %vm1359, %v2636, %v2638
      %v2644 = vsel %vm1359, %v2638, %v2640
      %v2649 = vsel %vm1087, %v2641, 0.0
      %v2650 = vsel %vm1088, %v2642, 0.0
      %v2651 = vsel %vm1087, %v2643, 0.0
      %v2652 = vsel %vm1088, %v2644, 0.0
      %v2653 = vpack.c.bf16 %v2651, %v2649
      %v2654 = vpack.c.bf16 %v2652, %v2650
      %v2655 = vld [vmem:[#allocation2 + $0x18] sm:$0xff]
      %v2656 = vld [vmem:[#allocation2 + $0x38] sm:$0xf]
      %2659 = vrot.lane.b32.xlu0 %v2563, 127
      %v2660 = vpop.permute.xlu0 %2659
      %2661 = vrot.lane.b32.xlu0 %v2564, 127
      %v2662 = vpop.permute.xlu0 %2661
      %2663 = vrot.lane.b32.xlu0 %v2655, 127
      %v2664 = vpop.permute.xlu0 %2663
      %2665 = vrot.lane.b32.xlu0 %v2566, 127
      %v2666 = vpop.permute.xlu0 %2665
      %2667 = vrot.lane.b32.xlu0 %v2567, 127
      %v2668 = vpop.permute.xlu0 %2667
      %2669 = vrot.lane.b32.xlu0 %v2656, 127
      %v2670 = vpop.permute.xlu0 %2669
      %v2671 = vsel %vm1374, %v2660, %v2662
      %v2672 = vsel %vm1374, %v2662, %v2664
      %v2673 = vsel %vm1374, %v2666, %v2668
      %v2674 = vsel %vm1374, %v2668, %v2670
      %v2679 = vsel %vm1110, %v2671, 0.0
      %v2680 = vsel %vm1111, %v2672, 0.0
      %v2681 = vsel %vm1110, %v2673, 0.0
      %v2682 = vsel %vm1111, %v2674, 0.0
      %v2683 = vpack.c.bf16 %v2681, %v2679
      %v2684 = vpack.c.bf16 %v2682, %v2680
      %2685 = vrot.lane.b32.xlu0 %v2563, 113
      %v2686 = vpop.permute.xlu0 %2685
      %2687 = vrot.lane.b32.xlu0 %v2564, 113
      %v2688 = vpop.permute.xlu0 %2687
      %2689 = vrot.lane.b32.xlu0 %v2655, 113
      %v2690 = vpop.permute.xlu0 %2689
      %2691 = vrot.lane.b32.xlu0 %v2566, 113
      %v2692 = vpop.permute.xlu0 %2691
      %2693 = vrot.lane.b32.xlu0 %v2567, 113
      %v2694 = vpop.permute.xlu0 %2693
      %2695 = vrot.lane.b32.xlu0 %v2656, 113
      %v2696 = vpop.permute.xlu0 %2695
      %v2697 = vsel %vm1439, %v2686, %v2688
      %v2698 = vsel %vm1439, %v2688, %v2690
      %v2699 = vsel %vm1439, %v2692, %v2694
      %v2700 = vsel %vm1439, %v2694, %v2696
      %v2705 = vsel %vm1087, %v2697, 0.0
      %v2706 = vsel %vm1088, %v2698, 0.0
      %v2707 = vsel %vm1087, %v2699, 0.0
      %v2708 = vsel %vm1088, %v2700, 0.0
      %v2709 = vpack.c.bf16 %v2707, %v2705
      %v2710 = vpack.c.bf16 %v2708, %v2706
      %v2711 = vpack.c.bf16 %v2656, %v2655
      %2712 = vrot.lane.b32.xlu0 %v2563, 111
      %v2713 = vpop.permute.xlu0 %2712
      %2714 = vrot.lane.b32.xlu0 %v2564, 111
      %v2715 = vpop.permute.xlu0 %2714
      %2716 = vrot.lane.b32.xlu0 %v2655, 111
      %v2717 = vpop.permute.xlu0 %2716
      %2718 = vrot.lane.b32.xlu0 %v2566, 111
      %v2719 = vpop.permute.xlu0 %2718
      %2720 = vrot.lane.b32.xlu0 %v2567, 111
      %v2721 = vpop.permute.xlu0 %2720
      %2722 = vrot.lane.b32.xlu0 %v2656, 111
      %v2723 = vpop.permute.xlu0 %2722
      %v2724 = vsel %vm1452, %v2713, %v2715
      %v2725 = vsel %vm1452, %v2715, %v2717
      %v2726 = vsel %vm1452, %v2719, %v2721
      %v2727 = vsel %vm1452, %v2721, %v2723
      %v2732 = vsel %vm1110, %v2724, 0.0
      %v2733 = vsel %vm1111, %v2725, 0.0
      %v2734 = vsel %vm1110, %v2726, 0.0
      %v2735 = vsel %vm1111, %v2727, 0.0
      %v2736 = vpack.c.bf16 %v2734, %v2732
      %v2737 = vpack.c.bf16 %v2735, %v2733
      %v2741 = vrot.slane %v2600, 2
      %v2742 = vrot.slane %v2601, 2
      %v2743 = vrot.slane %v2602, 2
      %2744 = vrot.lane.b32.xlu0 %v2741, 16
      %v2745 = vpop.permute.xlu0 %2744
      %2746 = vrot.lane.b32.xlu0 %v2742, 16
      %v2747 = vpop.permute.xlu0 %2746
      %2748 = vrot.lane.b32.xlu0 %v2743, 16
      %v2749 = vpop.permute.xlu0 %2748
      %v2750 = vsel %vm2227, %v2745, %v2747
      %v2751 = vsel %vm2227, %v2747, %v2749
      %v2754 = vrot.slane %v2627, 4
      %v2755 = vrot.slane %v2628, 4
      %v2758 = vrot.slane %v2653, 6
      %v2759 = vrot.slane %v2654, 6
      %v2762 = vrot.slane %v2683, 2
      %v2763 = vrot.slane %v2684, 2
      %v2766 = vrot.slane %v2709, 4
      %v2767 = vrot.slane %v2710, 4
      %v2769 = vrot.slane %v2601, 6
      %v2770 = vrot.slane %v2602, 6
      %v2771 = vrot.slane %v2711, 6
      %2772 = vrot.lane.b32.xlu0 %v2769, 112
      %v2773 = vpop.permute.xlu0 %2772
      %2774 = vrot.lane.b32.xlu0 %v2770, 112
      %v2775 = vpop.permute.xlu0 %2774
      %2776 = vrot.lane.b32.xlu0 %v2771, 112
      %v2777 = vpop.permute.xlu0 %2776
      %v2778 = vsel %vm2246, %v2773, %v2775
      %v2779 = vsel %vm2246, %v2775, %v2777
      %v2782 = vsel %vm1744, %v2598, %v2750
      %v2786 = vsel %vm1744, %v2599, %v2751
      %v2789 = vsel %vm1750, %v2750, %v2754
      %v2792 = vsel %vm1750, %v2751, %v2755
      %v2795 = vsel %vm1756, %v2754, %v2758
      %v2798 = vsel %vm1756, %v2755, %v2759
      %v2802 = vsel %vm1744, %v2601, %v2762
      %v2806 = vsel %vm1744, %v2602, %v2763
      %v2809 = vsel %vm1750, %v2762, %v2766
      %v2812 = vsel %vm1750, %v2763, %v2767
      %v2815 = vsel %vm1756, %v2766, %v2778
      %v2818 = vsel %vm1756, %v2767, %v2779
      %v2820 = vld [vmem:[%s15] sm:$0x3]
      %v2821 = vld [vmem:[%s17] sm:$0xf]
      %2823 = vset.pattern.permute.xlu0 0
      %2824 = vperm.xlu0 %2823, %v2821
      %v2825 = vpop.permute.xlu0 %2824
      %vm2827 = vcmask 883712
      %v2829 = vsel %vm2827, %v2820, 0
      %v2832 = vsel %vm1744, %v2736, 0
      %v2835 = vsel %vm1744, %v2737, 0
      %2837 = vmatprep.subr.bf16.mxu0 %v2786
      %2838 = vmatpush1.bf16.msra.mxu0 %v2782
      %2839 = vmatprep.subr.bf16.mxu0 %v2792
      %2840 = vmatpush1.bf16.msra.mxu0 %v2789
      %2841 = vmatprep.subr.bf16.mxu0 %v2798
      %2842 = vmatpush1.bf16.msra.mxu0 %v2795
      %2843 = vmatprep.subr.bf16.mxu0 %v2806
      %2844 = vmatpush1.bf16.msra.mxu0 %v2802
      %2845 = vmatprep.subr.bf16.mxu0 %v2812
      %2846 = vmatpush1.bf16.msra.mxu0 %v2809
      %2847 = vmatprep.subr.bf16.mxu0 %v2818
      %2848 = vmatpush1.bf16.msra.mxu0 %v2815
      %2849 = vmatprep.subr.bf16.mxu0 %v2835
      %2850 = vmatpush1.bf16.msra.mxu0 %v2832
      %2851 = vmatprep.subr.bf16.mxu0 0
      %2852 = vmatpush1.bf16.msra.mxu0 0
      %2853 = vmatprep.subr.bf16.mxu0 0
      %2854 = vmatpush1.bf16.msra.mxu0 0
      %2855 = vmatprep.subr.bf16.mxu0 0
      %2856 = vmatpush1.bf16.msra.mxu0 0
      %2857 = vmatprep.subr.bf16.mxu0 0
      %2858 = vmatpush1.bf16.msra.mxu0 0
      %2859 = vmatprep.subr.bf16.mxu0 0
      %2860 = vmatpush1.bf16.msra.mxu0 0
      %2861 = vmatprep.subr.bf16.mxu0 0
      %2862 = vmatpush1.bf16.msra.mxu0 0
      %2863 = vmatprep.subr.bf16.mxu0 0
      %2864 = vmatpush1.bf16.msra.mxu0 0
      %2865 = vmatprep.subr.bf16.mxu0 0
      %2866 = vmatpush1.bf16.msra.mxu0 0
      %2867 = vmatprep.subr.bf16.mxu0 0
      %2868 = vmatpush1.bf16.msra.mxu0 0
      %2869 = vmatprep.mubr.bf16.mxu0 0
      %2870 = vmatmul.mubr.bf16.gmra.mrb[0].mxu0 %v2829
      %v2871 = vpop.f32.mrb[0].mxu0
      %v2872 = vadd.f32 %v2825, %v2871
      %v2873 = vpop.f32.mrb[0].mxu0
      %v2874 = vadd.f32 %v2825, %v2873
      %v2875 = vpop.f32.mrb[0].mxu0
      %v2876 = vpop.f32.mrb[0].mxu0
      %2877 = vdwg.mxu0
      %v2878 = vmax.f32 %v2872, 0.0
      %v2879 = vmax.f32 %v2874, 0.0
      %v2882 = vrot.slane %v2878, 4
      %v2883 = vrot.slane %v2879, 4
      %2886 = vst [vmem:[#allocation2 + $0x28] sm:$0xf0] %v2882
      %2887 = vst [vmem:[#allocation2 + $0x30] sm:$0xf0] %v2883
      %v2888 = vld [vmem:[#allocation2] sm:$0xff]
      %v2889 = vld [vmem:[#allocation2 + $0x8] sm:$0xff]
      %v2890 = vld [vmem:[#allocation2 + $0x10] sm:$0xff]
      %v2891 = vld [vmem:[#allocation2 + $0x20] sm:$0xff]
      %v2892 = vld [vmem:[#allocation2 + $0x28] sm:$0xff]
      %v2893 = vld [vmem:[#allocation2 + $0x30] sm:$0xff]
      %2900 = vrot.lane.b32.xlu0 %v2888, 17
      %v2901 = vpop.permute.xlu0 %2900
      %2902 = vrot.lane.b32.xlu0 %v2889, 17
      %v2903 = vpop.permute.xlu0 %2902
      %2904 = vrot.lane.b32.xlu0 %v2890, 17
      %v2905 = vpop.permute.xlu0 %2904
      %2906 = vrot.lane.b32.xlu0 %v2891, 17
      %v2907 = vpop.permute.xlu0 %2906
      %2908 = vrot.lane.b32.xlu0 %v2892, 17
      %v2909 = vpop.permute.xlu0 %2908
      %2910 = vrot.lane.b32.xlu0 %v2893, 17
      %v2911 = vpop.permute.xlu0 %2910
      %v2912 = vsel %vm1281, %v2901, %v2903
      %v2913 = vsel %vm1281, %v2903, %v2905
      %v2914 = vsel %vm1281, %v2907, %v2909
      %v2915 = vsel %vm1281, %v2909, %v2911
      %v2920 = vsel %vm1087, %v2912, 0.0
      %v2921 = vsel %vm1088, %v2913, 0.0
      %v2922 = vsel %vm1087, %v2914, 0.0
      %v2923 = vsel %vm1088, %v2915, 0.0
      %v2924 = vpack.c.bf16 %v2922, %v2920
      %v2925 = vpack.c.bf16 %v2923, %v2921
      %v2926 = vpack.c.bf16 %v2891, %v2888
      %v2927 = vpack.c.bf16 %v2892, %v2889
      %v2928 = vpack.c.bf16 %v2893, %v2890
      %2929 = vrot.lane.b32.xlu0 %v2888, 15
      %v2930 = vpop.permute.xlu0 %2929
      %2931 = vrot.lane.b32.xlu0 %v2889, 15
      %v2932 = vpop.permute.xlu0 %2931
      %2933 = vrot.lane.b32.xlu0 %v2890, 15
      %v2934 = vpop.permute.xlu0 %2933
      %2935 = vrot.lane.b32.xlu0 %v2891, 15
      %v2936 = vpop.permute.xlu0 %2935
      %2937 = vrot.lane.b32.xlu0 %v2892, 15
      %v2938 = vpop.permute.xlu0 %2937
      %2939 = vrot.lane.b32.xlu0 %v2893, 15
      %v2940 = vpop.permute.xlu0 %2939
      %v2941 = vsel %vm1294, %v2930, %v2932
      %v2942 = vsel %vm1294, %v2932, %v2934
      %v2943 = vsel %vm1294, %v2936, %v2938
      %v2944 = vsel %vm1294, %v2938, %v2940
      %v2949 = vsel %vm1110, %v2941, 0.0
      %v2950 = vsel %vm1111, %v2942, 0.0
      %v2951 = vsel %vm1110, %v2943, 0.0
      %v2952 = vsel %vm1111, %v2944, 0.0
      %v2953 = vpack.c.bf16 %v2951, %v2949
      %v2954 = vpack.c.bf16 %v2952, %v2950
      %2955 = vrot.lane.b32.xlu0 %v2888, 1
      %v2956 = vpop.permute.xlu0 %2955
      %2957 = vrot.lane.b32.xlu0 %v2889, 1
      %v2958 = vpop.permute.xlu0 %2957
      %2959 = vrot.lane.b32.xlu0 %v2890, 1
      %v2960 = vpop.permute.xlu0 %2959
      %2961 = vrot.lane.b32.xlu0 %v2891, 1
      %v2962 = vpop.permute.xlu0 %2961
      %2963 = vrot.lane.b32.xlu0 %v2892, 1
      %v2964 = vpop.permute.xlu0 %2963
      %2965 = vrot.lane.b32.xlu0 %v2893, 1
      %v2966 = vpop.permute.xlu0 %2965
      %v2967 = vsel %vm1359, %v2956, %v2958
      %v2968 = vsel %vm1359, %v2958, %v2960
      %v2969 = vsel %vm1359, %v2962, %v2964
      %v2970 = vsel %vm1359, %v2964, %v2966
      %v2975 = vsel %vm1087, %v2967, 0.0
      %v2976 = vsel %vm1088, %v2968, 0.0
      %v2977 = vsel %vm1087, %v2969, 0.0
      %v2978 = vsel %vm1088, %v2970, 0.0
      %v2979 = vpack.c.bf16 %v2977, %v2975
      %v2980 = vpack.c.bf16 %v2978, %v2976
      %v2981 = vld [vmem:[#allocation2 + $0x18] sm:$0xff]
      %v2982 = vld [vmem:[#allocation2 + $0x38] sm:$0xff]
      %2985 = vrot.lane.b32.xlu0 %v2889, 127
      %v2986 = vpop.permute.xlu0 %2985
      %2987 = vrot.lane.b32.xlu0 %v2890, 127
      %v2988 = vpop.permute.xlu0 %2987
      %2989 = vrot.lane.b32.xlu0 %v2981, 127
      %v2990 = vpop.permute.xlu0 %2989
      %2991 = vrot.lane.b32.xlu0 %v2892, 127
      %v2992 = vpop.permute.xlu0 %2991
      %2993 = vrot.lane.b32.xlu0 %v2893, 127
      %v2994 = vpop.permute.xlu0 %2993
      %2995 = vrot.lane.b32.xlu0 %v2982, 127
      %v2996 = vpop.permute.xlu0 %2995
      %v2997 = vsel %vm1374, %v2986, %v2988
      %v2998 = vsel %vm1374, %v2988, %v2990
      %v2999 = vsel %vm1374, %v2992, %v2994
      %v3000 = vsel %vm1374, %v2994, %v2996
      %v3005 = vsel %vm1110, %v2997, 0.0
      %v3006 = vsel %vm1111, %v2998, 0.0
      %v3007 = vsel %vm1110, %v2999, 0.0
      %v3008 = vsel %vm1111, %v3000, 0.0
      %v3009 = vpack.c.bf16 %v3007, %v3005
      %v3010 = vpack.c.bf16 %v3008, %v3006
      %3011 = vrot.lane.b32.xlu0 %v2889, 113
      %v3012 = vpop.permute.xlu0 %3011
      %3013 = vrot.lane.b32.xlu0 %v2890, 113
      %v3014 = vpop.permute.xlu0 %3013
      %3015 = vrot.lane.b32.xlu0 %v2981, 113
      %v3016 = vpop.permute.xlu0 %3015
      %3017 = vrot.lane.b32.xlu0 %v2892, 113
      %v3018 = vpop.permute.xlu0 %3017
      %3019 = vrot.lane.b32.xlu0 %v2893, 113
      %v3020 = vpop.permute.xlu0 %3019
      %3021 = vrot.lane.b32.xlu0 %v2982, 113
      %v3022 = vpop.permute.xlu0 %3021
      %v3023 = vsel %vm1439, %v3012, %v3014
      %v3024 = vsel %vm1439, %v3014, %v3016
      %v3025 = vsel %vm1439, %v3018, %v3020
      %v3026 = vsel %vm1439, %v3020, %v3022
      %v3031 = vsel %vm1087, %v3023, 0.0
      %v3032 = vsel %vm1088, %v3024, 0.0
      %v3033 = vsel %vm1087, %v3025, 0.0
      %v3034 = vsel %vm1088, %v3026, 0.0
      %v3035 = vpack.c.bf16 %v3033, %v3031
      %v3036 = vpack.c.bf16 %v3034, %v3032
      %v3037 = vpack.c.bf16 %v2982, %v2981
      %3038 = vrot.lane.b32.xlu0 %v2889, 111
      %v3039 = vpop.permute.xlu0 %3038
      %3040 = vrot.lane.b32.xlu0 %v2890, 111
      %v3041 = vpop.permute.xlu0 %3040
      %3042 = vrot.lane.b32.xlu0 %v2981, 111
      %v3043 = vpop.permute.xlu0 %3042
      %3044 = vrot.lane.b32.xlu0 %v2892, 111
      %v3045 = vpop.permute.xlu0 %3044
      %3046 = vrot.lane.b32.xlu0 %v2893, 111
      %v3047 = vpop.permute.xlu0 %3046
      %3048 = vrot.lane.b32.xlu0 %v2982, 111
      %v3049 = vpop.permute.xlu0 %3048
      %v3050 = vsel %vm1452, %v3039, %v3041
      %v3051 = vsel %vm1452, %v3041, %v3043
      %v3052 = vsel %vm1452, %v3045, %v3047
      %v3053 = vsel %vm1452, %v3047, %v3049
      %v3058 = vsel %vm1110, %v3050, 0.0
      %v3059 = vsel %vm1111, %v3051, 0.0
      %v3060 = vsel %vm1110, %v3052, 0.0
      %v3061 = vsel %vm1111, %v3053, 0.0
      %v3062 = vpack.c.bf16 %v3060, %v3058
      %v3063 = vpack.c.bf16 %v3061, %v3059
      %3067 = vrot.lane.b32.xlu0 %v2926, 16
      %v3068 = vpop.permute.xlu0 %3067
      %3069 = vrot.lane.b32.xlu0 %v2927, 16
      %v3070 = vpop.permute.xlu0 %3069
      %3071 = vrot.lane.b32.xlu0 %v2928, 16
      %v3072 = vpop.permute.xlu0 %3071
      %v3073 = vsel %vm2227, %v3068, %v3070
      %v3074 = vsel %vm2227, %v3070, %v3072
      %3078 = vrot.lane.b32.xlu0 %v2927, 112
      %v3079 = vpop.permute.xlu0 %3078
      %3080 = vrot.lane.b32.xlu0 %v2928, 112
      %v3081 = vpop.permute.xlu0 %3080
      %3082 = vrot.lane.b32.xlu0 %v3037, 112
      %v3083 = vpop.permute.xlu0 %3082
      %v3084 = vsel %vm2246, %v3079, %v3081
      %v3085 = vsel %vm2246, %v3081, %v3083
      %v3088 = vld [vmem:[%s19] sm:$0xf]
      %v3089 = vld [vmem:[%s21] sm:$0xf]
      %3091 = vset.pattern.permute.xlu0 0
      %3092 = vperm.xlu0 %3091, %v3089
      %v3093 = vpop.permute.xlu0 %3092
      %v3097 = vunpack.c.l.s4 1983009808
      %v3098 = vunpack.c.0.s8 %v3097
      %v3099 = vlaneseq
      %v3100 = vshrl.u32 %v3099, 7
      %v3101 = vsub.s32 %v3098, %v3100
      %v3102 = vrot.slane %v3088, %v3101
      %v3103 = vcombine.high %v3102, %v3102
      %v3106 = vsel %vm1785, %v3103, 0
      %3108 = vmatprep.subr.bf16.mxu0 %v2925
      %3109 = vmatpush1.bf16.msra.mxu0 %v2924
      %3110 = vmatprep.subr.bf16.mxu0 %v3074
      %3111 = vmatpush1.bf16.msra.mxu0 %v3073
      %3112 = vmatprep.subr.bf16.mxu0 %v2954
      %3113 = vmatpush1.bf16.msra.mxu0 %v2953
      %3114 = vmatprep.subr.bf16.mxu0 %v2980
      %3115 = vmatpush1.bf16.msra.mxu0 %v2979
      %3116 = vmatprep.subr.bf16.mxu0 %v2928
      %3117 = vmatpush1.bf16.msra.mxu0 %v2927
      %3118 = vmatprep.subr.bf16.mxu0 %v3010
      %3119 = vmatpush1.bf16.msra.mxu0 %v3009
      %3120 = vmatprep.subr.bf16.mxu0 %v3036
      %3121 = vmatpush1.bf16.msra.mxu0 %v3035
      %3122 = vmatprep.subr.bf16.mxu0 %v3085
      %3123 = vmatpush1.bf16.msra.mxu0 %v3084
      %3124 = vmatprep.subr.bf16.mxu0 %v3063
      %3125 = vmatpush1.bf16.msra.mxu0 %v3062
      %3126 = vmatprep.subr.bf16.mxu0 0
      %3127 = vmatpush1.bf16.msra.mxu0 0
      %3128 = vmatprep.subr.bf16.mxu0 0
      %3129 = vmatpush1.bf16.msra.mxu0 0
      %3130 = vmatprep.subr.bf16.mxu0 0
      %3131 = vmatpush1.bf16.msra.mxu0 0
      %3132 = vmatprep.subr.bf16.mxu0 0
      %3133 = vmatpush1.bf16.msra.mxu0 0
      %3134 = vmatprep.subr.bf16.mxu0 0
      %3135 = vmatpush1.bf16.msra.mxu0 0
      %3136 = vmatprep.subr.bf16.mxu0 0
      %3137 = vmatpush1.bf16.msra.mxu0 0
      %3138 = vmatprep.subr.bf16.mxu0 0
      %3139 = vmatpush1.bf16.msra.mxu0 0
      %3140 = vmatprep.mubr.bf16.mxu0 %v3106
      %3141 = vmatmul.mubr.bf16.gmra.mrb[0].mxu0 %v3102
      %v3142 = vpop.f32.mrb[0].mxu0
      %v3143 = vadd.f32 %v3093, %v3142
      %v3144 = vpop.f32.mrb[0].mxu0
      %v3145 = vadd.f32 %v3093, %v3144
      %v3146 = vpop.f32.mrb[0].mxu0
      %v3147 = vpop.f32.mrb[0].mxu0
      %3148 = vdwg.mxu0
      %v3149 = vmax.f32 %v3143, 0.0
      %v3150 = vmax.f32 %v3145, 0.0
      %3151 = vst [vmem:[#allocation2 + $0x48] sm:$0xf] %v3149
      %3152 = vst [vmem:[#allocation2 + $0x50] sm:$0xf] %v3150
      %v3153 = vld [vmem:[#allocation2 + $0x8] sm:$0xff]
      %v3154 = vld [vmem:[#allocation2 + $0x10] sm:$0xff]
      %v3155 = vld [vmem:[#allocation2 + $0x28] sm:$0xff]
      %v3156 = vld [vmem:[#allocation2 + $0x30] sm:$0xff]
      %v3157 = vld [vmem:[#allocation2 + $0x48] sm:$0xf]
      %v3158 = vld [vmem:[#allocation2 + $0x50] sm:$0xf]
      %v3159 = vld [vmem:[%s23] sm:$0xf]
      %v3160 = vpack.c.bf16 %v3155, %v3153
      %v3161 = vpack.c.bf16 %v3156, %v3154
      %v3162 = vpack.c.bf16 %v3157, %v3157
      %v3163 = vpack.c.bf16 %v3158, %v3158
      %v3164 = vld [vmem:[%s25] sm:$0xff]
      %3166 = vset.pattern.permute.xlu0 0
      %3167 = vperm.xlu0 %3166, %v3164
      %v3168 = vpop.permute.xlu0 %3167
      %vm3170 = vcmask 162816
      %v3172 = vsel %vm3170, %v3159, 0
      %v3175 = vsel %vm1756, %v3162, 0
      %v3178 = vsel %vm1756, %v3163, 0
      %3180 = vmatprep.subr.bf16.mxu0 %v3161
      %3181 = vmatpush1.bf16.msra.mxu0 %v3160
      %3182 = vmatprep.subr.bf16.mxu0 %v3178
      %3183 = vmatpush1.bf16.msra.mxu0 %v3175
      %3184 = vmatprep.subr.bf16.mxu0 0
      %3185 = vmatpush1.bf16.msra.mxu0 0
      %3186 = vmatprep.subr.bf16.mxu0 0
      %3187 = vmatpush1.bf16.msra.mxu0 0
      %3188 = vmatprep.subr.bf16.mxu0 0
      %3189 = vmatpush1.bf16.msra.mxu0 0
      %3190 = vmatprep.subr.bf16.mxu0 0
      %3191 = vmatpush1.bf16.msra.mxu0 0
      %3192 = vmatprep.subr.bf16.mxu0 0
      %3193 = vmatpush1.bf16.msra.mxu0 0
      %3194 = vmatprep.subr.bf16.mxu0 0
      %3195 = vmatpush1.bf16.msra.mxu0 0
      %3196 = vmatprep.subr.bf16.mxu0 0
      %3197 = vmatpush1.bf16.msra.mxu0 0
      %3198 = vmatprep.subr.bf16.mxu0 0
      %3199 = vmatpush1.bf16.msra.mxu0 0
      %3200 = vmatprep.subr.bf16.mxu0 0
      %3201 = vmatpush1.bf16.msra.mxu0 0
      %3202 = vmatprep.subr.bf16.mxu0 0
      %3203 = vmatpush1.bf16.msra.mxu0 0
      %3204 = vmatprep.subr.bf16.mxu0 0
      %3205 = vmatpush1.bf16.msra.mxu0 0
      %3206 = vmatprep.subr.bf16.mxu0 0
      %3207 = vmatpush1.bf16.msra.mxu0 0
      %3208 = vmatprep.subr.bf16.mxu0 0
      %3209 = vmatpush1.bf16.msra.mxu0 0
      %3210 = vmatprep.subr.bf16.mxu0 0
      %3211 = vmatpush1.bf16.msra.mxu0 0
      %3212 = vmatprep.mubr.bf16.mxu0 0
      %3213 = vmatmul.mubr.bf16.gmra.mrb[0].mxu0 %v3172
      %v3214 = vpop.f32.mrb[0].mxu0
      %v3215 = vadd.f32 %v3168, %v3214
      %v3216 = vpop.f32.mrb[0].mxu0
      %v3217 = vadd.f32 %v3168, %v3216
      %v3218 = vpop.f32.mrb[0].mxu0
      %v3219 = vpop.f32.mrb[0].mxu0
      %3220 = vdwg.mxu0
      %v3221 = vadd.f32 %v2333, %v3215
      %v3222 = vadd.f32 %v2335, %v3217
      %v3223 = vld [vmem:[%s57] sm:$0xf]
      %v3224 = vpack.c.bf16 %v3221, %v3221
      %v3225 = vpack.c.bf16 %v3222, %v3222
      %3226 = vst [vmem:[#allocation2 + $0x8] sm:$0xff] %v3221
      %3227 = vst [vmem:[#allocation2 + $0x10] sm:$0xff] %v3222
      %v3228 = vld [vmem:[#allocation2] sm:$0xff]
      %v3229 = vld [vmem:[#allocation2 + $0x8] sm:$0xff]
      %v3230 = vld [vmem:[#allocation2 + $0x10] sm:$0xff]
      %3234 = vrot.lane.b32.xlu0 %v3228, 17
      %v3235 = vpop.permute.xlu0 %3234
      %3236 = vrot.lane.b32.xlu0 %v3229, 17
      %v3237 = vpop.permute.xlu0 %3236
      %3238 = vrot.lane.b32.xlu0 %v3230, 17
      %v3239 = vpop.permute.xlu0 %3238
      %v3240 = vsel %vm1281, %v3235, %v3237
      %v3241 = vsel %vm1281, %v3237, %v3239
      %v3244 = vsel %vm1087, %v3240, 0.0
      %v3245 = vsel %vm1088, %v3241, 0.0
      %v3246 = vpack.c.bf16 %v3244, %v3244
      %v3247 = vpack.c.bf16 %v3245, %v3245
      %v3248 = vpack.c.bf16 %v3228, %v3228
      %v3249 = vpack.c.bf16 %v3229, %v3229
      %v3250 = vpack.c.bf16 %v3230, %v3230
      %3251 = vrot.lane.b32.xlu0 %v3228, 15
      %v3252 = vpop.permute.xlu0 %3251
      %3253 = vrot.lane.b32.xlu0 %v3229, 15
      %v3254 = vpop.permute.xlu0 %3253
      %3255 = vrot.lane.b32.xlu0 %v3230, 15
      %v3256 = vpop.permute.xlu0 %3255
      %v3257 = vsel %vm1294, %v3252, %v3254
      %v3258 = vsel %vm1294, %v3254, %v3256
      %v3261 = vsel %vm1110, %v3257, 0.0
      %v3262 = vsel %vm1111, %v3258, 0.0
      %v3263 = vpack.c.bf16 %v3261, %v3261
      %v3264 = vpack.c.bf16 %v3262, %v3262
      %3265 = vrot.lane.b32.xlu0 %v3228, 1
      %v3266 = vpop.permute.xlu0 %3265
      %3267 = vrot.lane.b32.xlu0 %v3229, 1
      %v3268 = vpop.permute.xlu0 %3267
      %3269 = vrot.lane.b32.xlu0 %v3230, 1
      %v3270 = vpop.permute.xlu0 %3269
      %v3271 = vsel %vm1359, %v3266, %v3268
      %v3272 = vsel %vm1359, %v3268, %v3270
      %v3275 = vsel %vm1087, %v3271, 0.0
      %v3276 = vsel %vm1088, %v3272, 0.0
      %v3277 = vpack.c.bf16 %v3275, %v3275
      %v3278 = vpack.c.bf16 %v3276, %v3276
      %v3279 = vld [vmem:[#allocation2 + $0x18] sm:$0xff]
      %3281 = vrot.lane.b32.xlu0 %v3229, 127
      %v3282 = vpop.permute.xlu0 %3281
      %3283 = vrot.lane.b32.xlu0 %v3230, 127
      %v3284 = vpop.permute.xlu0 %3283
      %3285 = vrot.lane.b32.xlu0 %v3279, 127
      %v3286 = vpop.permute.xlu0 %3285
      %v3287 = vsel %vm1374, %v3282, %v3284
      %v3288 = vsel %vm1374, %v3284, %v3286
      %v3291 = vsel %vm1110, %v3287, 0.0
      %v3292 = vsel %vm1111, %v3288, 0.0
      %v3293 = vpack.c.bf16 %v3291, %v3291
      %v3294 = vpack.c.bf16 %v3292, %v3292
      %3295 = vrot.lane.b32.xlu0 %v3229, 113
      %v3296 = vpop.permute.xlu0 %3295
      %3297 = vrot.lane.b32.xlu0 %v3230, 113
      %v3298 = vpop.permute.xlu0 %3297
      %3299 = vrot.lane.b32.xlu0 %v3279, 113
      %v3300 = vpop.permute.xlu0 %3299
      %v3301 = vsel %vm1439, %v3296, %v3298
      %v3302 = vsel %vm1439, %v3298, %v3300
      %v3305 = vsel %vm1087, %v3301, 0.0
      %v3306 = vsel %vm1088, %v3302, 0.0
      %v3307 = vpack.c.bf16 %v3305, %v3305
      %v3308 = vpack.c.bf16 %v3306, %v3306
      %v3309 = vpack.c.bf16 %v3279, %v3279
      %3310 = vrot.lane.b32.xlu0 %v3229, 111
      %v3311 = vpop.permute.xlu0 %3310
      %3312 = vrot.lane.b32.xlu0 %v3230, 111
      %v3313 = vpop.permute.xlu0 %3312
      %3314 = vrot.lane.b32.xlu0 %v3279, 111
      %v3315 = vpop.permute.xlu0 %3314
      %v3316 = vsel %vm1452, %v3311, %v3313
      %v3317 = vsel %vm1452, %v3313, %v3315
      %v3320 = vsel %vm1110, %v3316, 0.0
      %v3321 = vsel %vm1111, %v3317, 0.0
      %v3322 = vpack.c.bf16 %v3320, %v3320
      %v3323 = vpack.c.bf16 %v3321, %v3321
      %v3327 = vrot.slane %v3248, 4
      %v3328 = vrot.slane %v3249, 4
      %v3329 = vrot.slane %v3250, 4
      %3330 = vrot.lane.b32.xlu0 %v3327, 16
      %v3331 = vpop.permute.xlu0 %3330
      %3332 = vrot.lane.b32.xlu0 %v3328, 16
      %v3333 = vpop.permute.xlu0 %3332
      %3334 = vrot.lane.b32.xlu0 %v3329, 16
      %v3335 = vpop.permute.xlu0 %3334
      %v3336 = vsel %vm2227, %v3331, %v3333
      %v3337 = vsel %vm2227, %v3333, %v3335
      %v3340 = vrot.slane %v3277, 4
      %v3341 = vrot.slane %v3278, 4
      %v3344 = vrot.slane %v3293, 4
      %v3345 = vrot.slane %v3294, 4
      %v3347 = vrot.slane %v3309, 4
      %3348 = vrot.lane.b32.xlu0 %v3328, 112
      %v3349 = vpop.permute.xlu0 %3348
      %3350 = vrot.lane.b32.xlu0 %v3329, 112
      %v3351 = vpop.permute.xlu0 %3350
      %3352 = vrot.lane.b32.xlu0 %v3347, 112
      %v3353 = vpop.permute.xlu0 %3352
      %v3354 = vsel %vm2246, %v3349, %v3351
      %v3355 = vsel %vm2246, %v3351, %v3353
      %v3358 = vsel %vm1750, %v3246, %v3336
      %v3362 = vsel %vm1750, %v3247, %v3337
      %v3366 = vsel %vm1750, %v3263, %v3340
      %v3370 = vsel %vm1750, %v3264, %v3341
      %v3374 = vsel %vm1750, %v3249, %v3344
      %v3378 = vsel %vm1750, %v3250, %v3345
      %v3382 = vsel %vm1750, %v3307, %v3354
      %v3386 = vsel %vm1750, %v3308, %v3355
      %v3388 = vld [vmem:[%s27] sm:$0xf]
      %v3389 = vld [vmem:[%s29] sm:$0xff]
      %3391 = vset.pattern.permute.xlu0 0
      %3392 = vperm.xlu0 %3391, %v3389
      %v3393 = vpop.permute.xlu0 %3392
      %v3396 = vsel %vm2288, %v3388, 0
      %v3399 = vsel %vm1750, %v3322, 0
      %v3402 = vsel %vm1750, %v3323, 0
      %3404 = vmatprep.subr.bf16.mxu0 %v3362
      %3405 = vmatpush1.bf16.msra.mxu0 %v3358
      %3406 = vmatprep.subr.bf16.mxu0 %v3370
      %3407 = vmatpush1.bf16.msra.mxu0 %v3366
      %3408 = vmatprep.subr.bf16.mxu0 %v3378
      %3409 = vmatpush1.bf16.msra.mxu0 %v3374
      %3410 = vmatprep.subr.bf16.mxu0 %v3386
      %3411 = vmatpush1.bf16.msra.mxu0 %v3382
      %3412 = vmatprep.subr.bf16.mxu0 %v3402
      %3413 = vmatpush1.bf16.msra.mxu0 %v3399
      %3414 = vmatprep.subr.bf16.mxu0 0
      %3415 = vmatpush1.bf16.msra.mxu0 0
      %3416 = vmatprep.subr.bf16.mxu0 0
      %3417 = vmatpush1.bf16.msra.mxu0 0
      %3418 = vmatprep.subr.bf16.mxu0 0
      %3419 = vmatpush1.bf16.msra.mxu0 0
      %3420 = vmatprep.subr.bf16.mxu0 0
      %3421 = vmatpush1.bf16.msra.mxu0 0
      %3422 = vmatprep.subr.bf16.mxu0 0
      %3423 = vmatpush1.bf16.msra.mxu0 0
      %3424 = vmatprep.subr.bf16.mxu0 0
      %3425 = vmatpush1.bf16.msra.mxu0 0
      %3426 = vmatprep.subr.bf16.mxu0 0
      %3427 = vmatpush1.bf16.msra.mxu0 0
      %3428 = vmatprep.subr.bf16.mxu0 0
      %3429 = vmatpush1.bf16.msra.mxu0 0
      %3430 = vmatprep.subr.bf16.mxu0 0
      %3431 = vmatpush1.bf16.msra.mxu0 0
      %3432 = vmatprep.subr.bf16.mxu0 0
      %3433 = vmatpush1.bf16.msra.mxu0 0
      %3434 = vmatprep.subr.bf16.mxu0 0
      %3435 = vmatpush1.bf16.msra.mxu0 0
      %3436 = vmatprep.mubr.bf16.mxu0 0
      %3437 = vmatmul.mubr.bf16.gmra.mrb[0].mxu0 %v3396
      %v3438 = vpop.f32.mrb[0].mxu0
      %v3439 = vadd.f32 %v3393, %v3438
      %v3440 = vpop.f32.mrb[0].mxu0
      %v3441 = vadd.f32 %v3393, %v3440
      %v3442 = vpop.f32.mrb[0].mxu0
      %v3443 = vpop.f32.mrb[0].mxu0
      %3444 = vdwg.mxu0
      %v3445 = vmax.f32 %v3439, 0.0
      %v3446 = vmax.f32 %v3441, 0.0
      %3447 = vst [vmem:[#allocation2 + $0x8] sm:$0xff] %v3445
      %3448 = vst [vmem:[#allocation2 + $0x10] sm:$0xff] %v3446
      %v3449 = vld [vmem:[#allocation2] sm:$0xff]
      %v3450 = vld [vmem:[#allocation2 + $0x8] sm:$0xff]
      %v3451 = vld [vmem:[#allocation2 + $0x10] sm:$0xff]
      %3455 = vrot.lane.b32.xlu0 %v3449, 17
      %v3456 = vpop.permute.xlu0 %3455
      %3457 = vrot.lane.b32.xlu0 %v3450, 17
      %v3458 = vpop.permute.xlu0 %3457
      %3459 = vrot.lane.b32.xlu0 %v3451, 17
      %v3460 = vpop.permute.xlu0 %3459
      %v3461 = vsel %vm1281, %v3456, %v3458
      %v3462 = vsel %vm1281, %v3458, %v3460
      %v3465 = vsel %vm1087, %v3461, 0.0
      %v3466 = vsel %vm1088, %v3462, 0.0
      %v3467 = vpack.c.bf16 %v3465, %v3465
      %v3468 = vpack.c.bf16 %v3466, %v3466
      %v3469 = vpack.c.bf16 %v3449, %v3449
      %v3470 = vpack.c.bf16 %v3450, %v3450
      %v3471 = vpack.c.bf16 %v3451, %v3451
      %3472 = vrot.lane.b32.xlu0 %v3449, 15
      %v3473 = vpop.permute.xlu0 %3472
      %3474 = vrot.lane.b32.xlu0 %v3450, 15
      %v3475 = vpop.permute.xlu0 %3474
      %3476 = vrot.lane.b32.xlu0 %v3451, 15
      %v3477 = vpop.permute.xlu0 %3476
      %v3478 = vsel %vm1294, %v3473, %v3475
      %v3479 = vsel %vm1294, %v3475, %v3477
      %v3482 = vsel %vm1110, %v3478, 0.0
      %v3483 = vsel %vm1111, %v3479, 0.0
      %v3484 = vpack.c.bf16 %v3482, %v3482
      %v3485 = vpack.c.bf16 %v3483, %v3483
      %3486 = vrot.lane.b32.xlu0 %v3449, 1
      %v3487 = vpop.permute.xlu0 %3486
      %3488 = vrot.lane.b32.xlu0 %v3450, 1
      %v3489 = vpop.permute.xlu0 %3488
      %3490 = vrot.lane.b32.xlu0 %v3451, 1
      %v3491 = vpop.permute.xlu0 %3490
      %v3492 = vsel %vm1359, %v3487, %v3489
      %v3493 = vsel %vm1359, %v3489, %v3491
      %v3496 = vsel %vm1087, %v3492, 0.0
      %v3497 = vsel %vm1088, %v3493, 0.0
      %v3498 = vpack.c.bf16 %v3496, %v3496
      %v3499 = vpack.c.bf16 %v3497, %v3497
      %v3500 = vld [vmem:[#allocation2 + $0x18] sm:$0xff]
      %3502 = vrot.lane.b32.xlu0 %v3450, 127
      %v3503 = vpop.permute.xlu0 %3502
      %3504 = vrot.lane.b32.xlu0 %v3451, 127
      %v3505 = vpop.permute.xlu0 %3504
      %3506 = vrot.lane.b32.xlu0 %v3500, 127
      %v3507 = vpop.permute.xlu0 %3506
      %v3508 = vsel %vm1374, %v3503, %v3505
      %v3509 = vsel %vm1374, %v3505, %v3507
      %v3512 = vsel %vm1110, %v3508, 0.0
      %v3513 = vsel %vm1111, %v3509, 0.0
      %v3514 = vpack.c.bf16 %v3512, %v3512
      %v3515 = vpack.c.bf16 %v3513, %v3513
      %3516 = vrot.lane.b32.xlu0 %v3450, 113
      %v3517 = vpop.permute.xlu0 %3516
      %3518 = vrot.lane.b32.xlu0 %v3451, 113
      %v3519 = vpop.permute.xlu0 %3518
      %3520 = vrot.lane.b32.xlu0 %v3500, 113
      %v3521 = vpop.permute.xlu0 %3520
      %v3522 = vsel %vm1439, %v3517, %v3519
      %v3523 = vsel %vm1439, %v3519, %v3521
      %v3526 = vsel %vm1087, %v3522, 0.0
      %v3527 = vsel %vm1088, %v3523, 0.0
      %v3528 = vpack.c.bf16 %v3526, %v3526
      %v3529 = vpack.c.bf16 %v3527, %v3527
      %v3530 = vpack.c.bf16 %v3500, %v3500
      %3531 = vrot.lane.b32.xlu0 %v3450, 111
      %v3532 = vpop.permute.xlu0 %3531
      %3533 = vrot.lane.b32.xlu0 %v3451, 111
      %v3534 = vpop.permute.xlu0 %3533
      %3535 = vrot.lane.b32.xlu0 %v3500, 111
      %v3536 = vpop.permute.xlu0 %3535
      %v3537 = vsel %vm1452, %v3532, %v3534
      %v3538 = vsel %vm1452, %v3534, %v3536
      %v3541 = vsel %vm1110, %v3537, 0.0
      %v3542 = vsel %vm1111, %v3538, 0.0
      %v3543 = vpack.c.bf16 %v3541, %v3541
      %v3544 = vpack.c.bf16 %v3542, %v3542
      %v3548 = vrot.slane %v3469, 4
      %v3549 = vrot.slane %v3470, 4
      %v3550 = vrot.slane %v3471, 4
      %3551 = vrot.lane.b32.xlu0 %v3548, 16
      %v3552 = vpop.permute.xlu0 %3551
      %3553 = vrot.lane.b32.xlu0 %v3549, 16
      %v3554 = vpop.permute.xlu0 %3553
      %3555 = vrot.lane.b32.xlu0 %v3550, 16
      %v3556 = vpop.permute.xlu0 %3555
      %v3557 = vsel %vm2227, %v3552, %v3554
      %v3558 = vsel %vm2227, %v3554, %v3556
      %v3561 = vrot.slane %v3498, 4
      %v3562 = vrot.slane %v3499, 4
      %v3565 = vrot.slane %v3514, 4
      %v3566 = vrot.slane %v3515, 4
      %v3568 = vrot.slane %v3530, 4
      %3569 = vrot.lane.b32.xlu0 %v3549, 112
      %v3570 = vpop.permute.xlu0 %3569
      %3571 = vrot.lane.b32.xlu0 %v3550, 112
      %v3572 = vpop.permute.xlu0 %3571
      %3573 = vrot.lane.b32.xlu0 %v3568, 112
      %v3574 = vpop.permute.xlu0 %3573
      %v3575 = vsel %vm2246, %v3570, %v3572
      %v3576 = vsel %vm2246, %v3572, %v3574
      %v3579 = vsel %vm1750, %v3467, %v3557
      %v3583 = vsel %vm1750, %v3468, %v3558
      %v3587 = vsel %vm1750, %v3484, %v3561
      %v3591 = vsel %vm1750, %v3485, %v3562
      %v3595 = vsel %vm1750, %v3470, %v3565
      %v3599 = vsel %vm1750, %v3471, %v3566
      %v3603 = vsel %vm1750, %v3528, %v3575
      %v3607 = vsel %vm1750, %v3529, %v3576
      %v3609 = vld [vmem:[%s31] sm:$0xf]
      %v3610 = vld [vmem:[%s33] sm:$0xff]
      %3612 = vset.pattern.permute.xlu0 0
      %3613 = vperm.xlu0 %3612, %v3610
      %v3614 = vpop.permute.xlu0 %3613
      %v3617 = vsel %vm2288, %v3609, 0
      %v3620 = vsel %vm1750, %v3543, 0
      %v3623 = vsel %vm1750, %v3544, 0
      %3625 = vmatprep.subr.bf16.mxu0 %v3583
      %3626 = vmatpush1.bf16.msra.mxu0 %v3579
      %3627 = vmatprep.subr.bf16.mxu0 %v3591
      %3628 = vmatpush1.bf16.msra.mxu0 %v3587
      %3629 = vmatprep.subr.bf16.mxu0 %v3599
      %3630 = vmatpush1.bf16.msra.mxu0 %v3595
      %3631 = vmatprep.subr.bf16.mxu0 %v3607
      %3632 = vmatpush1.bf16.msra.mxu0 %v3603
      %3633 = vmatprep.subr.bf16.mxu0 %v3623
      %3634 = vmatpush1.bf16.msra.mxu0 %v3620
      %3635 = vmatprep.subr.bf16.mxu0 0
      %3636 = vmatpush1.bf16.msra.mxu0 0
      %3637 = vmatprep.subr.bf16.mxu0 0
      %3638 = vmatpush1.bf16.msra.mxu0 0
      %3639 = vmatprep.subr.bf16.mxu0 0
      %3640 = vmatpush1.bf16.msra.mxu0 0
      %3641 = vmatprep.subr.bf16.mxu0 0
      %3642 = vmatpush1.bf16.msra.mxu0 0
      %3643 = vmatprep.subr.bf16.mxu0 0
      %3644 = vmatpush1.bf16.msra.mxu0 0
      %3645 = vmatprep.subr.bf16.mxu0 0
      %3646 = vmatpush1.bf16.msra.mxu0 0
      %3647 = vmatprep.subr.bf16.mxu0 0
      %3648 = vmatpush1.bf16.msra.mxu0 0
      %3649 = vmatprep.subr.bf16.mxu0 0
      %3650 = vmatpush1.bf16.msra.mxu0 0
      %3651 = vmatprep.subr.bf16.mxu0 0
      %3652 = vmatpush1.bf16.msra.mxu0 0
      %3653 = vmatprep.subr.bf16.mxu0 0
      %3654 = vmatpush1.bf16.msra.mxu0 0
      %3655 = vmatprep.subr.bf16.mxu0 0
      %3656 = vmatpush1.bf16.msra.mxu0 0
      %3657 = vmatprep.mubr.bf16.mxu0 0
      %3658 = vmatmul.mubr.bf16.gmra.mrb[0].mxu0 %v3617
      %v3659 = vpop.f32.mrb[0].mxu0
      %v3660 = vadd.f32 %v3614, %v3659
      %v3661 = vpop.f32.mrb[0].mxu0
      %v3662 = vadd.f32 %v3614, %v3661
      %v3663 = vpop.f32.mrb[0].mxu0
      %v3664 = vpop.f32.mrb[0].mxu0
      %3665 = vdwg.mxu0
      %v3666 = vadd.f32 %v3660, %v3662
      %3667 = vadd.xlane.f32.xlu0 %v3666
      %v3668 = vpop.xlane.xlu0 %3667
      %v3669 = vrcp.pop 256.0
      %v3670 = vmul.f32 %v3668, %v3669
      %v3671 = vld [vmem:[%s35] sm:$0xff]
      %v3672 = vmul.f32 %v3671, %v3670
      %v3673 = vsel %vm1346, %v3672, 0.0
      %v3674 = vrot.slane %v3673, 4
      %v3675 = vadd.f32 %v3673, %v3674
      %v3676 = vrot.slane %v3675, 2
      %v3677 = vadd.f32 %v3675, %v3676
      %v3678 = vrot.slane %v3677, 1
      %v3679 = vadd.f32 %v3677, %v3678
      %v3680 = vld [vmem:[%s37] sm:$0x1]
      %v3681 = vadd.f32 %v3679, %v3680
      %v3682 = vmax.f32 %v3681, 0.0
      %v3683 = vld [vmem:[%s39] sm:$0xff]
      %v3684 = vlaneseq
      %v3685 = vshrl.u32 %v3684, 7
      %v3686 = vsub.s32 0, %v3685
      %v3687 = vrot.slane %v3682, %v3686
      %v3688 = vmul.f32 %v3683, %v3687
      %v3689 = vsel %vm1346, %v3688, 0.0
      %3690 = vadd.xlane.f32.xlu0 %v3689
      %v3691 = vpop.xlane.xlu0 %3690
      %v3692 = vld [vmem:[%s41] sm:$0xff]
      %v3693 = vadd.f32 %v3691, %v3692
      %v3694 = vxor.u32 %v3693, 2147483648
      %v3695 = vmul.f32 %v3694, 1.442695
      %v3696 = vpow.pop %v3695
      %v3697 = vadd.f32 %v3696, 1.0
      %v3698 = vrcp.pop %v3697
      %v3699 = vmul.f32 1.0, %v3698
      %3701 = vset.pattern.permute.xlu0 0
      %3702 = vperm.xlu0 %3701, %v3699
      %v3703 = vpop.permute.xlu0 %3702
      %v3705 = vmul.f32 %v3660, %v3703
      %v3706 = vmul.f32 %v3662, %v3703
      %v3707 = vld [vmem:[%s43] sm:$0xf]
      %v3708 = vld [vmem:[%s43 + $0x4] sm:$0xf]
      %v3709 = vpack.c.bf16 %v3660, %v3660
      %v3710 = vpack.c.bf16 %v3662, %v3662
      %v3711 = vld [vmem:[%s45] sm:$0xff]
      %v3712 = vld [vmem:[%s45 + $0x8] sm:$0xff]
      %3714 = vset.pattern.permute.xlu0 0
      %3715 = vperm.xlu0 %3714, %v3711
      %v3716 = vpop.permute.xlu0 %3715
      %3719 = vset.pattern.permute.xlu0 0
      %3720 = vperm.xlu0 %3719, %v3712
      %v3721 = vpop.permute.xlu0 %3720
      %v3725 = vunpack.c.l.b16 %v3707
      %v3726 = vunpack.c.l.b16 %v3708
      %v3727 = vpack.c.b16 %v3726, %v3725
      %vm3728 = vcmask 64512
      %v3730 = vsel %vm3728, %v3727, 0
      %v3733 = vsel %vm1750, %v3709, 0
      %v3736 = vsel %vm1750, %v3710, 0
      %3738 = vmatprep.subr.bf16.mxu0 %v3736
      %3739 = vmatpush1.bf16.msra.mxu0 %v3733
      %3740 = vmatprep.subr.bf16.mxu0 0
      %3741 = vmatpush1.bf16.msra.mxu0 0
      %3742 = vmatprep.subr.bf16.mxu0 0
      %3743 = vmatpush1.bf16.msra.mxu0 0
      %3744 = vmatprep.subr.bf16.mxu0 0
      %3745 = vmatpush1.bf16.msra.mxu0 0
      %3746 = vmatprep.subr.bf16.mxu0 0
      %3747 = vmatpush1.bf16.msra.mxu0 0
      %3748 = vmatprep.subr.bf16.mxu0 0
      %3749 = vmatpush1.bf16.msra.mxu0 0
      %3750 = vmatprep.subr.bf16.mxu0 0
      %3751 = vmatpush1.bf16.msra.mxu0 0
      %3752 = vmatprep.subr.bf16.mxu0 0
      %3753 = vmatpush1.bf16.msra.mxu0 0
      %3754 = vmatprep.subr.bf16.mxu0 0
      %3755 = vmatpush1.bf16.msra.mxu0 0
      %3756 = vmatprep.subr.bf16.mxu0 0
      %3757 = vmatpush1.bf16.msra.mxu0 0
      %3758 = vmatprep.subr.bf16.mxu0 0
      %3759 = vmatpush1.bf16.msra.mxu0 0
      %3760 = vmatprep.subr.bf16.mxu0 0
      %3761 = vmatpush1.bf16.msra.mxu0 0
      %3762 = vmatprep.subr.bf16.mxu0 0
      %3763 = vmatpush1.bf16.msra.mxu0 0
      %3764 = vmatprep.subr.bf16.mxu0 0
      %3765 = vmatpush1.bf16.msra.mxu0 0
      %3766 = vmatprep.subr.bf16.mxu0 0
      %3767 = vmatpush1.bf16.msra.mxu0 0
      %3768 = vmatprep.subr.bf16.mxu0 0
      %3769 = vmatpush1.bf16.msra.mxu0 0
      %3770 = vmatprep.mubr.bf16.mxu0 0
      %3771 = vmatmul.mubr.bf16.gmra.mrb[0].mxu0 %v3730
      %v3772 = vpop.f32.mrb[0].mxu0
      %v3773 = vadd.f32 %v3716, %v3772
      %v3774 = vpop.f32.mrb[0].mxu0
      %v3775 = vadd.f32 %v3716, %v3774
      %v3776 = vpop.f32.mrb[0].mxu0
      %v3777 = vadd.f32 %v3721, %v3776
      %v3778 = vpop.f32.mrb[0].mxu0
      %v3779 = vadd.f32 %v3721, %v3778
      %3780 = vdwg.mxu0
      %v3781 = vmax.f32 %v3773, 0.0
      %v3782 = vmax.f32 %v3775, 0.0
      %v3783 = vmax.f32 %v3777, 0.0
      %v3784 = vmax.f32 %v3779, 0.0
      %v3785 = vld [vmem:[%s47] sm:$0xf]
      %v3786 = vpack.c.bf16 %v3783, %v3781
      %v3787 = vpack.c.bf16 %v3784, %v3782
      %v3788 = vld [vmem:[%s49] sm:$0xff]
      %3790 = vset.pattern.permute.xlu0 0
      %3791 = vperm.xlu0 %3790, %v3788
      %v3792 = vpop.permute.xlu0 %3791
      %v3795 = vsel %vm1785, %v3785, 0
      %3797 = vmatprep.subr.bf16.mxu0 %v3787
      %3798 = vmatpush1.bf16.msra.mxu0 %v3786
      %3799 = vmatprep.subr.bf16.mxu0 0
      %3800 = vmatpush1.bf16.msra.mxu0 0
      %3801 = vmatprep.subr.bf16.mxu0 0
      %3802 = vmatpush1.bf16.msra.mxu0 0
      %3803 = vmatprep.subr.bf16.mxu0 0
      %3804 = vmatpush1.bf16.msra.mxu0 0
      %3805 = vmatprep.subr.bf16.mxu0 0
      %3806 = vmatpush1.bf16.msra.mxu0 0
      %3807 = vmatprep.subr.bf16.mxu0 0
      %3808 = vmatpush1.bf16.msra.mxu0 0
      %3809 = vmatprep.subr.bf16.mxu0 0
      %3810 = vmatpush1.bf16.msra.mxu0 0
      %3811 = vmatprep.subr.bf16.mxu0 0
      %3812 = vmatpush1.bf16.msra.mxu0 0
      %3813 = vmatprep.subr.bf16.mxu0 0
      %3814 = vmatpush1.bf16.msra.mxu0 0
      %3815 = vmatprep.subr.bf16.mxu0 0
      %3816 = vmatpush1.bf16.msra.mxu0 0
      %3817 = vmatprep.subr.bf16.mxu0 0
      %3818 = vmatpush1.bf16.msra.mxu0 0
      %3819 = vmatprep.subr.bf16.mxu0 0
      %3820 = vmatpush1.bf16.msra.mxu0 0
      %3821 = vmatprep.subr.bf16.mxu0 0
      %3822 = vmatpush1.bf16.msra.mxu0 0
      %3823 = vmatprep.subr.bf16.mxu0 0
      %3824 = vmatpush1.bf16.msra.mxu0 0
      %3825 = vmatprep.subr.bf16.mxu0 0
      %3826 = vmatpush1.bf16.msra.mxu0 0
      %3827 = vmatprep.subr.bf16.mxu0 0
      %3828 = vmatpush1.bf16.msra.mxu0 0
      %3829 = vmatprep.mubr.bf16.mxu0 0
      %3830 = vmatmul.mubr.bf16.gmra.mrb[0].mxu0 %v3795
      %v3831 = vpop.f32.mrb[0].mxu0
      %v3832 = vadd.f32 %v3792, %v3831
      %v3833 = vpop.f32.mrb[0].mxu0
      %v3834 = vadd.f32 %v3792, %v3833
      %v3835 = vpop.f32.mrb[0].mxu0
      %v3836 = vpop.f32.mrb[0].mxu0
      %3837 = vdwg.mxu0
      %v3838 = vxor.u32 %v3832, 2147483648
      %v3839 = vxor.u32 %v3834, 2147483648
      %v3840 = vmul.f32 %v3838, 1.442695
      %v3841 = vpow.pop %v3840
      %v3842 = vmul.f32 %v3839, 1.442695
      %v3843 = vpow.pop %v3842
      %v3844 = vadd.f32 %v3841, 1.0
      %v3845 = vadd.f32 %v3843, 1.0
      %v3846 = vrcp.pop %v3844
      %v3847 = vmul.f32 1.0, %v3846
      %v3848 = vrcp.pop %v3845
      %v3849 = vmul.f32 1.0, %v3848
      %v3850 = vld [vmem:[%s51] sm:$0xf]
      %v3851 = vmul.f32 %v3660, %v3705
      %v3852 = vmul.f32 %v3662, %v3706
      %v3853 = vpack.c.bf16 %v3851, %v3851
      %v3854 = vpack.c.bf16 %v3852, %v3852
      %v3855 = vld [vmem:[%s53] sm:$0xf]
      %v3856 = vmul.f32 %v3660, %v3847
      %v3857 = vmul.f32 %v3662, %v3849
      %v3858 = vpack.c.bf16 %v3856, %v3856
      %v3859 = vpack.c.bf16 %v3857, %v3857
      %v3861 = vsel %vm3728, %v3855, 0
      %v3864 = vsel %vm1750, %v3858, 0
      %v3867 = vsel %vm1750, %v3859, 0
      %3869 = vmatprep.subr.bf16.mxu0 %v3867
      %3870 = vmatpush1.bf16.msra.mxu0 %v3864
      %3871 = vmatprep.subr.bf16.mxu0 0
      %3872 = vmatpush1.bf16.msra.mxu0 0
      %3873 = vmatprep.subr.bf16.mxu0 0
      %3874 = vmatpush1.bf16.msra.mxu0 0
      %3875 = vmatprep.subr.bf16.mxu0 0
      %3876 = vmatpush1.bf16.msra.mxu0 0
      %3877 = vmatprep.subr.bf16.mxu0 0
      %3878 = vmatpush1.bf16.msra.mxu0 0
      %3879 = vmatprep.subr.bf16.mxu0 0
      %3880 = vmatpush1.bf16.msra.mxu0 0
      %3881 = vmatprep.subr.bf16.mxu0 0
      %3882 = vmatpush1.bf16.msra.mxu0 0
      %3883 = vmatprep.subr.bf16.mxu0 0
      %3884 = vmatpush1.bf16.msra.mxu0 0
      %3885 = vmatprep.subr.bf16.mxu0 0
      %3886 = vmatpush1.bf16.msra.mxu0 0
      %3887 = vmatprep.subr.bf16.mxu0 0
      %3888 = vmatpush1.bf16.msra.mxu0 0
      %3889 = vmatprep.subr.bf16.mxu0 0
      %3890 = vmatpush1.bf16.msra.mxu0 0
      %3891 = vmatprep.subr.bf16.mxu0 0
      %3892 = vmatpush1.bf16.msra.mxu0 0
      %3893 = vmatprep.subr.bf16.mxu0 0
      %3894 = vmatpush1.bf16.msra.mxu0 0
      %3895 = vmatprep.subr.bf16.mxu0 0
      %3896 = vmatpush1.bf16.msra.mxu0 0
      %3897 = vmatprep.subr.bf16.mxu0 0
      %3898 = vmatpush1.bf16.msra.mxu0 0
      %3899 = vmatprep.subr.bf16.mxu0 0
      %3900 = vmatpush1.bf16.msra.mxu0 0
      %3901 = vmatprep.mubr.bf16.mxu0 0
      %3902 = vmatmul.mubr.bf16.gmra.mrb[0].mxu0 %v3861
      %v3903 = vpop.f32.mrb[0].mxu0
      %v3904 = vadd.f32 0.0, %v3903
      %v3905 = vpop.f32.mrb[0].mxu0
      %v3906 = vadd.f32 0.0, %v3905
      %v3907 = vpop.f32.mrb[0].mxu0
      %v3908 = vpop.f32.mrb[0].mxu0
      %3909 = vdwg.mxu0
      %v3911 = vsel %vm3728, %v3850, 0
      %v3914 = vsel %vm1750, %v3853, 0
      %v3917 = vsel %vm1750, %v3854, 0
      %3919 = vmatprep.subr.bf16.mxu0 %v3917
      %3920 = vmatpush1.bf16.msra.mxu0 %v3914
      %3921 = vmatprep.subr.bf16.mxu0 0
      %3922 = vmatpush1.bf16.msra.mxu0 0
      %3923 = vmatprep.subr.bf16.mxu0 0
      %3924 = vmatpush1.bf16.msra.mxu0 0
      %3925 = vmatprep.subr.bf16.mxu0 0
      %3926 = vmatpush1.bf16.msra.mxu0 0
      %3927 = vmatprep.subr.bf16.mxu0 0
      %3928 = vmatpush1.bf16.msra.mxu0 0
      %3929 = vmatprep.subr.bf16.mxu0 0
      %3930 = vmatpush1.bf16.msra.mxu0 0
      %3931 = vmatprep.subr.bf16.mxu0 0
      %3932 = vmatpush1.bf16.msra.mxu0 0
      %3933 = vmatprep.subr.bf16.mxu0 0
      %3934 = vmatpush1.bf16.msra.mxu0 0
      %3935 = vmatprep.subr.bf16.mxu0 0
      %3936 = vmatpush1.bf16.msra.mxu0 0
      %3937 = vmatprep.subr.bf16.mxu0 0
      %3938 = vmatpush1.bf16.msra.mxu0 0
      %3939 = vmatprep.subr.bf16.mxu0 0
      %3940 = vmatpush1.bf16.msra.mxu0 0
      %3941 = vmatprep.subr.bf16.mxu0 0
      %3942 = vmatpush1.bf16.msra.mxu0 0
      %3943 = vmatprep.subr.bf16.mxu0 0
      %3944 = vmatpush1.bf16.msra.mxu0 0
      %3945 = vmatprep.subr.bf16.mxu0 0
      %3946 = vmatpush1.bf16.msra.mxu0 0
      %3947 = vmatprep.subr.bf16.mxu0 0
      %3948 = vmatpush1.bf16.msra.mxu0 0
      %3949 = vmatprep.subr.bf16.mxu0 0
      %3950 = vmatpush1.bf16.msra.mxu0 0
      %3951 = vmatprep.mubr.bf16.mxu0 0
      %3952 = vmatmul.mubr.bf16.gmra.mrb[0].mxu0 %v3911
      %v3953 = vpop.f32.mrb[0].mxu0
      %v3954 = vadd.f32 %v3904, %v3953
      %v3955 = vpop.f32.mrb[0].mxu0
      %v3956 = vadd.f32 %v3906, %v3955
      %v3957 = vpop.f32.mrb[0].mxu0
      %v3958 = vpop.f32.mrb[0].mxu0
      %3959 = vdwg.mxu0
      %v3960 = vld [vmem:[%s55] sm:$0xff]
      %3962 = vset.pattern.permute.xlu0 0
      %3963 = vperm.xlu0 %3962, %v3960
      %v3964 = vpop.permute.xlu0 %3963
      %v3966 = vadd.f32 %v3954, %v3964
      %v3967 = vadd.f32 %v3956, %v3964
      %v3968 = vadd.f32 %v3221, %v3966
      %v3969 = vadd.f32 %v3222, %v3967
      %v3970 = vld [vmem:[%s57] sm:$0xf]
      %v3971 = vpack.c.bf16 %v3968, %v3968
      %v3972 = vpack.c.bf16 %v3969, %v3969
      %v3974 = vunpack.c.l.b16 %v3970
      %v3975 = vpack.c.b16 %v3974, %v3974
      %3976 = vrot.lane.b32.xlu0 %v3975, 120
      %v3977 = vpop.permute.xlu0 %3976
      %v3979 = vsel %vm3728, %v3977, 0
      %v3982 = vsel %vm1750, %v3971, 0
      %v3985 = vsel %vm1750, %v3972, 0
      %3987 = vmatprep.subr.bf16.mxu0 %v3985
      %3988 = vmatpush1.bf16.msra.mxu0 %v3982
      %3989 = vmatprep.subr.bf16.mxu0 0
      %3990 = vmatpush1.bf16.msra.mxu0 0
      %3991 = vmatprep.subr.bf16.mxu0 0
      %3992 = vmatpush1.bf16.msra.mxu0 0
      %3993 = vmatprep.subr.bf16.mxu0 0
      %3994 = vmatpush1.bf16.msra.mxu0 0
      %3995 = vmatprep.subr.bf16.mxu0 0
      %3996 = vmatpush1.bf16.msra.mxu0 0
      %3997 = vmatprep.subr.bf16.mxu0 0
      %3998 = vmatpush1.bf16.msra.mxu0 0
      %3999 = vmatprep.subr.bf16.mxu0 0
      %4000 = vmatpush1.bf16.msra.mxu0 0
      %4001 = vmatprep.subr.bf16.mxu0 0
      %4002 = vmatpush1.bf16.msra.mxu0 0
      %4003 = vmatprep.subr.bf16.mxu0 0
      %4004 = vmatpush1.bf16.msra.mxu0 0
      %4005 = vmatprep.subr.bf16.mxu0 0
      %4006 = vmatpush1.bf16.msra.mxu0 0
      %4007 = vmatprep.subr.bf16.mxu0 0
      %4008 = vmatpush1.bf16.msra.mxu0 0
      %4009 = vmatprep.subr.bf16.mxu0 0
      %4010 = vmatpush1.bf16.msra.mxu0 0
      %4011 = vmatprep.subr.bf16.mxu0 0
      %4012 = vmatpush1.bf16.msra.mxu0 0
      %4013 = vmatprep.subr.bf16.mxu0 0
      %4014 = vmatpush1.bf16.msra.mxu0 0
      %4015 = vmatprep.subr.bf16.mxu0 0
      %4016 = vmatpush1.bf16.msra.mxu0 0
      %4017 = vmatprep.subr.bf16.mxu0 0
      %4018 = vmatpush1.bf16.msra.mxu0 0
      %4019 = vmatprep.mubr.bf16.mxu0 0
      %4020 = vmatmul.mubr.bf16.gmra.mrb[0].mxu0 %v3979
      %v4021 = vpop.f32.mrb[0].mxu0
      %v4022 = vadd.f32 0.0, %v4021
      %v4023 = vpop.f32.mrb[0].mxu0
      %v4024 = vadd.f32 0.0, %v4023
      %v4025 = vpop.f32.mrb[0].mxu0
      %v4026 = vpop.f32.mrb[0].mxu0
      %4027 = vdwg.mxu0
      %v4029 = vsel %vm3728, %v3223, 0
      %v4032 = vsel %vm1750, %v3224, 0
      %v4035 = vsel %vm1750, %v3225, 0
      %4037 = vmatprep.subr.bf16.mxu0 %v4035
      %4038 = vmatpush1.bf16.msra.mxu0 %v4032
      %4039 = vmatprep.subr.bf16.mxu0 0
      %4040 = vmatpush1.bf16.msra.mxu0 0
      %4041 = vmatprep.subr.bf16.mxu0 0
      %4042 = vmatpush1.bf16.msra.mxu0 0
      %4043 = vmatprep.subr.bf16.mxu0 0
      %4044 = vmatpush1.bf16.msra.mxu0 0
      %4045 = vmatprep.subr.bf16.mxu0 0
      %4046 = vmatpush1.bf16.msra.mxu0 0
      %4047 = vmatprep.subr.bf16.mxu0 0
      %4048 = vmatpush1.bf16.msra.mxu0 0
      %4049 = vmatprep.subr.bf16.mxu0 0
      %4050 = vmatpush1.bf16.msra.mxu0 0
      %4051 = vmatprep.subr.bf16.mxu0 0
      %4052 = vmatpush1.bf16.msra.mxu0 0
      %4053 = vmatprep.subr.bf16.mxu0 0
      %4054 = vmatpush1.bf16.msra.mxu0 0
      %4055 = vmatprep.subr.bf16.mxu0 0
      %4056 = vmatpush1.bf16.msra.mxu0 0
      %4057 = vmatprep.subr.bf16.mxu0 0
      %4058 = vmatpush1.bf16.msra.mxu0 0
      %4059 = vmatprep.subr.bf16.mxu0 0
      %4060 = vmatpush1.bf16.msra.mxu0 0
      %4061 = vmatprep.subr.bf16.mxu0 0
      %4062 = vmatpush1.bf16.msra.mxu0 0
      %4063 = vmatprep.subr.bf16.mxu0 0
      %4064 = vmatpush1.bf16.msra.mxu0 0
      %4065 = vmatprep.subr.bf16.mxu0 0
      %4066 = vmatpush1.bf16.msra.mxu0 0
      %4067 = vmatprep.subr.bf16.mxu0 0
      %4068 = vmatpush1.bf16.msra.mxu0 0
      %4069 = vmatprep.mubr.bf16.mxu0 0
      %4070 = vmatmul.mubr.bf16.gmra.mrb[0].mxu0 %v4029
      %v4071 = vpop.f32.mrb[0].mxu0
      %v4072 = vadd.f32 %v4022, %v4071
      %v4073 = vpop.f32.mrb[0].mxu0
      %v4074 = vadd.f32 %v4024, %v4073
      %v4075 = vpop.f32.mrb[0].mxu0
      %v4076 = vpop.f32.mrb[0].mxu0
      %4077 = vdwg.mxu0
      %v4078 = vld [vmem:[%s59] sm:$0xff]
      %4080 = vset.pattern.permute.xlu0 0
      %4081 = vperm.xlu0 %4080, %v4078
      %v4082 = vpop.permute.xlu0 %4081
      %v4084 = vadd.f32 %v4072, %v4082
      %v4085 = vadd.f32 %v4074, %v4082
      %4086 = vst [vmem:[#allocation2 + $0x8] sm:$0xff] %v4084
      %4087 = vst [vmem:[#allocation2 + $0x10] sm:$0xff] %v4085
      %v4088 = vld [vmem:[#allocation2] sm:$0xff]
      %v4089 = vld [vmem:[#allocation2 + $0x8] sm:$0xff]
      %v4090 = vld [vmem:[#allocation2 + $0x10] sm:$0xff]
      %4094 = vrot.lane.b32.xlu0 %v4088, 17
      %v4095 = vpop.permute.xlu0 %4094
      %4096 = vrot.lane.b32.xlu0 %v4089, 17
      %v4097 = vpop.permute.xlu0 %4096
      %4098 = vrot.lane.b32.xlu0 %v4090, 17
      %v4099 = vpop.permute.xlu0 %4098
      %v4100 = vsel %vm1281, %v4095, %v4097
      %v4101 = vsel %vm1281, %v4097, %v4099
      %v4104 = vsel %vm1087, %v4100, 0.0
      %v4105 = vsel %vm1088, %v4101, 0.0
      %v4106 = vpack.c.bf16 %v4104, %v4104
      %v4107 = vpack.c.bf16 %v4105, %v4105
      %v4108 = vpack.c.bf16 %v4088, %v4088
      %v4109 = vpack.c.bf16 %v4089, %v4089
      %v4110 = vpack.c.bf16 %v4090, %v4090
      %4111 = vrot.lane.b32.xlu0 %v4088, 15
      %v4112 = vpop.permute.xlu0 %4111
      %4113 = vrot.lane.b32.xlu0 %v4089, 15
      %v4114 = vpop.permute.xlu0 %4113
      %4115 = vrot.lane.b32.xlu0 %v4090, 15
      %v4116 = vpop.permute.xlu0 %4115
      %v4117 = vsel %vm1294, %v4112, %v4114
      %v4118 = vsel %vm1294, %v4114, %v4116
      %v4121 = vsel %vm1110, %v4117, 0.0
      %v4122 = vsel %vm1111, %v4118, 0.0
      %v4123 = vpack.c.bf16 %v4121, %v4121
      %v4124 = vpack.c.bf16 %v4122, %v4122
      %4125 = vrot.lane.b32.xlu0 %v4088, 1
      %v4126 = vpop.permute.xlu0 %4125
      %4127 = vrot.lane.b32.xlu0 %v4089, 1
      %v4128 = vpop.permute.xlu0 %4127
      %4129 = vrot.lane.b32.xlu0 %v4090, 1
      %v4130 = vpop.permute.xlu0 %4129
      %v4131 = vsel %vm1359, %v4126, %v4128
      %v4132 = vsel %vm1359, %v4128, %v4130
      %v4135 = vsel %vm1087, %v4131, 0.0
      %v4136 = vsel %vm1088, %v4132, 0.0
      %v4137 = vpack.c.bf16 %v4135, %v4135
      %v4138 = vpack.c.bf16 %v4136, %v4136
      %v4139 = vld [vmem:[#allocation2 + $0x18] sm:$0xff]
      %4141 = vrot.lane.b32.xlu0 %v4089, 127
      %v4142 = vpop.permute.xlu0 %4141
      %4143 = vrot.lane.b32.xlu0 %v4090, 127
      %v4144 = vpop.permute.xlu0 %4143
      %4145 = vrot.lane.b32.xlu0 %v4139, 127
      %v4146 = vpop.permute.xlu0 %4145
      %v4147 = vsel %vm1374, %v4142, %v4144
      %v4148 = vsel %vm1374, %v4144, %v4146
      %v4151 = vsel %vm1110, %v4147, 0.0
      %v4152 = vsel %vm1111, %v4148, 0.0
      %v4153 = vpack.c.bf16 %v4151, %v4151
      %v4154 = vpack.c.bf16 %v4152, %v4152
      %4155 = vrot.lane.b32.xlu0 %v4089, 113
      %v4156 = vpop.permute.xlu0 %4155
      %4157 = vrot.lane.b32.xlu0 %v4090, 113
      %v4158 = vpop.permute.xlu0 %4157
      %4159 = vrot.lane.b32.xlu0 %v4139, 113
      %v4160 = vpop.permute.xlu0 %4159
      %v4161 = vsel %vm1439, %v4156, %v4158
      %v4162 = vsel %vm1439, %v4158, %v4160
      %v4165 = vsel %vm1087, %v4161, 0.0
      %v4166 = vsel %vm1088, %v4162, 0.0
      %v4167 = vpack.c.bf16 %v4165, %v4165
      %v4168 = vpack.c.bf16 %v4166, %v4166
      %v4169 = vpack.c.bf16 %v4139, %v4139
      %4170 = vrot.lane.b32.xlu0 %v4089, 111
      %v4171 = vpop.permute.xlu0 %4170
      %4172 = vrot.lane.b32.xlu0 %v4090, 111
      %v4173 = vpop.permute.xlu0 %4172
      %4174 = vrot.lane.b32.xlu0 %v4139, 111
      %v4175 = vpop.permute.xlu0 %4174
      %v4176 = vsel %vm1452, %v4171, %v4173
      %v4177 = vsel %vm1452, %v4173, %v4175
      %v4180 = vsel %vm1110, %v4176, 0.0
      %v4181 = vsel %vm1111, %v4177, 0.0
      %v4182 = vpack.c.bf16 %v4180, %v4180
      %v4183 = vpack.c.bf16 %v4181, %v4181
      %v4187 = vrot.slane %v4108, 4
      %v4188 = vrot.slane %v4109, 4
      %v4189 = vrot.slane %v4110, 4
      %4190 = vrot.lane.b32.xlu0 %v4187, 16
      %v4191 = vpop.permute.xlu0 %4190
      %4192 = vrot.lane.b32.xlu0 %v4188, 16
      %v4193 = vpop.permute.xlu0 %4192
      %4194 = vrot.lane.b32.xlu0 %v4189, 16
      %v4195 = vpop.permute.xlu0 %4194
      %v4196 = vsel %vm2227, %v4191, %v4193
      %v4197 = vsel %vm2227, %v4193, %v4195
      %v4200 = vrot.slane %v4137, 4
      %v4201 = vrot.slane %v4138, 4
      %v4204 = vrot.slane %v4153, 4
      %v4205 = vrot.slane %v4154, 4
      %v4207 = vrot.slane %v4169, 4
      %4208 = vrot.lane.b32.xlu0 %v4188, 112
      %v4209 = vpop.permute.xlu0 %4208
      %4210 = vrot.lane.b32.xlu0 %v4189, 112
      %v4211 = vpop.permute.xlu0 %4210
      %4212 = vrot.lane.b32.xlu0 %v4207, 112
      %v4213 = vpop.permute.xlu0 %4212
      %v4214 = vsel %vm2246, %v4209, %v4211
      %v4215 = vsel %vm2246, %v4211, %v4213
      %v4218 = vsel %vm1750, %v4106, %v4196
      %v4222 = vsel %vm1750, %v4107, %v4197
      %v4226 = vsel %vm1750, %v4123, %v4200
      %v4230 = vsel %vm1750, %v4124, %v4201
      %v4234 = vsel %vm1750, %v4109, %v4204
      %v4238 = vsel %vm1750, %v4110, %v4205
      %v4242 = vsel %vm1750, %v4167, %v4214
      %v4246 = vsel %vm1750, %v4168, %v4215
      %v4248 = vld [vmem:[%s61] sm:$0xf]
      %v4249 = vld [vmem:[%s63] sm:$0xff]
      %4251 = vset.pattern.permute.xlu0 0
      %4252 = vperm.xlu0 %4251, %v4249
      %v4253 = vpop.permute.xlu0 %4252
      %v4256 = vsel %vm2288, %v4248, 0
      %v4259 = vsel %vm1750, %v4182, 0
      %v4262 = vsel %vm1750, %v4183, 0
      %4264 = vmatprep.subr.bf16.mxu0 %v4222
      %4265 = vmatpush1.bf16.msra.mxu0 %v4218
      %4266 = vmatprep.subr.bf16.mxu0 %v4230
      %4267 = vmatpush1.bf16.msra.mxu0 %v4226
      %4268 = vmatprep.subr.bf16.mxu0 %v4238
      %4269 = vmatpush1.bf16.msra.mxu0 %v4234
      %4270 = vmatprep.subr.bf16.mxu0 %v4246
      %4271 = vmatpush1.bf16.msra.mxu0 %v4242
      %4272 = vmatprep.subr.bf16.mxu0 %v4262
      %4273 = vmatpush1.bf16.msra.mxu0 %v4259
      %4274 = vmatprep.subr.bf16.mxu0 0
      %4275 = vmatpush1.bf16.msra.mxu0 0
      %4276 = vmatprep.subr.bf16.mxu0 0
      %4277 = vmatpush1.bf16.msra.mxu0 0
      %4278 = vmatprep.subr.bf16.mxu0 0
      %4279 = vmatpush1.bf16.msra.mxu0 0
      %4280 = vmatprep.subr.bf16.mxu0 0
      %4281 = vmatpush1.bf16.msra.mxu0 0
      %4282 = vmatprep.subr.bf16.mxu0 0
      %4283 = vmatpush1.bf16.msra.mxu0 0
      %4284 = vmatprep.subr.bf16.mxu0 0
      %4285 = vmatpush1.bf16.msra.mxu0 0
      %4286 = vmatprep.subr.bf16.mxu0 0
      %4287 = vmatpush1.bf16.msra.mxu0 0
      %4288 = vmatprep.subr.bf16.mxu0 0
      %4289 = vmatpush1.bf16.msra.mxu0 0
      %4290 = vmatprep.subr.bf16.mxu0 0
      %4291 = vmatpush1.bf16.msra.mxu0 0
      %4292 = vmatprep.subr.bf16.mxu0 0
      %4293 = vmatpush1.bf16.msra.mxu0 0
      %4294 = vmatprep.subr.bf16.mxu0 0
      %4295 = vmatpush1.bf16.msra.mxu0 0
      %4296 = vmatprep.mubr.bf16.mxu0 0
      %4297 = vmatmul.mubr.bf16.gmra.mrb[0].mxu0 %v4256
      %v4298 = vpop.f32.mrb[0].mxu0
      %v4299 = vadd.f32 %v4253, %v4298
      %v4300 = vpop.f32.mrb[0].mxu0
      %v4301 = vadd.f32 %v4253, %v4300
      %v4302 = vpop.f32.mrb[0].mxu0
      %v4303 = vpop.f32.mrb[0].mxu0
      %4304 = vdwg.mxu0
      %v4305 = vadd.f32 %v4299, %v2111
      %v4306 = vadd.f32 %v4301, %v2113
      %4307 = vst [vmem:[%s986] sm:$0xff] %v4305
      %4308 = vst [vmem:[%s986 + $0x8] sm:$0xff] %v4306
      %p4309 = scmp.lt.s32.totalorder %s76, 1
      %s4310 = scalar_select %p4309, %s76, 1
      %s4311 = smul.addr %s4310, 2
      %s4312 = smul.addr %s4311, 8
      %s4313 = scalar_lea.vmem %s65, %s4312
      // Predicated region
      $region149: #{rdn_forward_pallas.1} parent=147 // pred_check
        %p4314 = pneg %p771
      $region150: #{rdn_forward_pallas.1} parent=147 // pred_check_branch
        %4316 = sbr.rel (%p4314) target = $region152
      $region151: #{rdn_forward_pallas.1} parent=147 // pred_region
        _
      $region152: #{rdn_forward_pallas.1} parent=147 // pred_fallthru
        _
    $region148: #{rdn_forward_pallas.1} parent=5 // pred_fallthru
      _
    %p4317 = scmp.le.s32.totalorder 2, %s71
    // Predicated region
    $region153: #{rdn_forward_pallas.1} parent=5 // pred_check
      %p4318 = pneg %p4317
    $region154: #{rdn_forward_pallas.1} parent=5 // pred_check_branch
      %4320 = sbr.rel (%p4318) target = $region156
    $region155: #{rdn_forward_pallas.1} parent=5 // pred_region
      %s4321 = ssub.s32 %s71, 2
      // Predicated region
      $region157: #{rdn_forward_pallas.1} parent=155 // pred_check
        %p4322 = pneg %p777
      $region158: #{rdn_forward_pallas.1} parent=155 // pred_check_branch
        %4324 = sbr.rel (%p4322) target = $region160
      $region159: #{rdn_forward_pallas.1} parent=155 // pred_region
        %p4325 = scmp.lt.s32.totalorder %s77, 1
        %s4326 = scalar_select %p4325, %s77, 1
        %s4327 = smul.addr %s4326, 2
        %s4328 = smul.addr %s4327, 8
        %s4329 = scalar_lea.vmem %s65, %s4328
      $region160: #{rdn_forward_pallas.1} parent=155 // pred_fallthru
        _
    $region156: #{rdn_forward_pallas.1} parent=5 // pred_fallthru
      _
  $region6: #{rdn_forward_pallas.1} parent=0 // loop_footer
    %s75 = sadd.s32 1, %s71
  $region7: #{rdn_forward_pallas.1} parent=0 // loop_footer_branch
    %70 = sbr.rel target = $region3
  $region8: #{rdn_forward_pallas.1} parent=0 // loop_exit
    _

</llo_original>
